<compile_context>
chip_gen: v7x
topology: tpu7x:2x2x1
jax: 0.10.0
libtpu: 0.0.40
codegen_flags: <defaults>
</compile_context>

<pallas_src>
import jax
import jax.numpy as jnp
from jax import lax
from jax.experimental import pallas as pl
from jax.experimental.pallas import tpu as pltpu


# ----------------------------------------------------------------------------
# Architecture constants implied by the PyTorch module
# (fc1 = Linear(16*5*5, 120) forces a 32x32 spatial input).
# ----------------------------------------------------------------------------
_IN_HW = 32                                                   # input H = W
_KS = 5                                                       # conv kernel
_C1_LEN = _IN_HW * _IN_HW - ((_KS - 1) * _IN_HW + (_KS - 1))  # 892 conv1 span
_P1_LEN = _C1_LEN - (_IN_HW + 1)                              # 859 pool1 span
# conv2 runs directly on the width-32 flattened pooled map: taps are strided
# by 2 in x and 2*32 in the flat index, valid outputs land on the same grid.
_C2_LEN = _P1_LEN - 2 * ((_KS - 1) * _IN_HW + (_KS - 1))      # 595 conv2 span
_P2_LEN = _C2_LEN - (2 * _IN_HW + 2)                          # 529 pool2 span
_P2_HW = 5                                                    # pooled2 H = W
_C1_OUT, _C2_OUT = 6, 16


# ----------------------------------------------------------------------------
# Fused kernel: one grid step = one image, everything stays in VMEM.
#
# Layout: activations are (channels, flat_spatial) with the flattened spatial
# axis on lanes.  A conv tap (i, j) is a static lane-shifted slice; lanes whose
# x-coordinate would wrap hold garbage but are never read by valid output
# positions and never selected by the final 0/1 gather matmul.
# ----------------------------------------------------------------------------
def _lenet_fused_kernel(x_ref, w1_ref, b1_ref, w2_ref, b2_ref, s2_ref,
                        fc1w_ref, fc1b_ref, fc2w_ref, fc2b_ref, fc3w_ref,
                        fc3b_ref, out_ref):
    x = x_ref[0]                                        # (Cin, 32*32)

    # ---- conv1: in-kernel im2col (25 static lane-shifted slices) + 1 matmul
    taps1 = [x[:, i * _IN_HW + j: i * _IN_HW + j + _C1_LEN]
             for i in range(_KS) for j in range(_KS)]
    p1 = jnp.concatenate(taps1, axis=0)                 # (25*Cin, 892)
    y1 = jnp.dot(w1_ref[...], p1, preferred_element_type=jnp.float32)
    y1 = jnp.maximum(y1 + b1_ref[...], 0.0)             # (6, 892)

    # ---- pool1: 2x2 max via lane shifts, kept on the width-32 flattened grid
    #      (valid pooled value for (Y,X) sits at flat index 64*Y + 2*X).
    m1 = jnp.maximum(
        jnp.maximum(y1[:, 0:_P1_LEN], y1[:, 1:1 + _P1_LEN]),
        jnp.maximum(y1[:, _IN_HW:_IN_HW + _P1_LEN],
                    y1[:, _IN_HW + 1:_IN_HW + 1 + _P1_LEN]))      # (6, 859)

    # ---- conv2: strided im2col directly on m1 (tap (i,j) -> offset 64*i+2*j)
    taps2 = [m1[:, 2 * (i * _IN_HW + j): 2 * (i * _IN_HW + j) + _C2_LEN]
             for i in range(_KS) for j in range(_KS)]
    p2 = jnp.concatenate(taps2, axis=0)                 # (25*6, 595)
    y2 = jnp.dot(w2_ref[...], p2, preferred_element_type=jnp.float32)
    y2 = jnp.maximum(y2 + b2_ref[...], 0.0)             # (16, 595)
    # valid conv2 output (yo,xo) lives at flat index 64*yo + 2*xo

    # ---- pool2: 2x2 max via lane shifts 0 / 2 / 64 / 66; valid pooled2 value
    #      for (Y2,X2) sits at flat index 128*Y2 + 4*X2.
    m2 = jnp.maximum(
        jnp.maximum(y2[:, 0:_P2_LEN], y2[:, 2:2 + _P2_LEN]),
        jnp.maximum(y2[:, 2 * _IN_HW:2 * _IN_HW + _P2_LEN],
                    y2[:, 2 * _IN_HW + 2:2 * _IN_HW + 2 + _P2_LEN]))  # (16,529)

    # ---- regather the 25 valid pooled positions per channel (0/1 MXU gather)
    g2 = jnp.dot(m2, s2_ref[...], preferred_element_type=jnp.float32)  # (16,25)

    # ---- fc1: contract over (channel, 5x5) with per-channel weight slabs
    #      (fc1 weight pre-reshaped to (16, 25, 120) matching torch's
    #       view(-1, 16*5*5) flatten order).  Pairwise tree sum of partials.
    parts = [jnp.dot(g2[c:c + 1, :], fc1w_ref[c],
                     preferred_element_type=jnp.float32)
             for c in range(_C2_OUT)]
    while len(parts) > 1:
        parts = [parts[i] + parts[i + 1] for i in range(0, len(parts), 2)]
    h = jnp.maximum(parts[0] + fc1b_ref[...], 0.0)       # (1, 120)

    # ---- fc2 (+relu), fc3  (weights pre-transposed to (in, out))
    h = jnp.maximum(
        jnp.dot(h, fc2w_ref[...], preferred_element_type=jnp.float32)
        + fc2b_ref[...], 0.0)
    h = (jnp.dot(h, fc3w_ref[...], preferred_element_type=jnp.float32)
         + fc3b_ref[...])
    out_ref[0] = h                                       # (1, num_classes)


# ----------------------------------------------------------------------------
# One-time (outside jit) parameter preparation
# ----------------------------------------------------------------------------
def _pool2_select():
    """0/1 matrix S (529,25): (vals @ S)[:, Y2*5+X2] = vals[:, 128*Y2 + 4*X2]."""
    q = jnp.arange(_P2_HW * _P2_HW)
    src = 4 * _IN_HW * (q // _P2_HW) + 4 * (q % _P2_HW)
    p = jnp.arange(_P2_LEN)
    return (p[:, None] == src[None, :]).astype(jnp.float32)


def prepare_params(params):
    """Reorder/flatten PyTorch-layout weights once, outside the jit."""
    w1 = params["conv1_w"]                      # (6, Cin, 5, 5)
    w2 = params["conv2_w"]                      # (16, 6, 5, 5)
    cin = w1.shape[1]
    nc = params["fc3_w"].shape[0]
    return {
        # conv weights flattened in the (i, j, c) order used to build p1/p2
        "w1": w1.transpose(0, 2, 3, 1).reshape(_C1_OUT, _KS * _KS * cin),
        "b1": params["conv1_b"].reshape(_C1_OUT, 1),
        "w2": w2.transpose(0, 2, 3, 1).reshape(_C2_OUT, _KS * _KS * _C1_OUT),
        "b2": params["conv2_b"].reshape(_C2_OUT, 1),
        "s2": _pool2_select(),                               # (529, 25)
        # fc1 weight as (16 channels, 25 positions, 120) matching torch .view
        "fc1w": params["fc1_w"].reshape(120, _C2_OUT, _P2_HW * _P2_HW)
                                .transpose(1, 2, 0),
        "fc1b": params["fc1_b"].reshape(1, 120),
        "fc2w": params["fc2_w"].T,               # (120, 84)
        "fc2b": params["fc2_b"].reshape(1, 84),
        "fc3w": params["fc3_w"].T,               # (84, nc)
        "fc3b": params["fc3_b"].reshape(1, nc),
    }


# ----------------------------------------------------------------------------
# Forward: a single pallas_call over the batch
# ----------------------------------------------------------------------------
def lenet_forward(prep, x):
    B, cin, H, W = x.shape
    assert H == _IN_HW and W == _IN_HW, "LeNet fc1 implies 32x32 input"
    nc = prep["fc3b"].shape[1]
    x_flat = x.reshape(B, cin, H * W)            # free, contiguous reshape

    const2d = lambda b: (0, 0)
    out = pl.pallas_call(
        _lenet_fused_kernel,
        out_shape=jax.ShapeDtypeStruct((B, 1, nc), jnp.float32),
        grid=(B,),
        in_specs=[
            pl.BlockSpec((1, cin, H * W), lambda b: (b, 0, 0)),
            pl.BlockSpec(prep["w1"].shape, const2d),
            pl.BlockSpec(prep["b1"].shape, const2d),
            pl.BlockSpec(prep["w2"].shape, const2d),
            pl.BlockSpec(prep["b2"].shape, const2d),
            pl.BlockSpec(prep["s2"].shape, const2d),
            pl.BlockSpec(prep["fc1w"].shape, lambda b: (0, 0, 0)),
            pl.BlockSpec(prep["fc1b"].shape, const2d),
            pl.BlockSpec(prep["fc2w"].shape, const2d),
            pl.BlockSpec(prep["fc2b"].shape, const2d),
            pl.BlockSpec(prep["fc3w"].shape, const2d),
            pl.BlockSpec(prep["fc3b"].shape, const2d),
        ],
        out_specs=pl.BlockSpec((1, 1, nc), lambda b: (b, 0, 0)),
        compiler_params=pltpu.CompilerParams(
            dimension_semantics=("parallel",)),   # batch across megacore TCs
    )(x_flat, prep["w1"], prep["b1"], prep["w2"], prep["b2"], prep["s2"],
      prep["fc1w"], prep["fc1b"], prep["fc2w"], prep["fc2b"],
      prep["fc3w"], prep["fc3b"])
    return out.reshape(B, nc)


# ----------------------------------------------------------------------------
# PyTorch-layout parameter init + pure-XLA reference (for a sanity check)
# ----------------------------------------------------------------------------
def init_lenet_params(key, num_classes=10, input_channels=3):
    ks = jax.random.split(key, 10)

    def uniform(k, shape, fan_in):
        bound = 1.0 / jnp.sqrt(float(fan_in))
        return jax.random.uniform(k, shape, jnp.float32, -bound, bound)

    return {
        "conv1_w": uniform(ks[0], (6, input_channels, 5, 5), input_channels * 25),
        "conv1_b": uniform(ks[1], (6,), input_channels * 25),
        "conv2_w": uniform(ks[2], (16, 6, 5, 5), 6 * 25),
        "conv2_b": uniform(ks[3], (16,), 6 * 25),
        "fc1_w": uniform(ks[4], (120, 400), 400),
        "fc1_b": uniform(ks[5], (120,), 400),
        "fc2_w": uniform(ks[6], (84, 120), 120),
        "fc2_b": uniform(ks[7], (84,), 120),
        "fc3_w": uniform(ks[8], (num_classes, 84), 84),
        "fc3_b": uniform(ks[9], (num_classes,), 84),
    }


def lenet_reference(params, x):
    dn = ("NCHW", "OIHW", "NCHW")
    y = lax.conv_general_dilated(x, params["conv1_w"], (1, 1), "VALID",
                                 dimension_numbers=dn)
    y = jnp.maximum(y + params["conv1_b"].reshape(1, -1, 1, 1), 0.0)
    y = lax.reduce_window(y, -jnp.inf, lax.max, (1, 1, 2, 2), (1, 1, 2, 2),
                          "VALID")
    y = lax.conv_general_dilated(y, params["conv2_w"], (1, 1), "VALID",
                                 dimension_numbers=dn)
    y = jnp.maximum(y + params["conv2_b"].reshape(1, -1, 1, 1), 0.0)
    y = lax.reduce_window(y, -jnp.inf, lax.max, (1, 1, 2, 2), (1, 1, 2, 2),
                          "VALID")
    y = y.reshape(y.shape[0], -1)
    y = jnp.maximum(y @ params["fc1_w"].T + params["fc1_b"], 0.0)
    y = jnp.maximum(y @ params["fc2_w"].T + params["fc2_b"], 0.0)
    return y @ params["fc3_w"].T + params["fc3_b"]


if __name__ == "__main__":
    key = jax.random.PRNGKey(0)
    pkey, xkey = jax.random.split(key)
    params = init_lenet_params(pkey, num_classes=10, input_channels=3)
    prep = prepare_params(params)
    # LeNet's 16*5*5 flatten implies a 32x32 spatial input; small batch.
    x = jax.random.normal(xkey, (2, 3, 32, 32), dtype=jnp.float32)

    out = jax.jit(lenet_forward)(prep, x)
    out = jax.block_until_ready(out)
    assert out.shape == (2, 10) and out.dtype == jnp.float32

    # Sanity check against a plain-XLA reference (loose tol: accumulation order
    # / default matmul precision differ between the MXU kernel and XLA).
    ref = jax.jit(lenet_reference)(params, x)
    tol = 2e-3 + 0.1 * float(jnp.max(jnp.abs(ref)))
    assert bool(jnp.all(jnp.abs(out - ref) <= tol)), "kernel output mismatch"

    print("KERNEL_OK")
</pallas_src>

<mosaic_0001>
module attributes {stable_mosaic.version = 11 : i64} {
  func.func @_lenet_fused_kernel(%arg0: i32, %arg1: memref<1x3x1024xf32, #tpu.memory_space<vmem>>, %arg2: memref<6x75xf32, #tpu.memory_space<vmem>>, %arg3: memref<6x1xf32, #tpu.memory_space<vmem>>, %arg4: memref<16x150xf32, #tpu.memory_space<vmem>>, %arg5: memref<16x1xf32, #tpu.memory_space<vmem>>, %arg6: memref<529x25xf32, #tpu.memory_space<vmem>>, %arg7: memref<16x25x120xf32, #tpu.memory_space<vmem>>, %arg8: memref<1x120xf32, #tpu.memory_space<vmem>>, %arg9: memref<120x84xf32, #tpu.memory_space<vmem>>, %arg10: memref<1x84xf32, #tpu.memory_space<vmem>>, %arg11: memref<84x10xf32, #tpu.memory_space<vmem>>, %arg12: memref<1x10xf32, #tpu.memory_space<vmem>>, %arg13: memref<1x1x10xf32, #tpu.memory_space<vmem>>) attributes {dimension_semantics = [#tpu.dimension_semantics<parallel>], iteration_bounds = array<i64: 2>, scalar_prefetch = 0 : i64, scratch_operands = 0 : i64, tpu.core_type = #tpu.core_type<tc>, window_params = [{transform_indices = @transform_0, window_bounds = array<i64: 1, 3, 1024>}, {pipeline_mode = #tpu.pipeline_mode<synchronous>, transform_indices = @transform_1, window_bounds = array<i64: 6, 75>}, {pipeline_mode = #tpu.pipeline_mode<synchronous>, transform_indices = @transform_2, window_bounds = array<i64: 6, 1>}, {pipeline_mode = #tpu.pipeline_mode<synchronous>, transform_indices = @transform_3, window_bounds = array<i64: 16, 150>}, {pipeline_mode = #tpu.pipeline_mode<synchronous>, transform_indices = @transform_4, window_bounds = array<i64: 16, 1>}, {pipeline_mode = #tpu.pipeline_mode<synchronous>, transform_indices = @transform_5, window_bounds = array<i64: 529, 25>}, {pipeline_mode = #tpu.pipeline_mode<synchronous>, transform_indices = @transform_6, window_bounds = array<i64: 16, 25, 120>}, {pipeline_mode = #tpu.pipeline_mode<synchronous>, transform_indices = @transform_7, window_bounds = array<i64: 1, 120>}, {pipeline_mode = #tpu.pipeline_mode<synchronous>, transform_indices = @transform_8, window_bounds = array<i64: 120, 84>}, {pipeline_mode = #tpu.pipeline_mode<synchronous>, transform_indices = @transform_9, window_bounds = array<i64: 1, 84>}, {pipeline_mode = #tpu.pipeline_mode<synchronous>, transform_indices = @transform_10, window_bounds = array<i64: 84, 10>}, {pipeline_mode = #tpu.pipeline_mode<synchronous>, transform_indices = @transform_11, window_bounds = array<i64: 1, 10>}, {transform_indices = @transform_12, window_bounds = array<i64: 1, 1, 10>}]} {
    %c0 = arith.constant 0 : index
    %c0_0 = arith.constant 0 : index
    %c0_1 = arith.constant 0 : index
    %0 = vector.load %arg1[%c0, %c0_0, %c0_1] : memref<1x3x1024xf32, #tpu.memory_space<vmem>>, vector<1x3x1024xf32>
    %1 = vector.shape_cast %0 : vector<1x3x1024xf32> to vector<3x1024xf32>
    %2 = vector.extract_strided_slice %1 {offsets = [0, 0], sizes = [3, 892], strides = [1, 1]} : vector<3x1024xf32> to vector<3x892xf32>
    %3 = vector.extract_strided_slice %1 {offsets = [0, 1], sizes = [3, 892], strides = [1, 1]} : vector<3x1024xf32> to vector<3x892xf32>
    %4 = vector.extract_strided_slice %1 {offsets = [0, 2], sizes = [3, 892], strides = [1, 1]} : vector<3x1024xf32> to vector<3x892xf32>
    %5 = vector.extract_strided_slice %1 {offsets = [0, 3], sizes = [3, 892], strides = [1, 1]} : vector<3x1024xf32> to vector<3x892xf32>
    %6 = vector.extract_strided_slice %1 {offsets = [0, 4], sizes = [3, 892], strides = [1, 1]} : vector<3x1024xf32> to vector<3x892xf32>
    %7 = vector.extract_strided_slice %1 {offsets = [0, 32], sizes = [3, 892], strides = [1, 1]} : vector<3x1024xf32> to vector<3x892xf32>
    %8 = vector.extract_strided_slice %1 {offsets = [0, 33], sizes = [3, 892], strides = [1, 1]} : vector<3x1024xf32> to vector<3x892xf32>
    %9 = vector.extract_strided_slice %1 {offsets = [0, 34], sizes = [3, 892], strides = [1, 1]} : vector<3x1024xf32> to vector<3x892xf32>
    %10 = vector.extract_strided_slice %1 {offsets = [0, 35], sizes = [3, 892], strides = [1, 1]} : vector<3x1024xf32> to vector<3x892xf32>
    %11 = vector.extract_strided_slice %1 {offsets = [0, 36], sizes = [3, 892], strides = [1, 1]} : vector<3x1024xf32> to vector<3x892xf32>
    %12 = vector.extract_strided_slice %1 {offsets = [0, 64], sizes = [3, 892], strides = [1, 1]} : vector<3x1024xf32> to vector<3x892xf32>
    %13 = vector.extract_strided_slice %1 {offsets = [0, 65], sizes = [3, 892], strides = [1, 1]} : vector<3x1024xf32> to vector<3x892xf32>
    %14 = vector.extract_strided_slice %1 {offsets = [0, 66], sizes = [3, 892], strides = [1, 1]} : vector<3x1024xf32> to vector<3x892xf32>
    %15 = vector.extract_strided_slice %1 {offsets = [0, 67], sizes = [3, 892], strides = [1, 1]} : vector<3x1024xf32> to vector<3x892xf32>
    %16 = vector.extract_strided_slice %1 {offsets = [0, 68], sizes = [3, 892], strides = [1, 1]} : vector<3x1024xf32> to vector<3x892xf32>
    %17 = vector.extract_strided_slice %1 {offsets = [0, 96], sizes = [3, 892], strides = [1, 1]} : vector<3x1024xf32> to vector<3x892xf32>
    %18 = vector.extract_strided_slice %1 {offsets = [0, 97], sizes = [3, 892], strides = [1, 1]} : vector<3x1024xf32> to vector<3x892xf32>
    %19 = vector.extract_strided_slice %1 {offsets = [0, 98], sizes = [3, 892], strides = [1, 1]} : vector<3x1024xf32> to vector<3x892xf32>
    %20 = vector.extract_strided_slice %1 {offsets = [0, 99], sizes = [3, 892], strides = [1, 1]} : vector<3x1024xf32> to vector<3x892xf32>
    %21 = vector.extract_strided_slice %1 {offsets = [0, 100], sizes = [3, 892], strides = [1, 1]} : vector<3x1024xf32> to vector<3x892xf32>
    %22 = vector.extract_strided_slice %1 {offsets = [0, 128], sizes = [3, 892], strides = [1, 1]} : vector<3x1024xf32> to vector<3x892xf32>
    %23 = vector.extract_strided_slice %1 {offsets = [0, 129], sizes = [3, 892], strides = [1, 1]} : vector<3x1024xf32> to vector<3x892xf32>
    %24 = vector.extract_strided_slice %1 {offsets = [0, 130], sizes = [3, 892], strides = [1, 1]} : vector<3x1024xf32> to vector<3x892xf32>
    %25 = vector.extract_strided_slice %1 {offsets = [0, 131], sizes = [3, 892], strides = [1, 1]} : vector<3x1024xf32> to vector<3x892xf32>
    %26 = vector.extract_strided_slice %1 {offsets = [0, 132], sizes = [3, 892], strides = [1, 1]} : vector<3x1024xf32> to vector<3x892xf32>
    %27 = tpu.concatenate %2, %3, %4, %5, %6, %7, %8, %9, %10, %11, %12, %13, %14, %15, %16, %17 in 0 : vector<3x892xf32>, vector<3x892xf32>, vector<3x892xf32>, vector<3x892xf32>, vector<3x892xf32>, vector<3x892xf32>, vector<3x892xf32>, vector<3x892xf32>, vector<3x892xf32>, vector<3x892xf32>, vector<3x892xf32>, vector<3x892xf32>, vector<3x892xf32>, vector<3x892xf32>, vector<3x892xf32>, vector<3x892xf32> -> vector<48x892xf32>
    %28 = tpu.concatenate %18, %19, %20, %21, %22, %23, %24, %25, %26 in 0 : vector<3x892xf32>, vector<3x892xf32>, vector<3x892xf32>, vector<3x892xf32>, vector<3x892xf32>, vector<3x892xf32>, vector<3x892xf32>, vector<3x892xf32>, vector<3x892xf32> -> vector<27x892xf32>
    %29 = tpu.concatenate %27, %28 in 0 : vector<48x892xf32>, vector<27x892xf32> -> vector<75x892xf32>
    %c0_2 = arith.constant 0 : index
    %c0_3 = arith.constant 0 : index
    %30 = vector.load %arg2[%c0_2, %c0_3] : memref<6x75xf32, #tpu.memory_space<vmem>>, vector<6x75xf32>
    %cst = arith.constant dense<0.000000e+00> : vector<6x892xf32>
    %31 = tpu.matmul %30, %29, %cst {dimension_numbers = #tpu.dot_dimension_numbers<[1], [0], [0], [1], [0, 0, 1, 1], [], []>} : vector<6x75xf32>, vector<75x892xf32>, vector<6x892xf32> -> vector<6x892xf32>
    %c0_4 = arith.constant 0 : index
    %c0_5 = arith.constant 0 : index
    %32 = vector.load %arg3[%c0_4, %c0_5] : memref<6x1xf32, #tpu.memory_space<vmem>>, vector<6x1xf32>
    %33 = vector.broadcast %32 : vector<6x1xf32> to vector<6x892xf32>
    %34 = arith.addf %31, %33 : vector<6x892xf32>
    %cst_6 = arith.constant 0.000000e+00 : f32
    %35 = vector.broadcast %cst_6 : f32 to vector<6x892xf32>
    %36 = arith.maximumf %34, %35 : vector<6x892xf32>
    %37 = vector.extract_strided_slice %36 {offsets = [0, 0], sizes = [6, 859], strides = [1, 1]} : vector<6x892xf32> to vector<6x859xf32>
    %38 = vector.extract_strided_slice %36 {offsets = [0, 1], sizes = [6, 859], strides = [1, 1]} : vector<6x892xf32> to vector<6x859xf32>
    %39 = arith.maximumf %37, %38 : vector<6x859xf32>
    %40 = vector.extract_strided_slice %36 {offsets = [0, 32], sizes = [6, 859], strides = [1, 1]} : vector<6x892xf32> to vector<6x859xf32>
    %41 = vector.extract_strided_slice %36 {offsets = [0, 33], sizes = [6, 859], strides = [1, 1]} : vector<6x892xf32> to vector<6x859xf32>
    %42 = arith.maximumf %40, %41 : vector<6x859xf32>
    %43 = arith.maximumf %39, %42 : vector<6x859xf32>
    %44 = vector.extract_strided_slice %43 {offsets = [0, 0], sizes = [6, 595], strides = [1, 1]} : vector<6x859xf32> to vector<6x595xf32>
    %45 = vector.extract_strided_slice %43 {offsets = [0, 2], sizes = [6, 595], strides = [1, 1]} : vector<6x859xf32> to vector<6x595xf32>
    %46 = vector.extract_strided_slice %43 {offsets = [0, 4], sizes = [6, 595], strides = [1, 1]} : vector<6x859xf32> to vector<6x595xf32>
    %47 = vector.extract_strided_slice %43 {offsets = [0, 6], sizes = [6, 595], strides = [1, 1]} : vector<6x859xf32> to vector<6x595xf32>
    %48 = vector.extract_strided_slice %43 {offsets = [0, 8], sizes = [6, 595], strides = [1, 1]} : vector<6x859xf32> to vector<6x595xf32>
    %49 = vector.extract_strided_slice %43 {offsets = [0, 64], sizes = [6, 595], strides = [1, 1]} : vector<6x859xf32> to vector<6x595xf32>
    %50 = vector.extract_strided_slice %43 {offsets = [0, 66], sizes = [6, 595], strides = [1, 1]} : vector<6x859xf32> to vector<6x595xf32>
    %51 = vector.extract_strided_slice %43 {offsets = [0, 68], sizes = [6, 595], strides = [1, 1]} : vector<6x859xf32> to vector<6x595xf32>
    %52 = vector.extract_strided_slice %43 {offsets = [0, 70], sizes = [6, 595], strides = [1, 1]} : vector<6x859xf32> to vector<6x595xf32>
    %53 = vector.extract_strided_slice %43 {offsets = [0, 72], sizes = [6, 595], strides = [1, 1]} : vector<6x859xf32> to vector<6x595xf32>
    %54 = vector.extract_strided_slice %43 {offsets = [0, 128], sizes = [6, 595], strides = [1, 1]} : vector<6x859xf32> to vector<6x595xf32>
    %55 = vector.extract_strided_slice %43 {offsets = [0, 130], sizes = [6, 595], strides = [1, 1]} : vector<6x859xf32> to vector<6x595xf32>
    %56 = vector.extract_strided_slice %43 {offsets = [0, 132], sizes = [6, 595], strides = [1, 1]} : vector<6x859xf32> to vector<6x595xf32>
    %57 = vector.extract_strided_slice %43 {offsets = [0, 134], sizes = [6, 595], strides = [1, 1]} : vector<6x859xf32> to vector<6x595xf32>
    %58 = vector.extract_strided_slice %43 {offsets = [0, 136], sizes = [6, 595], strides = [1, 1]} : vector<6x859xf32> to vector<6x595xf32>
    %59 = vector.extract_strided_slice %43 {offsets = [0, 192], sizes = [6, 595], strides = [1, 1]} : vector<6x859xf32> to vector<6x595xf32>
    %60 = vector.extract_strided_slice %43 {offsets = [0, 194], sizes = [6, 595], strides = [1, 1]} : vector<6x859xf32> to vector<6x595xf32>
    %61 = vector.extract_strided_slice %43 {offsets = [0, 196], sizes = [6, 595], strides = [1, 1]} : vector<6x859xf32> to vector<6x595xf32>
    %62 = vector.extract_strided_slice %43 {offsets = [0, 198], sizes = [6, 595], strides = [1, 1]} : vector<6x859xf32> to vector<6x595xf32>
    %63 = vector.extract_strided_slice %43 {offsets = [0, 200], sizes = [6, 595], strides = [1, 1]} : vector<6x859xf32> to vector<6x595xf32>
    %64 = vector.extract_strided_slice %43 {offsets = [0, 256], sizes = [6, 595], strides = [1, 1]} : vector<6x859xf32> to vector<6x595xf32>
    %65 = vector.extract_strided_slice %43 {offsets = [0, 258], sizes = [6, 595], strides = [1, 1]} : vector<6x859xf32> to vector<6x595xf32>
    %66 = vector.extract_strided_slice %43 {offsets = [0, 260], sizes = [6, 595], strides = [1, 1]} : vector<6x859xf32> to vector<6x595xf32>
    %67 = vector.extract_strided_slice %43 {offsets = [0, 262], sizes = [6, 595], strides = [1, 1]} : vector<6x859xf32> to vector<6x595xf32>
    %68 = vector.extract_strided_slice %43 {offsets = [0, 264], sizes = [6, 595], strides = [1, 1]} : vector<6x859xf32> to vector<6x595xf32>
    %69 = tpu.concatenate %44, %45, %46, %47, %48, %49, %50, %51, %52, %53, %54, %55, %56, %57, %58, %59 in 0 : vector<6x595xf32>, vector<6x595xf32>, vector<6x595xf32>, vector<6x595xf32>, vector<6x595xf32>, vector<6x595xf32>, vector<6x595xf32>, vector<6x595xf32>, vector<6x595xf32>, vector<6x595xf32>, vector<6x595xf32>, vector<6x595xf32>, vector<6x595xf32>, vector<6x595xf32>, vector<6x595xf32>, vector<6x595xf32> -> vector<96x595xf32>
    %70 = tpu.concatenate %60, %61, %62, %63, %64, %65, %66, %67, %68 in 0 : vector<6x595xf32>, vector<6x595xf32>, vector<6x595xf32>, vector<6x595xf32>, vector<6x595xf32>, vector<6x595xf32>, vector<6x595xf32>, vector<6x595xf32>, vector<6x595xf32> -> vector<54x595xf32>
    %71 = tpu.concatenate %69, %70 in 0 : vector<96x595xf32>, vector<54x595xf32> -> vector<150x595xf32>
    %c0_7 = arith.constant 0 : index
    %c0_8 = arith.constant 0 : index
    %72 = vector.load %arg4[%c0_7, %c0_8] : memref<16x150xf32, #tpu.memory_space<vmem>>, vector<16x150xf32>
    %cst_9 = arith.constant dense<0.000000e+00> : vector<16x595xf32>
    %73 = tpu.matmul %72, %71, %cst_9 {dimension_numbers = #tpu.dot_dimension_numbers<[1], [0], [0], [1], [0, 0, 1, 1], [], []>} : vector<16x150xf32>, vector<150x595xf32>, vector<16x595xf32> -> vector<16x595xf32>
    %c0_10 = arith.constant 0 : index
    %c0_11 = arith.constant 0 : index
    %74 = vector.load %arg5[%c0_10, %c0_11] : memref<16x1xf32, #tpu.memory_space<vmem>>, vector<16x1xf32>
    %75 = vector.broadcast %74 : vector<16x1xf32> to vector<16x595xf32>
    %76 = arith.addf %73, %75 : vector<16x595xf32>
    %cst_12 = arith.constant 0.000000e+00 : f32
    %77 = vector.broadcast %cst_12 : f32 to vector<16x595xf32>
    %78 = arith.maximumf %76, %77 : vector<16x595xf32>
    %79 = vector.extract_strided_slice %78 {offsets = [0, 0], sizes = [16, 529], strides = [1, 1]} : vector<16x595xf32> to vector<16x529xf32>
    %80 = vector.extract_strided_slice %78 {offsets = [0, 2], sizes = [16, 529], strides = [1, 1]} : vector<16x595xf32> to vector<16x529xf32>
    %81 = arith.maximumf %79, %80 : vector<16x529xf32>
    %82 = vector.extract_strided_slice %78 {offsets = [0, 64], sizes = [16, 529], strides = [1, 1]} : vector<16x595xf32> to vector<16x529xf32>
    %83 = vector.extract_strided_slice %78 {offsets = [0, 66], sizes = [16, 529], strides = [1, 1]} : vector<16x595xf32> to vector<16x529xf32>
    %84 = arith.maximumf %82, %83 : vector<16x529xf32>
    %85 = arith.maximumf %81, %84 : vector<16x529xf32>
    %c0_13 = arith.constant 0 : index
    %c0_14 = arith.constant 0 : index
    %86 = vector.load %arg6[%c0_13, %c0_14] : memref<529x25xf32, #tpu.memory_space<vmem>>, vector<529x25xf32>
    %cst_15 = arith.constant dense<0.000000e+00> : vector<16x25xf32>
    %87 = tpu.matmul %85, %86, %cst_15 {dimension_numbers = #tpu.dot_dimension_numbers<[1], [0], [0], [1], [0, 0, 1, 1], [], []>} : vector<16x529xf32>, vector<529x25xf32>, vector<16x25xf32> -> vector<16x25xf32>
    %88 = vector.extract_strided_slice %87 {offsets = [0, 0], sizes = [1, 25], strides = [1, 1]} : vector<16x25xf32> to vector<1x25xf32>
    %c0_16 = arith.constant 0 : index
    %c0_17 = arith.constant 0 : index
    %c0_18 = arith.constant 0 : index
    %89 = vector.load %arg7[%c0_16, %c0_17, %c0_18] : memref<16x25x120xf32, #tpu.memory_space<vmem>>, vector<1x25x120xf32>
    %90 = vector.shape_cast %89 : vector<1x25x120xf32> to vector<25x120xf32>
    %cst_19 = arith.constant dense<0.000000e+00> : vector<1x120xf32>
    %91 = tpu.matmul %88, %90, %cst_19 {dimension_numbers = #tpu.dot_dimension_numbers<[1], [0], [0], [1], [0, 0, 1, 1], [], []>} : vector<1x25xf32>, vector<25x120xf32>, vector<1x120xf32> -> vector<1x120xf32>
    %92 = vector.extract_strided_slice %87 {offsets = [1, 0], sizes = [1, 25], strides = [1, 1]} : vector<16x25xf32> to vector<1x25xf32>
    %c1 = arith.constant 1 : index
    %c0_20 = arith.constant 0 : index
    %c0_21 = arith.constant 0 : index
    %93 = vector.load %arg7[%c1, %c0_20, %c0_21] : memref<16x25x120xf32, #tpu.memory_space<vmem>>, vector<1x25x120xf32>
    %94 = vector.shape_cast %93 : vector<1x25x120xf32> to vector<25x120xf32>
    %cst_22 = arith.constant dense<0.000000e+00> : vector<1x120xf32>
    %95 = tpu.matmul %92, %94, %cst_22 {dimension_numbers = #tpu.dot_dimension_numbers<[1], [0], [0], [1], [0, 0, 1, 1], [], []>} : vector<1x25xf32>, vector<25x120xf32>, vector<1x120xf32> -> vector<1x120xf32>
    %96 = vector.extract_strided_slice %87 {offsets = [2, 0], sizes = [1, 25], strides = [1, 1]} : vector<16x25xf32> to vector<1x25xf32>
    %c2 = arith.constant 2 : index
    %c0_23 = arith.constant 0 : index
    %c0_24 = arith.constant 0 : index
    %97 = vector.load %arg7[%c2, %c0_23, %c0_24] : memref<16x25x120xf32, #tpu.memory_space<vmem>>, vector<1x25x120xf32>
    %98 = vector.shape_cast %97 : vector<1x25x120xf32> to vector<25x120xf32>
    %cst_25 = arith.constant dense<0.000000e+00> : vector<1x120xf32>
    %99 = tpu.matmul %96, %98, %cst_25 {dimension_numbers = #tpu.dot_dimension_numbers<[1], [0], [0], [1], [0, 0, 1, 1], [], []>} : vector<1x25xf32>, vector<25x120xf32>, vector<1x120xf32> -> vector<1x120xf32>
    %100 = vector.extract_strided_slice %87 {offsets = [3, 0], sizes = [1, 25], strides = [1, 1]} : vector<16x25xf32> to vector<1x25xf32>
    %c3 = arith.constant 3 : index
    %c0_26 = arith.constant 0 : index
    %c0_27 = arith.constant 0 : index
    %101 = vector.load %arg7[%c3, %c0_26, %c0_27] : memref<16x25x120xf32, #tpu.memory_space<vmem>>, vector<1x25x120xf32>
    %102 = vector.shape_cast %101 : vector<1x25x120xf32> to vector<25x120xf32>
    %cst_28 = arith.constant dense<0.000000e+00> : vector<1x120xf32>
    %103 = tpu.matmul %100, %102, %cst_28 {dimension_numbers = #tpu.dot_dimension_numbers<[1], [0], [0], [1], [0, 0, 1, 1], [], []>} : vector<1x25xf32>, vector<25x120xf32>, vector<1x120xf32> -> vector<1x120xf32>
    %104 = vector.extract_strided_slice %87 {offsets = [4, 0], sizes = [1, 25], strides = [1, 1]} : vector<16x25xf32> to vector<1x25xf32>
    %c4 = arith.constant 4 : index
    %c0_29 = arith.constant 0 : index
    %c0_30 = arith.constant 0 : index
    %105 = vector.load %arg7[%c4, %c0_29, %c0_30] : memref<16x25x120xf32, #tpu.memory_space<vmem>>, vector<1x25x120xf32>
    %106 = vector.shape_cast %105 : vector<1x25x120xf32> to vector<25x120xf32>
    %cst_31 = arith.constant dense<0.000000e+00> : vector<1x120xf32>
    %107 = tpu.matmul %104, %106, %cst_31 {dimension_numbers = #tpu.dot_dimension_numbers<[1], [0], [0], [1], [0, 0, 1, 1], [], []>} : vector<1x25xf32>, vector<25x120xf32>, vector<1x120xf32> -> vector<1x120xf32>
    %108 = vector.extract_strided_slice %87 {offsets = [5, 0], sizes = [1, 25], strides = [1, 1]} : vector<16x25xf32> to vector<1x25xf32>
    %c5 = arith.constant 5 : index
    %c0_32 = arith.constant 0 : index
    %c0_33 = arith.constant 0 : index
    %109 = vector.load %arg7[%c5, %c0_32, %c0_33] : memref<16x25x120xf32, #tpu.memory_space<vmem>>, vector<1x25x120xf32>
    %110 = vector.shape_cast %109 : vector<1x25x120xf32> to vector<25x120xf32>
    %cst_34 = arith.constant dense<0.000000e+00> : vector<1x120xf32>
    %111 = tpu.matmul %108, %110, %cst_34 {dimension_numbers = #tpu.dot_dimension_numbers<[1], [0], [0], [1], [0, 0, 1, 1], [], []>} : vector<1x25xf32>, vector<25x120xf32>, vector<1x120xf32> -> vector<1x120xf32>
    %112 = vector.extract_strided_slice %87 {offsets = [6, 0], sizes = [1, 25], strides = [1, 1]} : vector<16x25xf32> to vector<1x25xf32>
    %c6 = arith.constant 6 : index
    %c0_35 = arith.constant 0 : index
    %c0_36 = arith.constant 0 : index
    %113 = vector.load %arg7[%c6, %c0_35, %c0_36] : memref<16x25x120xf32, #tpu.memory_space<vmem>>, vector<1x25x120xf32>
    %114 = vector.shape_cast %113 : vector<1x25x120xf32> to vector<25x120xf32>
    %cst_37 = arith.constant dense<0.000000e+00> : vector<1x120xf32>
    %115 = tpu.matmul %112, %114, %cst_37 {dimension_numbers = #tpu.dot_dimension_numbers<[1], [0], [0], [1], [0, 0, 1, 1], [], []>} : vector<1x25xf32>, vector<25x120xf32>, vector<1x120xf32> -> vector<1x120xf32>
    %116 = vector.extract_strided_slice %87 {offsets = [7, 0], sizes = [1, 25], strides = [1, 1]} : vector<16x25xf32> to vector<1x25xf32>
    %c7 = arith.constant 7 : index
    %c0_38 = arith.constant 0 : index
    %c0_39 = arith.constant 0 : index
    %117 = vector.load %arg7[%c7, %c0_38, %c0_39] : memref<16x25x120xf32, #tpu.memory_space<vmem>>, vector<1x25x120xf32>
    %118 = vector.shape_cast %117 : vector<1x25x120xf32> to vector<25x120xf32>
    %cst_40 = arith.constant dense<0.000000e+00> : vector<1x120xf32>
    %119 = tpu.matmul %116, %118, %cst_40 {dimension_numbers = #tpu.dot_dimension_numbers<[1], [0], [0], [1], [0, 0, 1, 1], [], []>} : vector<1x25xf32>, vector<25x120xf32>, vector<1x120xf32> -> vector<1x120xf32>
    %120 = vector.extract_strided_slice %87 {offsets = [8, 0], sizes = [1, 25], strides = [1, 1]} : vector<16x25xf32> to vector<1x25xf32>
    %c8 = arith.constant 8 : index
    %c0_41 = arith.constant 0 : index
    %c0_42 = arith.constant 0 : index
    %121 = vector.load %arg7[%c8, %c0_41, %c0_42] : memref<16x25x120xf32, #tpu.memory_space<vmem>>, vector<1x25x120xf32>
    %122 = vector.shape_cast %121 : vector<1x25x120xf32> to vector<25x120xf32>
    %cst_43 = arith.constant dense<0.000000e+00> : vector<1x120xf32>
    %123 = tpu.matmul %120, %122, %cst_43 {dimension_numbers = #tpu.dot_dimension_numbers<[1], [0], [0], [1], [0, 0, 1, 1], [], []>} : vector<1x25xf32>, vector<25x120xf32>, vector<1x120xf32> -> vector<1x120xf32>
    %124 = vector.extract_strided_slice %87 {offsets = [9, 0], sizes = [1, 25], strides = [1, 1]} : vector<16x25xf32> to vector<1x25xf32>
    %c9 = arith.constant 9 : index
    %c0_44 = arith.constant 0 : index
    %c0_45 = arith.constant 0 : index
    %125 = vector.load %arg7[%c9, %c0_44, %c0_45] : memref<16x25x120xf32, #tpu.memory_space<vmem>>, vector<1x25x120xf32>
    %126 = vector.shape_cast %125 : vector<1x25x120xf32> to vector<25x120xf32>
    %cst_46 = arith.constant dense<0.000000e+00> : vector<1x120xf32>
    %127 = tpu.matmul %124, %126, %cst_46 {dimension_numbers = #tpu.dot_dimension_numbers<[1], [0], [0], [1], [0, 0, 1, 1], [], []>} : vector<1x25xf32>, vector<25x120xf32>, vector<1x120xf32> -> vector<1x120xf32>
    %128 = vector.extract_strided_slice %87 {offsets = [10, 0], sizes = [1, 25], strides = [1, 1]} : vector<16x25xf32> to vector<1x25xf32>
    %c10 = arith.constant 10 : index
    %c0_47 = arith.constant 0 : index
    %c0_48 = arith.constant 0 : index
    %129 = vector.load %arg7[%c10, %c0_47, %c0_48] : memref<16x25x120xf32, #tpu.memory_space<vmem>>, vector<1x25x120xf32>
    %130 = vector.shape_cast %129 : vector<1x25x120xf32> to vector<25x120xf32>
    %cst_49 = arith.constant dense<0.000000e+00> : vector<1x120xf32>
    %131 = tpu.matmul %128, %130, %cst_49 {dimension_numbers = #tpu.dot_dimension_numbers<[1], [0], [0], [1], [0, 0, 1, 1], [], []>} : vector<1x25xf32>, vector<25x120xf32>, vector<1x120xf32> -> vector<1x120xf32>
    %132 = vector.extract_strided_slice %87 {offsets = [11, 0], sizes = [1, 25], strides = [1, 1]} : vector<16x25xf32> to vector<1x25xf32>
    %c11 = arith.constant 11 : index
    %c0_50 = arith.constant 0 : index
    %c0_51 = arith.constant 0 : index
    %133 = vector.load %arg7[%c11, %c0_50, %c0_51] : memref<16x25x120xf32, #tpu.memory_space<vmem>>, vector<1x25x120xf32>
    %134 = vector.shape_cast %133 : vector<1x25x120xf32> to vector<25x120xf32>
    %cst_52 = arith.constant dense<0.000000e+00> : vector<1x120xf32>
    %135 = tpu.matmul %132, %134, %cst_52 {dimension_numbers = #tpu.dot_dimension_numbers<[1], [0], [0], [1], [0, 0, 1, 1], [], []>} : vector<1x25xf32>, vector<25x120xf32>, vector<1x120xf32> -> vector<1x120xf32>
    %136 = vector.extract_strided_slice %87 {offsets = [12, 0], sizes = [1, 25], strides = [1, 1]} : vector<16x25xf32> to vector<1x25xf32>
    %c12 = arith.constant 12 : index
    %c0_53 = arith.constant 0 : index
    %c0_54 = arith.constant 0 : index
    %137 = vector.load %arg7[%c12, %c0_53, %c0_54] : memref<16x25x120xf32, #tpu.memory_space<vmem>>, vector<1x25x120xf32>
    %138 = vector.shape_cast %137 : vector<1x25x120xf32> to vector<25x120xf32>
    %cst_55 = arith.constant dense<0.000000e+00> : vector<1x120xf32>
    %139 = tpu.matmul %136, %138, %cst_55 {dimension_numbers = #tpu.dot_dimension_numbers<[1], [0], [0], [1], [0, 0, 1, 1], [], []>} : vector<1x25xf32>, vector<25x120xf32>, vector<1x120xf32> -> vector<1x120xf32>
    %140 = vector.extract_strided_slice %87 {offsets = [13, 0], sizes = [1, 25], strides = [1, 1]} : vector<16x25xf32> to vector<1x25xf32>
    %c13 = arith.constant 13 : index
    %c0_56 = arith.constant 0 : index
    %c0_57 = arith.constant 0 : index
    %141 = vector.load %arg7[%c13, %c0_56, %c0_57] : memref<16x25x120xf32, #tpu.memory_space<vmem>>, vector<1x25x120xf32>
    %142 = vector.shape_cast %141 : vector<1x25x120xf32> to vector<25x120xf32>
    %cst_58 = arith.constant dense<0.000000e+00> : vector<1x120xf32>
    %143 = tpu.matmul %140, %142, %cst_58 {dimension_numbers = #tpu.dot_dimension_numbers<[1], [0], [0], [1], [0, 0, 1, 1], [], []>} : vector<1x25xf32>, vector<25x120xf32>, vector<1x120xf32> -> vector<1x120xf32>
    %144 = vector.extract_strided_slice %87 {offsets = [14, 0], sizes = [1, 25], strides = [1, 1]} : vector<16x25xf32> to vector<1x25xf32>
    %c14 = arith.constant 14 : index
    %c0_59 = arith.constant 0 : index
    %c0_60 = arith.constant 0 : index
    %145 = vector.load %arg7[%c14, %c0_59, %c0_60] : memref<16x25x120xf32, #tpu.memory_space<vmem>>, vector<1x25x120xf32>
    %146 = vector.shape_cast %145 : vector<1x25x120xf32> to vector<25x120xf32>
    %cst_61 = arith.constant dense<0.000000e+00> : vector<1x120xf32>
    %147 = tpu.matmul %144, %146, %cst_61 {dimension_numbers = #tpu.dot_dimension_numbers<[1], [0], [0], [1], [0, 0, 1, 1], [], []>} : vector<1x25xf32>, vector<25x120xf32>, vector<1x120xf32> -> vector<1x120xf32>
    %148 = vector.extract_strided_slice %87 {offsets = [15, 0], sizes = [1, 25], strides = [1, 1]} : vector<16x25xf32> to vector<1x25xf32>
    %c15 = arith.constant 15 : index
    %c0_62 = arith.constant 0 : index
    %c0_63 = arith.constant 0 : index
    %149 = vector.load %arg7[%c15, %c0_62, %c0_63] : memref<16x25x120xf32, #tpu.memory_space<vmem>>, vector<1x25x120xf32>
    %150 = vector.shape_cast %149 : vector<1x25x120xf32> to vector<25x120xf32>
    %cst_64 = arith.constant dense<0.000000e+00> : vector<1x120xf32>
    %151 = tpu.matmul %148, %150, %cst_64 {dimension_numbers = #tpu.dot_dimension_numbers<[1], [0], [0], [1], [0, 0, 1, 1], [], []>} : vector<1x25xf32>, vector<25x120xf32>, vector<1x120xf32> -> vector<1x120xf32>
    %152 = arith.addf %91, %95 : vector<1x120xf32>
    %153 = arith.addf %99, %103 : vector<1x120xf32>
    %154 = arith.addf %107, %111 : vector<1x120xf32>
    %155 = arith.addf %115, %119 : vector<1x120xf32>
    %156 = arith.addf %123, %127 : vector<1x120xf32>
    %157 = arith.addf %131, %135 : vector<1x120xf32>
    %158 = arith.addf %139, %143 : vector<1x120xf32>
    %159 = arith.addf %147, %151 : vector<1x120xf32>
    %160 = arith.addf %152, %153 : vector<1x120xf32>
    %161 = arith.addf %154, %155 : vector<1x120xf32>
    %162 = arith.addf %156, %157 : vector<1x120xf32>
    %163 = arith.addf %158, %159 : vector<1x120xf32>
    %164 = arith.addf %160, %161 : vector<1x120xf32>
    %165 = arith.addf %162, %163 : vector<1x120xf32>
    %166 = arith.addf %164, %165 : vector<1x120xf32>
    %c0_65 = arith.constant 0 : index
    %c0_66 = arith.constant 0 : index
    %167 = vector.load %arg8[%c0_65, %c0_66] : memref<1x120xf32, #tpu.memory_space<vmem>>, vector<1x120xf32>
    %168 = arith.addf %166, %167 : vector<1x120xf32>
    %cst_67 = arith.constant 0.000000e+00 : f32
    %169 = vector.broadcast %cst_67 : f32 to vector<1x120xf32>
    %170 = arith.maximumf %168, %169 : vector<1x120xf32>
    %c0_68 = arith.constant 0 : index
    %c0_69 = arith.constant 0 : index
    %171 = vector.load %arg9[%c0_68, %c0_69] : memref<120x84xf32, #tpu.memory_space<vmem>>, vector<120x84xf32>
    %cst_70 = arith.constant dense<0.000000e+00> : vector<1x84xf32>
    %172 = tpu.matmul %170, %171, %cst_70 {dimension_numbers = #tpu.dot_dimension_numbers<[1], [0], [0], [1], [0, 0, 1, 1], [], []>} : vector<1x120xf32>, vector<120x84xf32>, vector<1x84xf32> -> vector<1x84xf32>
    %c0_71 = arith.constant 0 : index
    %c0_72 = arith.constant 0 : index
    %173 = vector.load %arg10[%c0_71, %c0_72] : memref<1x84xf32, #tpu.memory_space<vmem>>, vector<1x84xf32>
    %174 = arith.addf %172, %173 : vector<1x84xf32>
    %cst_73 = arith.constant 0.000000e+00 : f32
    %175 = vector.broadcast %cst_73 : f32 to vector<1x84xf32>
    %176 = arith.maximumf %174, %175 : vector<1x84xf32>
    %c0_74 = arith.constant 0 : index
    %c0_75 = arith.constant 0 : index
    %177 = vector.load %arg11[%c0_74, %c0_75] : memref<84x10xf32, #tpu.memory_space<vmem>>, vector<84x10xf32>
    %cst_76 = arith.constant dense<0.000000e+00> : vector<1x10xf32>
    %178 = tpu.matmul %176, %177, %cst_76 {dimension_numbers = #tpu.dot_dimension_numbers<[1], [0], [0], [1], [0, 0, 1, 1], [], []>} : vector<1x84xf32>, vector<84x10xf32>, vector<1x10xf32> -> vector<1x10xf32>
    %c0_77 = arith.constant 0 : index
    %c0_78 = arith.constant 0 : index
    %179 = vector.load %arg12[%c0_77, %c0_78] : memref<1x10xf32, #tpu.memory_space<vmem>>, vector<1x10xf32>
    %180 = arith.addf %178, %179 : vector<1x10xf32>
    %c0_79 = arith.constant 0 : index
    %c0_80 = arith.constant 0 : index
    %c0_81 = arith.constant 0 : index
    %181 = vector.load %arg13[%c0_79, %c0_80, %c0_81] : memref<1x1x10xf32, #tpu.memory_space<vmem>>, vector<1x1x10xf32>
    %182 = vector.shape_cast %181 : vector<1x1x10xf32> to vector<1x10xf32>
    %183 = vector.shape_cast %180 : vector<1x10xf32> to vector<1x1x10xf32>
    tpu.vector_store %arg13[%c0_79, %c0_80, %c0_81], %183 {strides = array<i32>} : memref<1x1x10xf32, #tpu.memory_space<vmem>>, vector<1x1x10xf32>,
    return
  }
  func.func @transform_0(%arg0: i32) -> (i32, i32, i32) {
    %c0_i32 = arith.constant 0 : i32
    %c0_i32_0 = arith.constant 0 : i32
    %c0_i32_1 = arith.constant 0 : i32
    return %arg0, %c0_i32, %c0_i32_0 : i32, i32, i32
  }
  func.func @transform_1(%arg0: i32) -> (i32, i32) {
    %c0_i32 = arith.constant 0 : i32
    %c0_i32_0 = arith.constant 0 : i32
    %c0_i32_1 = arith.constant 0 : i32
    return %c0_i32, %c0_i32_0 : i32, i32
  }
  func.func @transform_2(%arg0: i32) -> (i32, i32) {
    %c0_i32 = arith.constant 0 : i32
    %c0_i32_0 = arith.constant 0 : i32
    %c0_i32_1 = arith.constant 0 : i32
    return %c0_i32, %c0_i32_0 : i32, i32
  }
  func.func @transform_3(%arg0: i32) -> (i32, i32) {
    %c0_i32 = arith.constant 0 : i32
    %c0_i32_0 = arith.constant 0 : i32
    %c0_i32_1 = arith.constant 0 : i32
    return %c0_i32, %c0_i32_0 : i32, i32
  }
  func.func @transform_4(%arg0: i32) -> (i32, i32) {
    %c0_i32 = arith.constant 0 : i32
    %c0_i32_0 = arith.constant 0 : i32
    %c0_i32_1 = arith.constant 0 : i32
    return %c0_i32, %c0_i32_0 : i32, i32
  }
  func.func @transform_5(%arg0: i32) -> (i32, i32) {
    %c0_i32 = arith.constant 0 : i32
    %c0_i32_0 = arith.constant 0 : i32
    %c0_i32_1 = arith.constant 0 : i32
    return %c0_i32, %c0_i32_0 : i32, i32
  }
  func.func @transform_6(%arg0: i32) -> (i32, i32, i32) {
    %c0_i32 = arith.constant 0 : i32
    %c0_i32_0 = arith.constant 0 : i32
    %c0_i32_1 = arith.constant 0 : i32
    %c0_i32_2 = arith.constant 0 : i32
    return %c0_i32, %c0_i32_0, %c0_i32_1 : i32, i32, i32
  }
  func.func @transform_7(%arg0: i32) -> (i32, i32) {
    %c0_i32 = arith.constant 0 : i32
    %c0_i32_0 = arith.constant 0 : i32
    %c0_i32_1 = arith.constant 0 : i32
    return %c0_i32, %c0_i32_0 : i32, i32
  }
  func.func @transform_8(%arg0: i32) -> (i32, i32) {
    %c0_i32 = arith.constant 0 : i32
    %c0_i32_0 = arith.constant 0 : i32
    %c0_i32_1 = arith.constant 0 : i32
    return %c0_i32, %c0_i32_0 : i32, i32
  }
  func.func @transform_9(%arg0: i32) -> (i32, i32) {
    %c0_i32 = arith.constant 0 : i32
    %c0_i32_0 = arith.constant 0 : i32
    %c0_i32_1 = arith.constant 0 : i32
    return %c0_i32, %c0_i32_0 : i32, i32
  }
  func.func @transform_10(%arg0: i32) -> (i32, i32) {
    %c0_i32 = arith.constant 0 : i32
    %c0_i32_0 = arith.constant 0 : i32
    %c0_i32_1 = arith.constant 0 : i32
    return %c0_i32, %c0_i32_0 : i32, i32
  }
  func.func @transform_11(%arg0: i32) -> (i32, i32) {
    %c0_i32 = arith.constant 0 : i32
    %c0_i32_0 = arith.constant 0 : i32
    %c0_i32_1 = arith.constant 0 : i32
    return %c0_i32, %c0_i32_0 : i32, i32
  }
  func.func @transform_12(%arg0: i32) -> (i32, i32, i32) {
    %c0_i32 = arith.constant 0 : i32
    %c0_i32_0 = arith.constant 0 : i32
    %c0_i32_1 = arith.constant 0 : i32
    return %arg0, %c0_i32, %c0_i32_0 : i32, i32, i32
  }
}

</mosaic_0001>

<llo_original>
// kernel: lenet_forward.1
$region0: #{lenet_forward.1}
  #allocation0 [shape = 'u32[]', space=smem, size = 0x4, offset = 0x4, fixed_abs, tag = 'smem constant byte address 0x4 - core index']
  #allocation1 [shape = 'u32[144,128]{1,0:T(1,128)}', space=vmem, size = 0x12000, scoped, tag = 'internal scratch']
  %s0 = inlined_call_operand.vmem [shape: f32[2,3,1024], index: 0, kind: input, shape index: {}]
  %s1 = inlined_call_operand.vmem [shape: f32[6,75], index: 1, kind: input, shape index: {}]
  %s2 = inlined_call_operand.vmem [shape: f32[6,1], index: 2, kind: input, shape index: {}]
  %s3 = inlined_call_operand.vmem [shape: f32[16,150], index: 3, kind: input, shape index: {}]
  %s4 = inlined_call_operand.vmem [shape: f32[16,1], index: 4, kind: input, shape index: {}]
  %s5 = inlined_call_operand.vmem [shape: f32[529,25], index: 5, kind: input, shape index: {}]
  %s6 = inlined_call_operand.vmem [shape: f32[16,25,120], index: 6, kind: input, shape index: {}]
  %s7 = inlined_call_operand.vmem [shape: f32[1,120], index: 7, kind: input, shape index: {}]
  %s8 = inlined_call_operand.vmem [shape: f32[120,84], index: 8, kind: input, shape index: {}]
  %s9 = inlined_call_operand.vmem [shape: f32[1,84], index: 9, kind: input, shape index: {}]
  %s10 = inlined_call_operand.vmem [shape: f32[84,10], index: 10, kind: input, shape index: {}]
  %s11 = inlined_call_operand.vmem [shape: f32[1,10], index: 11, kind: input, shape index: {}]
  %s12 = inlined_call_operand.hbm [shape: f32[2,1,10], index: 12, kind: output, shape index: {}]
  %s13 = sld [smem:[#allocation0]]
  $region81: #{lenet_forward.1} parent=0
    _
  %s15 = ssub.s32 1, %s13
  %s16 = scalar_select 0, %s15, %s13
  $region1: #{lenet_forward.1} parent=0
    #allocation2 [shape = 'u8[1024]{0}', space=vmem, size = 0x400, scoped, tag = 'output window, operand 0']
    #allocation3 [shape = 's32[2]{0}', space=sflag, size = 0x8, scoped, tag = 'scoped memory for lenet_forward.1']
    %17 = vsyncpa [#allocation3], 0
    %s18 = scalar_lea.sflag [#allocation3], 1
    %19 = vsyncpa %s18, 0
    loop: start=0, step=1, limit=4
    $region2: #{lenet_forward.1} parent=1 // loop_pre_header
      _
    $region3: #{lenet_forward.1} parent=1 // loop_header
      %s21 = sphi 0, %s25
      %p22 = scmp.ge.s32.totalorder %s21, 4
      %s31 = sphi 0, %s33
      %s34 = sphi 0, %s31
      %s35 = sphi 0, %s34
      %s51 = sphi 0, %s35
      %s55 = sphi 0, %s55
      %s57 = sphi 0, %s55
      %s58 = sphi 0, %s57
      %s72 = sphi 0, %s58
      %s76 = sphi 0, %s76
      %s78 = sphi 0, %s76
      %s79 = sphi 0, %s78
      %s93 = sphi 0, %s79
      %s97 = sphi 0, %s97
      %s99 = sphi 0, %s97
      %s100 = sphi 0, %s99
      %s114 = sphi 0, %s100
      %s118 = sphi 0, %s118
      %s120 = sphi 0, %s118
      %s121 = sphi 0, %s120
      %s135 = sphi 0, %s121
      %s139 = sphi 0, %s139
      %s141 = sphi 0, %s139
      %s142 = sphi 0, %s141
      %s156 = sphi 0, %s142
      %s160 = sphi 0, %s160
      %s162 = sphi 0, %s160
      %s163 = sphi 0, %s162
      %s177 = sphi 0, %s163
      %s181 = sphi 0, %s181
      %s183 = sphi 0, %s181
      %s184 = sphi 0, %s183
      %s198 = sphi 0, %s184
      %s202 = sphi 0, %s202
      %s204 = sphi 0, %s202
      %s205 = sphi 0, %s204
      %s219 = sphi 0, %s205
      %s223 = sphi 0, %s223
      %s225 = sphi 0, %s223
      %s226 = sphi 0, %s225
      %s240 = sphi 0, %s226
      %s244 = sphi 0, %s244
      %s246 = sphi 0, %s244
      %s247 = sphi 0, %s246
      %s261 = sphi 0, %s247
      %s265 = sphi 0, %s265
      %s267 = sphi 0, %s265
      %s268 = sphi 0, %s267
      %s282 = sphi 0, %s268
      %s288 = sphi 0, %s290
      %s291 = sphi 0, %s288
      %s292 = sphi 0, %s291
      %s308 = sphi 0, %s292
    $region4: #{lenet_forward.1} parent=1 // loop_header_branch
      %24 = sbr.rel (%p22) target = $region8
    $region5: #{lenet_forward.1} parent=1 // loop_body
      %s26 = ssub.s32 %s21, 1
      %s27 = ssub.s32 %s21, 2
      %s28 = sadd.s32 %s21, 1
      %s29 = ssub.s32 %s21, %s28
      %p30 = scmp.eq.s32.totalorder %s29, 0
      %s32 = sadd.s32 %s31, 1
      %s33 = scalar_select %p30, %s31, %s32
      %p36 = pneg %p30
      %p37 = scmp.eq.s32.totalorder %s21, 1
      %p38 = por %p36, %p37
      %p39 = scmp.ne.s32.totalorder %s31, %s34
      %p40 = scmp.eq.s32.totalorder %s21, 0
      %p41 = por %p39, %p40
      %p42 = scmp.ne.s32.totalorder %s31, %s34
      %p43 = scmp.eq.s32.totalorder %s26, 1
      %p44 = por %p42, %p43
      %p45 = scmp.ne.s32.totalorder %s34, %s35
      %p46 = scmp.eq.s32.totalorder %s26, 0
      %p47 = por %p45, %p46
      %p48 = scmp.ne.s32.totalorder %s34, %s35
      %p49 = scmp.eq.s32.totalorder %s27, 1
      %p50 = por %p48, %p49
      %p52 = scmp.ne.s32.totalorder %s35, %s51
      %p53 = scmp.eq.s32.totalorder %s27, 0
      %p54 = por %p52, %p53
      %s56 = sadd.s32 %s55, 1
      %p59 = scmp.eq.s32.totalorder %s21, 1
      %p60 = scmp.ne.s32.totalorder %s55, %s57
      %p61 = scmp.eq.s32.totalorder %s21, 0
      %p62 = por %p60, %p61
      %p63 = scmp.ne.s32.totalorder %s55, %s57
      %p64 = scmp.eq.s32.totalorder %s26, 1
      %p65 = por %p63, %p64
      %p66 = scmp.ne.s32.totalorder %s57, %s58
      %p67 = scmp.eq.s32.totalorder %s26, 0
      %p68 = por %p66, %p67
      %p69 = scmp.ne.s32.totalorder %s57, %s58
      %p70 = scmp.eq.s32.totalorder %s27, 1
      %p71 = por %p69, %p70
      %p73 = scmp.ne.s32.totalorder %s58, %s72
      %p74 = scmp.eq.s32.totalorder %s27, 0
      %p75 = por %p73, %p74
      %s77 = sadd.s32 %s76, 1
      %p80 = scmp.eq.s32.totalorder %s21, 1
      %p81 = scmp.ne.s32.totalorder %s76, %s78
      %p82 = scmp.eq.s32.totalorder %s21, 0
      %p83 = por %p81, %p82
      %p84 = scmp.ne.s32.totalorder %s76, %s78
      %p85 = scmp.eq.s32.totalorder %s26, 1
      %p86 = por %p84, %p85
      %p87 = scmp.ne.s32.totalorder %s78, %s79
      %p88 = scmp.eq.s32.totalorder %s26, 0
      %p89 = por %p87, %p88
      %p90 = scmp.ne.s32.totalorder %s78, %s79
      %p91 = scmp.eq.s32.totalorder %s27, 1
      %p92 = por %p90, %p91
      %p94 = scmp.ne.s32.totalorder %s79, %s93
      %p95 = scmp.eq.s32.totalorder %s27, 0
      %p96 = por %p94, %p95
      %s98 = sadd.s32 %s97, 1
      %p101 = scmp.eq.s32.totalorder %s21, 1
      %p102 = scmp.ne.s32.totalorder %s97, %s99
      %p103 = scmp.eq.s32.totalorder %s21, 0
      %p104 = por %p102, %p103
      %p105 = scmp.ne.s32.totalorder %s97, %s99
      %p106 = scmp.eq.s32.totalorder %s26, 1
      %p107 = por %p105, %p106
      %p108 = scmp.ne.s32.totalorder %s99, %s100
      %p109 = scmp.eq.s32.totalorder %s26, 0
      %p110 = por %p108, %p109
      %p111 = scmp.ne.s32.totalorder %s99, %s100
      %p112 = scmp.eq.s32.totalorder %s27, 1
      %p113 = por %p111, %p112
      %p115 = scmp.ne.s32.totalorder %s100, %s114
      %p116 = scmp.eq.s32.totalorder %s27, 0
      %p117 = por %p115, %p116
      %s119 = sadd.s32 %s118, 1
      %p122 = scmp.eq.s32.totalorder %s21, 1
      %p123 = scmp.ne.s32.totalorder %s118, %s120
      %p124 = scmp.eq.s32.totalorder %s21, 0
      %p125 = por %p123, %p124
      %p126 = scmp.ne.s32.totalorder %s118, %s120
      %p127 = scmp.eq.s32.totalorder %s26, 1
      %p128 = por %p126, %p127
      %p129 = scmp.ne.s32.totalorder %s120, %s121
      %p130 = scmp.eq.s32.totalorder %s26, 0
      %p131 = por %p129, %p130
      %p132 = scmp.ne.s32.totalorder %s120, %s121
      %p133 = scmp.eq.s32.totalorder %s27, 1
      %p134 = por %p132, %p133
      %p136 = scmp.ne.s32.totalorder %s121, %s135
      %p137 = scmp.eq.s32.totalorder %s27, 0
      %p138 = por %p136, %p137
      %s140 = sadd.s32 %s139, 1
      %p143 = scmp.eq.s32.totalorder %s21, 1
      %p144 = scmp.ne.s32.totalorder %s139, %s141
      %p145 = scmp.eq.s32.totalorder %s21, 0
      %p146 = por %p144, %p145
      %p147 = scmp.ne.s32.totalorder %s139, %s141
      %p148 = scmp.eq.s32.totalorder %s26, 1
      %p149 = por %p147, %p148
      %p150 = scmp.ne.s32.totalorder %s141, %s142
      %p151 = scmp.eq.s32.totalorder %s26, 0
      %p152 = por %p150, %p151
      %p153 = scmp.ne.s32.totalorder %s141, %s142
      %p154 = scmp.eq.s32.totalorder %s27, 1
      %p155 = por %p153, %p154
      %p157 = scmp.ne.s32.totalorder %s142, %s156
      %p158 = scmp.eq.s32.totalorder %s27, 0
      %p159 = por %p157, %p158
      %s161 = sadd.s32 %s160, 1
      %p164 = scmp.eq.s32.totalorder %s21, 1
      %p165 = scmp.ne.s32.totalorder %s160, %s162
      %p166 = scmp.eq.s32.totalorder %s21, 0
      %p167 = por %p165, %p166
      %p168 = scmp.ne.s32.totalorder %s160, %s162
      %p169 = scmp.eq.s32.totalorder %s26, 1
      %p170 = por %p168, %p169
      %p171 = scmp.ne.s32.totalorder %s162, %s163
      %p172 = scmp.eq.s32.totalorder %s26, 0
      %p173 = por %p171, %p172
      %p174 = scmp.ne.s32.totalorder %s162, %s163
      %p175 = scmp.eq.s32.totalorder %s27, 1
      %p176 = por %p174, %p175
      %p178 = scmp.ne.s32.totalorder %s163, %s177
      %p179 = scmp.eq.s32.totalorder %s27, 0
      %p180 = por %p178, %p179
      %s182 = sadd.s32 %s181, 1
      %p185 = scmp.eq.s32.totalorder %s21, 1
      %p186 = scmp.ne.s32.totalorder %s181, %s183
      %p187 = scmp.eq.s32.totalorder %s21, 0
      %p188 = por %p186, %p187
      %p189 = scmp.ne.s32.totalorder %s181, %s183
      %p190 = scmp.eq.s32.totalorder %s26, 1
      %p191 = por %p189, %p190
      %p192 = scmp.ne.s32.totalorder %s183, %s184
      %p193 = scmp.eq.s32.totalorder %s26, 0
      %p194 = por %p192, %p193
      %p195 = scmp.ne.s32.totalorder %s183, %s184
      %p196 = scmp.eq.s32.totalorder %s27, 1
      %p197 = por %p195, %p196
      %p199 = scmp.ne.s32.totalorder %s184, %s198
      %p200 = scmp.eq.s32.totalorder %s27, 0
      %p201 = por %p199, %p200
      %s203 = sadd.s32 %s202, 1
      %p206 = scmp.eq.s32.totalorder %s21, 1
      %p207 = scmp.ne.s32.totalorder %s202, %s204
      %p208 = scmp.eq.s32.totalorder %s21, 0
      %p209 = por %p207, %p208
      %p210 = scmp.ne.s32.totalorder %s202, %s204
      %p211 = scmp.eq.s32.totalorder %s26, 1
      %p212 = por %p210, %p211
      %p213 = scmp.ne.s32.totalorder %s204, %s205
      %p214 = scmp.eq.s32.totalorder %s26, 0
      %p215 = por %p213, %p214
      %p216 = scmp.ne.s32.totalorder %s204, %s205
      %p217 = scmp.eq.s32.totalorder %s27, 1
      %p218 = por %p216, %p217
      %p220 = scmp.ne.s32.totalorder %s205, %s219
      %p221 = scmp.eq.s32.totalorder %s27, 0
      %p222 = por %p220, %p221
      %s224 = sadd.s32 %s223, 1
      %p227 = scmp.eq.s32.totalorder %s21, 1
      %p228 = scmp.ne.s32.totalorder %s223, %s225
      %p229 = scmp.eq.s32.totalorder %s21, 0
      %p230 = por %p228, %p229
      %p231 = scmp.ne.s32.totalorder %s223, %s225
      %p232 = scmp.eq.s32.totalorder %s26, 1
      %p233 = por %p231, %p232
      %p234 = scmp.ne.s32.totalorder %s225, %s226
      %p235 = scmp.eq.s32.totalorder %s26, 0
      %p236 = por %p234, %p235
      %p237 = scmp.ne.s32.totalorder %s225, %s226
      %p238 = scmp.eq.s32.totalorder %s27, 1
      %p239 = por %p237, %p238
      %p241 = scmp.ne.s32.totalorder %s226, %s240
      %p242 = scmp.eq.s32.totalorder %s27, 0
      %p243 = por %p241, %p242
      %s245 = sadd.s32 %s244, 1
      %p248 = scmp.eq.s32.totalorder %s21, 1
      %p249 = scmp.ne.s32.totalorder %s244, %s246
      %p250 = scmp.eq.s32.totalorder %s21, 0
      %p251 = por %p249, %p250
      %p252 = scmp.ne.s32.totalorder %s244, %s246
      %p253 = scmp.eq.s32.totalorder %s26, 1
      %p254 = por %p252, %p253
      %p255 = scmp.ne.s32.totalorder %s246, %s247
      %p256 = scmp.eq.s32.totalorder %s26, 0
      %p257 = por %p255, %p256
      %p258 = scmp.ne.s32.totalorder %s246, %s247
      %p259 = scmp.eq.s32.totalorder %s27, 1
      %p260 = por %p258, %p259
      %p262 = scmp.ne.s32.totalorder %s247, %s261
      %p263 = scmp.eq.s32.totalorder %s27, 0
      %p264 = por %p262, %p263
      %s266 = sadd.s32 %s265, 1
      %p269 = scmp.eq.s32.totalorder %s21, 1
      %p270 = scmp.ne.s32.totalorder %s265, %s267
      %p271 = scmp.eq.s32.totalorder %s21, 0
      %p272 = por %p270, %p271
      %p273 = scmp.ne.s32.totalorder %s265, %s267
      %p274 = scmp.eq.s32.totalorder %s26, 1
      %p275 = por %p273, %p274
      %p276 = scmp.ne.s32.totalorder %s267, %s268
      %p277 = scmp.eq.s32.totalorder %s26, 0
      %p278 = por %p276, %p277
      %p279 = scmp.ne.s32.totalorder %s267, %s268
      %p280 = scmp.eq.s32.totalorder %s27, 1
      %p281 = por %p279, %p280
      %p283 = scmp.ne.s32.totalorder %s268, %s282
      %p284 = scmp.eq.s32.totalorder %s27, 0
      %p285 = por %p283, %p284
      %s286 = ssub.s32 %s21, %s28
      %p287 = scmp.eq.s32.totalorder %s286, 0
      %s289 = sadd.s32 %s288, 1
      %s290 = scalar_select %p287, %s288, %s289
      %p293 = pneg %p287
      %p294 = scmp.eq.s32.totalorder %s21, 1
      %p295 = por %p293, %p294
      %p296 = scmp.ne.s32.totalorder %s288, %s291
      %p297 = scmp.eq.s32.totalorder %s21, 0
      %p298 = por %p296, %p297
      %p299 = scmp.ne.s32.totalorder %s288, %s291
      %p300 = scmp.eq.s32.totalorder %s26, 1
      %p301 = por %p299, %p300
      %p302 = scmp.ne.s32.totalorder %s291, %s292
      %p303 = scmp.eq.s32.totalorder %s26, 0
      %p304 = por %p302, %p303
      %p305 = scmp.ne.s32.totalorder %s291, %s292
      %p306 = scmp.eq.s32.totalorder %s27, 1
      %p307 = por %p305, %p306
      %p309 = scmp.ne.s32.totalorder %s292, %s308
      %p310 = scmp.eq.s32.totalorder %s27, 0
      %p311 = por %p309, %p310
      %p312 = scmp.le.s32.totalorder 1, %s21
      %p313 = scmp.lt.s32.totalorder %s21, 3
      %p314 = pnand %p312, %p313
      %p315 = pneg %p314
      // Predicated region
      $region9: #{lenet_forward.1} parent=5 // pred_check
        _
      $region10: #{lenet_forward.1} parent=5 // pred_check_branch
        %317 = sbr.rel (%p314) target = $region12
      $region11: #{lenet_forward.1} parent=5 // pred_region
        %s318 = ssub.s32 %s21, 1
        // Predicated region
        $region13: #{lenet_forward.1} parent=11 // pred_check
          %p319 = pneg %p68
        $region14: #{lenet_forward.1} parent=11 // pred_check_branch
          %321 = sbr.rel (%p319) target = $region16
        $region15: #{lenet_forward.1} parent=11 // pred_region
          _
        $region16: #{lenet_forward.1} parent=11 // pred_fallthru
          _
        // Predicated region
        $region17: #{lenet_forward.1} parent=11 // pred_check
          %p322 = pneg %p89
        $region18: #{lenet_forward.1} parent=11 // pred_check_branch
          %324 = sbr.rel (%p322) target = $region20
        $region19: #{lenet_forward.1} parent=11 // pred_region
          _
        $region20: #{lenet_forward.1} parent=11 // pred_fallthru
          _
        // Predicated region
        $region21: #{lenet_forward.1} parent=11 // pred_check
          %p325 = pneg %p110
        $region22: #{lenet_forward.1} parent=11 // pred_check_branch
          %327 = sbr.rel (%p325) target = $region24
        $region23: #{lenet_forward.1} parent=11 // pred_region
          _
        $region24: #{lenet_forward.1} parent=11 // pred_fallthru
          _
        // Predicated region
        $region25: #{lenet_forward.1} parent=11 // pred_check
          %p328 = pneg %p131
        $region26: #{lenet_forward.1} parent=11 // pred_check_branch
          %330 = sbr.rel (%p328) target = $region28
        $region27: #{lenet_forward.1} parent=11 // pred_region
          _
        $region28: #{lenet_forward.1} parent=11 // pred_fallthru
          _
        // Predicated region
        $region29: #{lenet_forward.1} parent=11 // pred_check
          %p331 = pneg %p152
        $region30: #{lenet_forward.1} parent=11 // pred_check_branch
          %333 = sbr.rel (%p331) target = $region32
        $region31: #{lenet_forward.1} parent=11 // pred_region
          _
        $region32: #{lenet_forward.1} parent=11 // pred_fallthru
          _
        // Predicated region
        $region33: #{lenet_forward.1} parent=11 // pred_check
          %p334 = pneg %p173
        $region34: #{lenet_forward.1} parent=11 // pred_check_branch
          %336 = sbr.rel (%p334) target = $region36
        $region35: #{lenet_forward.1} parent=11 // pred_region
          _
        $region36: #{lenet_forward.1} parent=11 // pred_fallthru
          _
        // Predicated region
        $region37: #{lenet_forward.1} parent=11 // pred_check
          %p337 = pneg %p194
        $region38: #{lenet_forward.1} parent=11 // pred_check_branch
          %339 = sbr.rel (%p337) target = $region40
        $region39: #{lenet_forward.1} parent=11 // pred_region
          _
        $region40: #{lenet_forward.1} parent=11 // pred_fallthru
          _
        // Predicated region
        $region41: #{lenet_forward.1} parent=11 // pred_check
          %p340 = pneg %p215
        $region42: #{lenet_forward.1} parent=11 // pred_check_branch
          %342 = sbr.rel (%p340) target = $region44
        $region43: #{lenet_forward.1} parent=11 // pred_region
          _
        $region44: #{lenet_forward.1} parent=11 // pred_fallthru
          _
        // Predicated region
        $region45: #{lenet_forward.1} parent=11 // pred_check
          %p343 = pneg %p236
        $region46: #{lenet_forward.1} parent=11 // pred_check_branch
          %345 = sbr.rel (%p343) target = $region48
        $region47: #{lenet_forward.1} parent=11 // pred_region
          _
        $region48: #{lenet_forward.1} parent=11 // pred_fallthru
          _
        // Predicated region
        $region49: #{lenet_forward.1} parent=11 // pred_check
          %p346 = pneg %p257
        $region50: #{lenet_forward.1} parent=11 // pred_check_branch
          %348 = sbr.rel (%p346) target = $region52
        $region51: #{lenet_forward.1} parent=11 // pred_region
          _
        $region52: #{lenet_forward.1} parent=11 // pred_fallthru
          _
        // Predicated region
        $region53: #{lenet_forward.1} parent=11 // pred_check
          %p349 = pneg %p278
        $region54: #{lenet_forward.1} parent=11 // pred_check_branch
          %351 = sbr.rel (%p349) target = $region56
        $region55: #{lenet_forward.1} parent=11 // pred_region
          _
        $region56: #{lenet_forward.1} parent=11 // pred_fallthru
          _
      $region12: #{lenet_forward.1} parent=5 // pred_fallthru
        _
      %p352 = scmp.lt.s32.totalorder %s21, 2
      // Predicated region
      $region57: #{lenet_forward.1} parent=5 // pred_check
        %p353 = pneg %p352
      $region58: #{lenet_forward.1} parent=5 // pred_check_branch
        %355 = sbr.rel (%p353) target = $region60
      $region59: #{lenet_forward.1} parent=5 // pred_region
        // Predicated region
        $region61: #{lenet_forward.1} parent=59 // pred_check
          %p356 = pneg %p41
        $region62: #{lenet_forward.1} parent=59 // pred_check_branch
          %358 = sbr.rel (%p356) target = $region64
        $region63: #{lenet_forward.1} parent=59 // pred_region
          %p359 = scmp.lt.s32.totalorder %s21, 1
          %s360 = scalar_select %p359, %s21, 1
          %s361 = smul.addr %s360, 8
          %s362 = smul.addr %s361, 4
          %s363 = scalar_lea.vmem %s0, %s362
        $region64: #{lenet_forward.1} parent=59 // pred_fallthru
          _
      $region60: #{lenet_forward.1} parent=5 // pred_fallthru
        _
      %p364 = scmp.le.s32.totalorder 1, %s21
      %p365 = scmp.lt.s32.totalorder %s21, 3
      %p366 = pnand %p364, %p365
      %p367 = pneg %p366
      // Predicated region
      $region65: #{lenet_forward.1} parent=5 // pred_check
        _
      $region66: #{lenet_forward.1} parent=5 // pred_check_branch
        %369 = sbr.rel (%p366) target = $region68
      $region67: #{lenet_forward.1} parent=5 // pred_region
        %s370 = ssub.s32 %s21, 1
        %p371 = scmp.lt.s32.totalorder %s26, 1
        %s372 = scalar_select %p371, %s26, 1
        %s373 = smul.addr %s372, 8
        %s374 = smul.addr %s373, 4
        %s375 = scalar_lea.vmem %s0, %s374
        %p376 = pneg %p47
        %p377 = pneg %p44
        %p378 = pneg %p68
        %p379 = pneg %p65
        %p380 = pneg %p89
        %p381 = pneg %p86
        %p382 = pneg %p110
        %p383 = pneg %p107
        %p384 = pneg %p131
        %p385 = pneg %p128
        %p386 = pneg %p152
        %p387 = pneg %p149
        %p388 = pneg %p173
        %p389 = pneg %p170
        %p390 = pneg %p194
        %p391 = pneg %p191
        %p392 = pneg %p215
        %p393 = pneg %p212
        %p394 = pneg %p236
        %p395 = pneg %p233
        %p396 = pneg %p257
        %p397 = pneg %p254
        %p398 = pneg %p278
        %p399 = pneg %p275
        %p400 = pneg %p304
        %p401 = pneg %p301
        %s402 = sand.u32 %s291, 1
        %s403 = scalar_lea.sflag [#allocation3], %s402
        %s404 = sand.u32 %s291, 1
        %s405 = scalar_lea.vmem [#allocation2], %s404
        %p406 = scmp.lt.s32.totalorder %s26, 1
        %s407 = scalar_select %p406, %s26, 1
        %s408 = smul.addr %s407, 8
        %s409 = smul.addr %s408, 4
        %s410 = scalar_lea.vmem %s0, %s409
        %v411 = vld [vmem:[%s410] sm:$0x77]
        %v412 = vld [vmem:[%s410 + $0x8] sm:$0x77]
        %v413 = vld [vmem:[%s410 + $0x10] sm:$0x77]
        %v414 = vld [vmem:[%s410 + $0x18] sm:$0x77]
        %v419 = vcombine.high %v411, %v411
        %v420 = vcombine.high %v412, %v412
        %v421 = vcombine.high %v413, %v413
        %v425 = vrot.slane %v411, 5
        %v426 = vrot.slane %v419, 5
        %v427 = vrot.slane %v412, 5
        %v428 = vrot.slane %v420, 5
        %v429 = vrot.slane %v413, 5
        %v430 = vrot.slane %v421, 5
        %v431 = vrot.slane %v414, 5
        %432 = vrot.lane.b32.xlu0 %v425, 127
        %v433 = vpop.permute.xlu0 %432
        %434 = vrot.lane.b32.xlu0 %v426, 127
        %v435 = vpop.permute.xlu0 %434
        %436 = vrot.lane.b32.xlu0 %v427, 127
        %v437 = vpop.permute.xlu0 %436
        %438 = vrot.lane.b32.xlu0 %v428, 127
        %v439 = vpop.permute.xlu0 %438
        %440 = vrot.lane.b32.xlu0 %v429, 127
        %v441 = vpop.permute.xlu0 %440
        %442 = vrot.lane.b32.xlu0 %v430, 127
        %v443 = vpop.permute.xlu0 %442
        %444 = vrot.lane.b32.xlu0 %v431, 127
        %v445 = vpop.permute.xlu0 %444
        %vm446 = vcmask 1039360
        %v447 = vsel %vm446, %v433, %v435
        %v448 = vsel %vm446, %v435, %v437
        %v449 = vsel %vm446, %v437, %v439
        %v450 = vsel %vm446, %v439, %v441
        %v451 = vsel %vm446, %v441, %v443
        %v452 = vsel %vm446, %v443, %v445
        %v460 = vrot.slane %v411, 2
        %v461 = vrot.slane %v419, 2
        %v462 = vrot.slane %v412, 2
        %v463 = vrot.slane %v420, 2
        %v464 = vrot.slane %v413, 2
        %v465 = vrot.slane %v421, 2
        %v466 = vrot.slane %v414, 2
        %467 = vrot.lane.b32.xlu0 %v460, 126
        %v468 = vpop.permute.xlu0 %467
        %469 = vrot.lane.b32.xlu0 %v461, 126
        %v470 = vpop.permute.xlu0 %469
        %471 = vrot.lane.b32.xlu0 %v462, 126
        %v472 = vpop.permute.xlu0 %471
        %473 = vrot.lane.b32.xlu0 %v463, 126
        %v474 = vpop.permute.xlu0 %473
        %475 = vrot.lane.b32.xlu0 %v464, 126
        %v476 = vpop.permute.xlu0 %475
        %477 = vrot.lane.b32.xlu0 %v465, 126
        %v478 = vpop.permute.xlu0 %477
        %479 = vrot.lane.b32.xlu0 %v466, 126
        %v480 = vpop.permute.xlu0 %479
        %vm481 = vcmask 1031168
        %v482 = vsel %vm481, %v468, %v470
        %v483 = vsel %vm481, %v470, %v472
        %v484 = vsel %vm481, %v472, %v474
        %v485 = vsel %vm481, %v474, %v476
        %v486 = vsel %vm481, %v476, %v478
        %v487 = vsel %vm481, %v478, %v480
        %v495 = vrot.slane %v411, 7
        %v496 = vrot.slane %v419, 7
        %v497 = vrot.slane %v412, 7
        %v498 = vrot.slane %v420, 7
        %v499 = vrot.slane %v413, 7
        %v500 = vrot.slane %v421, 7
        %v501 = vrot.slane %v414, 7
        %502 = vrot.lane.b32.xlu0 %v495, 125
        %v503 = vpop.permute.xlu0 %502
        %504 = vrot.lane.b32.xlu0 %v496, 125
        %v505 = vpop.permute.xlu0 %504
        %506 = vrot.lane.b32.xlu0 %v497, 125
        %v507 = vpop.permute.xlu0 %506
        %508 = vrot.lane.b32.xlu0 %v498, 125
        %v509 = vpop.permute.xlu0 %508
        %510 = vrot.lane.b32.xlu0 %v499, 125
        %v511 = vpop.permute.xlu0 %510
        %512 = vrot.lane.b32.xlu0 %v500, 125
        %v513 = vpop.permute.xlu0 %512
        %514 = vrot.lane.b32.xlu0 %v501, 125
        %v515 = vpop.permute.xlu0 %514
        %vm516 = vcmask 1022976
        %v517 = vsel %vm516, %v503, %v505
        %v518 = vsel %vm516, %v505, %v507
        %v519 = vsel %vm516, %v507, %v509
        %v520 = vsel %vm516, %v509, %v511
        %v521 = vsel %vm516, %v511, %v513
        %v522 = vsel %vm516, %v513, %v515
        %v530 = vcombine.low %v411, %v411
        %v531 = vcombine.low %v412, %v412
        %v532 = vcombine.low %v413, %v413
        %v533 = vcombine.low %v414, %v414
        %534 = vrot.lane.b32.xlu0 %v530, 124
        %v535 = vpop.permute.xlu0 %534
        %536 = vrot.lane.b32.xlu0 %v411, 124
        %v537 = vpop.permute.xlu0 %536
        %538 = vrot.lane.b32.xlu0 %v531, 124
        %v539 = vpop.permute.xlu0 %538
        %540 = vrot.lane.b32.xlu0 %v412, 124
        %v541 = vpop.permute.xlu0 %540
        %542 = vrot.lane.b32.xlu0 %v532, 124
        %v543 = vpop.permute.xlu0 %542
        %544 = vrot.lane.b32.xlu0 %v413, 124
        %v545 = vpop.permute.xlu0 %544
        %546 = vrot.lane.b32.xlu0 %v533, 124
        %v547 = vpop.permute.xlu0 %546
        %vm548 = vcmask 1014784
        %v549 = vsel %vm548, %v535, %v537
        %v550 = vsel %vm548, %v537, %v539
        %v551 = vsel %vm548, %v539, %v541
        %v552 = vsel %vm548, %v541, %v543
        %v553 = vsel %vm548, %v543, %v545
        %v554 = vsel %vm548, %v545, %v547
        %v562 = vcombine.high %v414, %v414
        %v563 = vrot.slane %v411, 1
        %v564 = vrot.slane %v419, 1
        %v565 = vrot.slane %v412, 1
        %v566 = vrot.slane %v420, 1
        %v567 = vrot.slane %v413, 1
        %v568 = vrot.slane %v421, 1
        %v569 = vrot.slane %v414, 1
        %v570 = vrot.slane %v562, 1
        %571 = vrot.lane.b32.xlu0 %v563, 96
        %v572 = vpop.permute.xlu0 %571
        %573 = vrot.lane.b32.xlu0 %v564, 96
        %v574 = vpop.permute.xlu0 %573
        %575 = vrot.lane.b32.xlu0 %v565, 96
        %v576 = vpop.permute.xlu0 %575
        %577 = vrot.lane.b32.xlu0 %v566, 96
        %v578 = vpop.permute.xlu0 %577
        %579 = vrot.lane.b32.xlu0 %v567, 96
        %v580 = vpop.permute.xlu0 %579
        %581 = vrot.lane.b32.xlu0 %v568, 96
        %v582 = vpop.permute.xlu0 %581
        %583 = vrot.lane.b32.xlu0 %v569, 96
        %v584 = vpop.permute.xlu0 %583
        %585 = vrot.lane.b32.xlu0 %v570, 96
        %v586 = vpop.permute.xlu0 %585
        %vm587 = vcmask 785408
        %v588 = vsel %vm587, %v572, %v574
        %v589 = vsel %vm587, %v574, %v576
        %v590 = vsel %vm587, %v576, %v578
        %v591 = vsel %vm587, %v578, %v580
        %v592 = vsel %vm587, %v580, %v582
        %v593 = vsel %vm587, %v582, %v584
        %v594 = vsel %vm587, %v584, %v586
        %v602 = vrot.slane %v411, 6
        %v603 = vrot.slane %v419, 6
        %v604 = vrot.slane %v412, 6
        %v605 = vrot.slane %v420, 6
        %v606 = vrot.slane %v413, 6
        %v607 = vrot.slane %v421, 6
        %v608 = vrot.slane %v414, 6
        %v609 = vrot.slane %v562, 6
        %610 = vrot.lane.b32.xlu0 %v602, 95
        %v611 = vpop.permute.xlu0 %610
        %612 = vrot.lane.b32.xlu0 %v603, 95
        %v613 = vpop.permute.xlu0 %612
        %614 = vrot.lane.b32.xlu0 %v604, 95
        %v615 = vpop.permute.xlu0 %614
        %616 = vrot.lane.b32.xlu0 %v605, 95
        %v617 = vpop.permute.xlu0 %616
        %618 = vrot.lane.b32.xlu0 %v606, 95
        %v619 = vpop.permute.xlu0 %618
        %620 = vrot.lane.b32.xlu0 %v607, 95
        %v621 = vpop.permute.xlu0 %620
        %622 = vrot.lane.b32.xlu0 %v608, 95
        %v623 = vpop.permute.xlu0 %622
        %624 = vrot.lane.b32.xlu0 %v609, 95
        %v625 = vpop.permute.xlu0 %624
        %vm626 = vcmask 777216
        %v627 = vsel %vm626, %v611, %v613
        %v628 = vsel %vm626, %v613, %v615
        %v629 = vsel %vm626, %v615, %v617
        %v630 = vsel %vm626, %v617, %v619
        %v631 = vsel %vm626, %v619, %v621
        %v632 = vsel %vm626, %v621, %v623
        %v633 = vsel %vm626, %v623, %v625
        %v641 = vrot.slane %v411, 3
        %v642 = vrot.slane %v419, 3
        %v643 = vrot.slane %v412, 3
        %v644 = vrot.slane %v420, 3
        %v645 = vrot.slane %v413, 3
        %v646 = vrot.slane %v421, 3
        %v647 = vrot.slane %v414, 3
        %v648 = vrot.slane %v562, 3
        %649 = vrot.lane.b32.xlu0 %v641, 94
        %v650 = vpop.permute.xlu0 %649
        %651 = vrot.lane.b32.xlu0 %v642, 94
        %v652 = vpop.permute.xlu0 %651
        %653 = vrot.lane.b32.xlu0 %v643, 94
        %v654 = vpop.permute.xlu0 %653
        %655 = vrot.lane.b32.xlu0 %v644, 94
        %v656 = vpop.permute.xlu0 %655
        %657 = vrot.lane.b32.xlu0 %v645, 94
        %v658 = vpop.permute.xlu0 %657
        %659 = vrot.lane.b32.xlu0 %v646, 94
        %v660 = vpop.permute.xlu0 %659
        %661 = vrot.lane.b32.xlu0 %v647, 94
        %v662 = vpop.permute.xlu0 %661
        %663 = vrot.lane.b32.xlu0 %v648, 94
        %v664 = vpop.permute.xlu0 %663
        %vm665 = vcmask 769024
        %v666 = vsel %vm665, %v650, %v652
        %v667 = vsel %vm665, %v652, %v654
        %v668 = vsel %vm665, %v654, %v656
        %v669 = vsel %vm665, %v656, %v658
        %v670 = vsel %vm665, %v658, %v660
        %v671 = vsel %vm665, %v660, %v662
        %v672 = vsel %vm665, %v662, %v664
        %680 = vrot.lane.b32.xlu0 %v411, 93
        %v681 = vpop.permute.xlu0 %680
        %682 = vrot.lane.b32.xlu0 %v419, 93
        %v683 = vpop.permute.xlu0 %682
        %684 = vrot.lane.b32.xlu0 %v412, 93
        %v685 = vpop.permute.xlu0 %684
        %686 = vrot.lane.b32.xlu0 %v420, 93
        %v687 = vpop.permute.xlu0 %686
        %688 = vrot.lane.b32.xlu0 %v413, 93
        %v689 = vpop.permute.xlu0 %688
        %690 = vrot.lane.b32.xlu0 %v421, 93
        %v691 = vpop.permute.xlu0 %690
        %692 = vrot.lane.b32.xlu0 %v414, 93
        %v693 = vpop.permute.xlu0 %692
        %694 = vrot.lane.b32.xlu0 %v562, 93
        %v695 = vpop.permute.xlu0 %694
        %vm696 = vcmask 760832
        %v697 = vsel %vm696, %v681, %v683
        %v698 = vsel %vm696, %v683, %v685
        %v699 = vsel %vm696, %v685, %v687
        %v700 = vsel %vm696, %v687, %v689
        %v701 = vsel %vm696, %v689, %v691
        %v702 = vsel %vm696, %v691, %v693
        %v703 = vsel %vm696, %v693, %v695
        %v711 = vrot.slane %v562, 5
        %712 = vrot.lane.b32.xlu0 %v425, 92
        %v713 = vpop.permute.xlu0 %712
        %714 = vrot.lane.b32.xlu0 %v426, 92
        %v715 = vpop.permute.xlu0 %714
        %716 = vrot.lane.b32.xlu0 %v427, 92
        %v717 = vpop.permute.xlu0 %716
        %718 = vrot.lane.b32.xlu0 %v428, 92
        %v719 = vpop.permute.xlu0 %718
        %720 = vrot.lane.b32.xlu0 %v429, 92
        %v721 = vpop.permute.xlu0 %720
        %722 = vrot.lane.b32.xlu0 %v430, 92
        %v723 = vpop.permute.xlu0 %722
        %724 = vrot.lane.b32.xlu0 %v431, 92
        %v725 = vpop.permute.xlu0 %724
        %726 = vrot.lane.b32.xlu0 %v711, 92
        %v727 = vpop.permute.xlu0 %726
        %vm728 = vcmask 752640
        %v729 = vsel %vm728, %v713, %v715
        %v730 = vsel %vm728, %v715, %v717
        %v731 = vsel %vm728, %v717, %v719
        %v732 = vsel %vm728, %v719, %v721
        %v733 = vsel %vm728, %v721, %v723
        %v734 = vsel %vm728, %v723, %v725
        %v735 = vsel %vm728, %v725, %v727
        %v743 = vrot.slane %v562, 2
        %744 = vrot.lane.b32.xlu0 %v460, 64
        %v745 = vpop.permute.xlu0 %744
        %746 = vrot.lane.b32.xlu0 %v461, 64
        %v747 = vpop.permute.xlu0 %746
        %748 = vrot.lane.b32.xlu0 %v462, 64
        %v749 = vpop.permute.xlu0 %748
        %750 = vrot.lane.b32.xlu0 %v463, 64
        %v751 = vpop.permute.xlu0 %750
        %752 = vrot.lane.b32.xlu0 %v464, 64
        %v753 = vpop.permute.xlu0 %752
        %754 = vrot.lane.b32.xlu0 %v465, 64
        %v755 = vpop.permute.xlu0 %754
        %756 = vrot.lane.b32.xlu0 %v466, 64
        %v757 = vpop.permute.xlu0 %756
        %758 = vrot.lane.b32.xlu0 %v743, 64
        %v759 = vpop.permute.xlu0 %758
        %vm760 = vcmask 523264
        %v761 = vsel %vm760, %v745, %v747
        %v762 = vsel %vm760, %v747, %v749
        %v763 = vsel %vm760, %v749, %v751
        %v764 = vsel %vm760, %v751, %v753
        %v765 = vsel %vm760, %v753, %v755
        %v766 = vsel %vm760, %v755, %v757
        %v767 = vsel %vm760, %v757, %v759
        %v775 = vrot.slane %v562, 7
        %776 = vrot.lane.b32.xlu0 %v495, 63
        %v777 = vpop.permute.xlu0 %776
        %778 = vrot.lane.b32.xlu0 %v496, 63
        %v779 = vpop.permute.xlu0 %778
        %780 = vrot.lane.b32.xlu0 %v497, 63
        %v781 = vpop.permute.xlu0 %780
        %782 = vrot.lane.b32.xlu0 %v498, 63
        %v783 = vpop.permute.xlu0 %782
        %784 = vrot.lane.b32.xlu0 %v499, 63
        %v785 = vpop.permute.xlu0 %784
        %786 = vrot.lane.b32.xlu0 %v500, 63
        %v787 = vpop.permute.xlu0 %786
        %788 = vrot.lane.b32.xlu0 %v501, 63
        %v789 = vpop.permute.xlu0 %788
        %790 = vrot.lane.b32.xlu0 %v775, 63
        %v791 = vpop.permute.xlu0 %790
        %vm792 = vcmask 515072
        %v793 = vsel %vm792, %v777, %v779
        %v794 = vsel %vm792, %v779, %v781
        %v795 = vsel %vm792, %v781, %v783
        %v796 = vsel %vm792, %v783, %v785
        %v797 = vsel %vm792, %v785, %v787
        %v798 = vsel %vm792, %v787, %v789
        %v799 = vsel %vm792, %v789, %v791
        %807 = vrot.lane.b32.xlu0 %v530, 62
        %v808 = vpop.permute.xlu0 %807
        %809 = vrot.lane.b32.xlu0 %v411, 62
        %v810 = vpop.permute.xlu0 %809
        %811 = vrot.lane.b32.xlu0 %v531, 62
        %v812 = vpop.permute.xlu0 %811
        %813 = vrot.lane.b32.xlu0 %v412, 62
        %v814 = vpop.permute.xlu0 %813
        %815 = vrot.lane.b32.xlu0 %v532, 62
        %v816 = vpop.permute.xlu0 %815
        %817 = vrot.lane.b32.xlu0 %v413, 62
        %v818 = vpop.permute.xlu0 %817
        %819 = vrot.lane.b32.xlu0 %v533, 62
        %v820 = vpop.permute.xlu0 %819
        %821 = vrot.lane.b32.xlu0 %v414, 62
        %v822 = vpop.permute.xlu0 %821
        %vm823 = vcmask 506880
        %v824 = vsel %vm823, %v808, %v810
        %v825 = vsel %vm823, %v810, %v812
        %v826 = vsel %vm823, %v812, %v814
        %v827 = vsel %vm823, %v814, %v816
        %v828 = vsel %vm823, %v816, %v818
        %v829 = vsel %vm823, %v818, %v820
        %v830 = vsel %vm823, %v820, %v822
        %838 = vrot.lane.b32.xlu0 %v563, 61
        %v839 = vpop.permute.xlu0 %838
        %840 = vrot.lane.b32.xlu0 %v564, 61
        %v841 = vpop.permute.xlu0 %840
        %842 = vrot.lane.b32.xlu0 %v565, 61
        %v843 = vpop.permute.xlu0 %842
        %844 = vrot.lane.b32.xlu0 %v566, 61
        %v845 = vpop.permute.xlu0 %844
        %846 = vrot.lane.b32.xlu0 %v567, 61
        %v847 = vpop.permute.xlu0 %846
        %848 = vrot.lane.b32.xlu0 %v568, 61
        %v849 = vpop.permute.xlu0 %848
        %850 = vrot.lane.b32.xlu0 %v569, 61
        %v851 = vpop.permute.xlu0 %850
        %852 = vrot.lane.b32.xlu0 %v570, 61
        %v853 = vpop.permute.xlu0 %852
        %vm854 = vcmask 498688
        %v855 = vsel %vm854, %v839, %v841
        %v856 = vsel %vm854, %v841, %v843
        %v857 = vsel %vm854, %v843, %v845
        %v858 = vsel %vm854, %v845, %v847
        %v859 = vsel %vm854, %v847, %v849
        %v860 = vsel %vm854, %v849, %v851
        %v861 = vsel %vm854, %v851, %v853
        %869 = vrot.lane.b32.xlu0 %v602, 60
        %v870 = vpop.permute.xlu0 %869
        %871 = vrot.lane.b32.xlu0 %v603, 60
        %v872 = vpop.permute.xlu0 %871
        %873 = vrot.lane.b32.xlu0 %v604, 60
        %v874 = vpop.permute.xlu0 %873
        %875 = vrot.lane.b32.xlu0 %v605, 60
        %v876 = vpop.permute.xlu0 %875
        %877 = vrot.lane.b32.xlu0 %v606, 60
        %v878 = vpop.permute.xlu0 %877
        %879 = vrot.lane.b32.xlu0 %v607, 60
        %v880 = vpop.permute.xlu0 %879
        %881 = vrot.lane.b32.xlu0 %v608, 60
        %v882 = vpop.permute.xlu0 %881
        %883 = vrot.lane.b32.xlu0 %v609, 60
        %v884 = vpop.permute.xlu0 %883
        %vm885 = vcmask 490496
        %v886 = vsel %vm885, %v870, %v872
        %v887 = vsel %vm885, %v872, %v874
        %v888 = vsel %vm885, %v874, %v876
        %v889 = vsel %vm885, %v876, %v878
        %v890 = vsel %vm885, %v878, %v880
        %v891 = vsel %vm885, %v880, %v882
        %v892 = vsel %vm885, %v882, %v884
        %900 = vrot.lane.b32.xlu0 %v641, 32
        %v901 = vpop.permute.xlu0 %900
        %902 = vrot.lane.b32.xlu0 %v642, 32
        %v903 = vpop.permute.xlu0 %902
        %904 = vrot.lane.b32.xlu0 %v643, 32
        %v905 = vpop.permute.xlu0 %904
        %906 = vrot.lane.b32.xlu0 %v644, 32
        %v907 = vpop.permute.xlu0 %906
        %908 = vrot.lane.b32.xlu0 %v645, 32
        %v909 = vpop.permute.xlu0 %908
        %910 = vrot.lane.b32.xlu0 %v646, 32
        %v911 = vpop.permute.xlu0 %910
        %912 = vrot.lane.b32.xlu0 %v647, 32
        %v913 = vpop.permute.xlu0 %912
        %914 = vrot.lane.b32.xlu0 %v648, 32
        %v915 = vpop.permute.xlu0 %914
        %vm916 = vcmask 261120
        %v917 = vsel %vm916, %v901, %v903
        %v918 = vsel %vm916, %v903, %v905
        %v919 = vsel %vm916, %v905, %v907
        %v920 = vsel %vm916, %v907, %v909
        %v921 = vsel %vm916, %v909, %v911
        %v922 = vsel %vm916, %v911, %v913
        %v923 = vsel %vm916, %v913, %v915
        %vm931 = vcmask 1042432
        %v932 = vsel %vm931, %v411, %v447
        %v933 = vsel %vm931, %v419, %v448
        %v934 = vsel %vm931, %v412, %v449
        %v935 = vsel %vm931, %v420, %v450
        %v936 = vsel %vm931, %v413, %v451
        %v937 = vsel %vm931, %v421, %v452
        %v938 = vsel %vm931, %v414, %v445
        %vm939 = vcmask 1045504
        %v940 = vsel %vm939, %v932, %v482
        %v941 = vsel %vm939, %v933, %v483
        %v942 = vsel %vm939, %v934, %v484
        %v943 = vsel %vm939, %v935, %v485
        %v944 = vsel %vm939, %v936, %v486
        %v945 = vsel %vm939, %v937, %v487
        %v946 = vsel %vm939, %v938, %v480
        %vm947 = vcmask 1040384
        %v948 = vsel %vm947, %v482, %v517
        %v949 = vsel %vm947, %v483, %v518
        %v950 = vsel %vm947, %v484, %v519
        %v951 = vsel %vm947, %v485, %v520
        %v952 = vsel %vm947, %v486, %v521
        %v953 = vsel %vm947, %v487, %v522
        %v954 = vsel %vm947, %v480, %v515
        %vm955 = vcmask 1043456
        %v956 = vsel %vm955, %v948, %v549
        %v957 = vsel %vm955, %v949, %v550
        %v958 = vsel %vm955, %v950, %v551
        %v959 = vsel %vm955, %v951, %v552
        %v960 = vsel %vm955, %v952, %v553
        %v961 = vsel %vm955, %v953, %v554
        %v962 = vsel %vm955, %v954, %v547
        %vm963 = vcmask 1046528
        %v964 = vsel %vm963, %v956, %v588
        %v965 = vsel %vm963, %v957, %v589
        %v966 = vsel %vm963, %v958, %v590
        %v967 = vsel %vm963, %v959, %v591
        %v968 = vsel %vm963, %v960, %v592
        %v969 = vsel %vm963, %v961, %v593
        %v970 = vsel %vm963, %v962, %v594
        %vm971 = vcmask 1041408
        %v972 = vsel %vm971, %v588, %v627
        %v973 = vsel %vm971, %v589, %v628
        %v974 = vsel %vm971, %v590, %v629
        %v975 = vsel %vm971, %v591, %v630
        %v976 = vsel %vm971, %v592, %v631
        %v977 = vsel %vm971, %v593, %v632
        %v978 = vsel %vm971, %v594, %v633
        %vm979 = vcmask 1044480
        %v980 = vsel %vm979, %v972, %v666
        %v981 = vsel %vm979, %v973, %v667
        %v982 = vsel %vm979, %v974, %v668
        %v983 = vsel %vm979, %v975, %v669
        %v984 = vsel %vm979, %v976, %v670
        %v985 = vsel %vm979, %v977, %v671
        %v986 = vsel %vm979, %v978, %v672
        %v987 = vsel %vm931, %v697, %v729
        %v988 = vsel %vm931, %v698, %v730
        %v989 = vsel %vm931, %v699, %v731
        %v990 = vsel %vm931, %v700, %v732
        %v991 = vsel %vm931, %v701, %v733
        %v992 = vsel %vm931, %v702, %v734
        %v993 = vsel %vm931, %v703, %v735
        %v994 = vsel %vm939, %v987, %v761
        %v995 = vsel %vm939, %v988, %v762
        %v996 = vsel %vm939, %v989, %v763
        %v997 = vsel %vm939, %v990, %v764
        %v998 = vsel %vm939, %v991, %v765
        %v999 = vsel %vm939, %v992, %v766
        %v1000 = vsel %vm939, %v993, %v767
        %v1001 = vsel %vm947, %v761, %v793
        %v1002 = vsel %vm947, %v762, %v794
        %v1003 = vsel %vm947, %v763, %v795
        %v1004 = vsel %vm947, %v764, %v796
        %v1005 = vsel %vm947, %v765, %v797
        %v1006 = vsel %vm947, %v766, %v798
        %v1007 = vsel %vm947, %v767, %v799
        %v1008 = vsel %vm955, %v1001, %v824
        %v1009 = vsel %vm955, %v1002, %v825
        %v1010 = vsel %vm955, %v1003, %v826
        %v1011 = vsel %vm955, %v1004, %v827
        %v1012 = vsel %vm955, %v1005, %v828
        %v1013 = vsel %vm955, %v1006, %v829
        %v1014 = vsel %vm955, %v1007, %v830
        %v1015 = vsel %vm963, %v1008, %v855
        %v1016 = vsel %vm963, %v1009, %v856
        %v1017 = vsel %vm963, %v1010, %v857
        %v1018 = vsel %vm963, %v1011, %v858
        %v1019 = vsel %vm963, %v1012, %v859
        %v1020 = vsel %vm963, %v1013, %v860
        %v1021 = vsel %vm963, %v1014, %v861
        %v1022 = vsel %vm971, %v855, %v886
        %v1023 = vsel %vm971, %v856, %v887
        %v1024 = vsel %vm971, %v857, %v888
        %v1025 = vsel %vm971, %v858, %v889
        %v1026 = vsel %vm971, %v859, %v890
        %v1027 = vsel %vm971, %v860, %v891
        %v1028 = vsel %vm971, %v861, %v892
        %v1029 = vsel %vm979, %v1022, %v917
        %v1030 = vsel %vm979, %v1023, %v918
        %v1031 = vsel %vm979, %v1024, %v919
        %v1032 = vsel %vm979, %v1025, %v920
        %v1033 = vsel %vm979, %v1026, %v921
        %v1034 = vsel %vm979, %v1027, %v922
        %v1035 = vsel %vm979, %v1028, %v923
        %1037 = vrot.lane.b32.xlu0 %v711, 127
        %v1038 = vpop.permute.xlu0 %1037
        %v1039 = vsel %vm446, %v445, %v1038
        %1042 = vrot.lane.b32.xlu0 %v743, 126
        %v1043 = vpop.permute.xlu0 %1042
        %v1044 = vsel %vm481, %v480, %v1043
        %1047 = vrot.lane.b32.xlu0 %v775, 125
        %v1048 = vpop.permute.xlu0 %1047
        %v1049 = vsel %vm516, %v515, %v1048
        %1052 = vrot.lane.b32.xlu0 %v411, 97
        %v1053 = vpop.permute.xlu0 %1052
        %1054 = vrot.lane.b32.xlu0 %v531, 97
        %v1055 = vpop.permute.xlu0 %1054
        %1056 = vrot.lane.b32.xlu0 %v412, 97
        %v1057 = vpop.permute.xlu0 %1056
        %1058 = vrot.lane.b32.xlu0 %v532, 97
        %v1059 = vpop.permute.xlu0 %1058
        %1060 = vrot.lane.b32.xlu0 %v413, 97
        %v1061 = vpop.permute.xlu0 %1060
        %1062 = vrot.lane.b32.xlu0 %v533, 97
        %v1063 = vpop.permute.xlu0 %1062
        %1064 = vrot.lane.b32.xlu0 %v414, 97
        %v1065 = vpop.permute.xlu0 %1064
        %vm1066 = vcmask 793600
        %v1067 = vsel %vm1066, %v1053, %v1055
        %v1068 = vsel %vm1066, %v1055, %v1057
        %v1069 = vsel %vm1066, %v1057, %v1059
        %v1070 = vsel %vm1066, %v1059, %v1061
        %v1071 = vsel %vm1066, %v1061, %v1063
        %v1072 = vsel %vm1066, %v1063, %v1065
        %v1087 = vsel %vm931, %v414, %v1039
        %v1088 = vsel %vm931, %v562, %v1038
        %v1089 = vsel %vm939, %v1087, %v1044
        %v1090 = vsel %vm939, %v1088, %v1043
        %v1091 = vsel %vm947, %v1044, %v1049
        %v1092 = vsel %vm947, %v1043, %v1048
        %v1093 = vsel %vm955, %v948, %v1053
        %v1094 = vsel %vm955, %v949, %v1067
        %v1095 = vsel %vm955, %v950, %v1068
        %v1096 = vsel %vm955, %v951, %v1069
        %v1097 = vsel %vm955, %v952, %v1070
        %v1098 = vsel %vm955, %v953, %v1071
        %v1099 = vsel %vm955, %v1091, %v1072
        %v1100 = vsel %vm955, %v1092, %v1065
        %v1101 = vsel %vm963, %v1093, %v574
        %v1102 = vsel %vm963, %v1094, %v589
        %v1103 = vsel %vm963, %v1095, %v590
        %v1104 = vsel %vm963, %v1096, %v591
        %v1105 = vsel %vm963, %v1097, %v592
        %v1106 = vsel %vm963, %v1098, %v593
        %v1107 = vsel %vm963, %v1099, %v594
        %v1108 = vsel %vm963, %v1100, %v586
        %v1109 = vsel %vm971, %v574, %v613
        %v1110 = vsel %vm971, %v586, %v625
        %v1111 = vsel %vm979, %v1109, %v652
        %v1112 = vsel %vm979, %v1110, %v664
        %1137 = vrot.lane.b32.xlu0 %v940, 31
        %v1138 = vpop.permute.xlu0 %1137
        %1139 = vrot.lane.b32.xlu0 %v941, 31
        %v1140 = vpop.permute.xlu0 %1139
        %1141 = vrot.lane.b32.xlu0 %v942, 31
        %v1142 = vpop.permute.xlu0 %1141
        %1143 = vrot.lane.b32.xlu0 %v943, 31
        %v1144 = vpop.permute.xlu0 %1143
        %1145 = vrot.lane.b32.xlu0 %v944, 31
        %v1146 = vpop.permute.xlu0 %1145
        %1147 = vrot.lane.b32.xlu0 %v945, 31
        %v1148 = vpop.permute.xlu0 %1147
        %1149 = vrot.lane.b32.xlu0 %v1089, 31
        %v1150 = vpop.permute.xlu0 %1149
        %1151 = vrot.lane.b32.xlu0 %v1090, 31
        %v1152 = vpop.permute.xlu0 %1151
        %1153 = vrot.lane.b32.xlu0 %v1101, 31
        %v1154 = vpop.permute.xlu0 %1153
        %1155 = vrot.lane.b32.xlu0 %v1102, 31
        %v1156 = vpop.permute.xlu0 %1155
        %1157 = vrot.lane.b32.xlu0 %v1103, 31
        %v1158 = vpop.permute.xlu0 %1157
        %1159 = vrot.lane.b32.xlu0 %v1104, 31
        %v1160 = vpop.permute.xlu0 %1159
        %1161 = vrot.lane.b32.xlu0 %v1105, 31
        %v1162 = vpop.permute.xlu0 %1161
        %1163 = vrot.lane.b32.xlu0 %v1106, 31
        %v1164 = vpop.permute.xlu0 %1163
        %1165 = vrot.lane.b32.xlu0 %v1107, 31
        %v1166 = vpop.permute.xlu0 %1165
        %1167 = vrot.lane.b32.xlu0 %v1108, 31
        %v1168 = vpop.permute.xlu0 %1167
        %1169 = vrot.lane.b32.xlu0 %v1111, 31
        %v1170 = vpop.permute.xlu0 %1169
        %1171 = vrot.lane.b32.xlu0 %v981, 31
        %v1172 = vpop.permute.xlu0 %1171
        %1173 = vrot.lane.b32.xlu0 %v982, 31
        %v1174 = vpop.permute.xlu0 %1173
        %1175 = vrot.lane.b32.xlu0 %v983, 31
        %v1176 = vpop.permute.xlu0 %1175
        %1177 = vrot.lane.b32.xlu0 %v984, 31
        %v1178 = vpop.permute.xlu0 %1177
        %1179 = vrot.lane.b32.xlu0 %v985, 31
        %v1180 = vpop.permute.xlu0 %1179
        %1181 = vrot.lane.b32.xlu0 %v986, 31
        %v1182 = vpop.permute.xlu0 %1181
        %1183 = vrot.lane.b32.xlu0 %v1112, 31
        %v1184 = vpop.permute.xlu0 %1183
        %1185 = vrot.lane.b32.xlu0 %v683, 31
        %v1186 = vpop.permute.xlu0 %1185
        %1187 = vrot.lane.b32.xlu0 %v698, 31
        %v1188 = vpop.permute.xlu0 %1187
        %1189 = vrot.lane.b32.xlu0 %v699, 31
        %v1190 = vpop.permute.xlu0 %1189
        %1191 = vrot.lane.b32.xlu0 %v700, 31
        %v1192 = vpop.permute.xlu0 %1191
        %1193 = vrot.lane.b32.xlu0 %v701, 31
        %v1194 = vpop.permute.xlu0 %1193
        %1195 = vrot.lane.b32.xlu0 %v702, 31
        %v1196 = vpop.permute.xlu0 %1195
        %1197 = vrot.lane.b32.xlu0 %v703, 31
        %v1198 = vpop.permute.xlu0 %1197
        %1199 = vrot.lane.b32.xlu0 %v695, 31
        %v1200 = vpop.permute.xlu0 %1199
        %vm1201 = vcmask 252928
        %v1202 = vsel %vm1201, %v1138, %v1140
        %v1203 = vsel %vm1201, %v1140, %v1142
        %v1204 = vsel %vm1201, %v1142, %v1144
        %v1205 = vsel %vm1201, %v1144, %v1146
        %v1206 = vsel %vm1201, %v1146, %v1148
        %v1207 = vsel %vm1201, %v1148, %v1150
        %v1208 = vsel %vm1201, %v1150, %v1152
        %v1209 = vsel %vm1201, %v1154, %v1156
        %v1210 = vsel %vm1201, %v1156, %v1158
        %v1211 = vsel %vm1201, %v1158, %v1160
        %v1212 = vsel %vm1201, %v1160, %v1162
        %v1213 = vsel %vm1201, %v1162, %v1164
        %v1214 = vsel %vm1201, %v1164, %v1166
        %v1215 = vsel %vm1201, %v1166, %v1168
        %v1216 = vsel %vm1201, %v1170, %v1172
        %v1217 = vsel %vm1201, %v1172, %v1174
        %v1218 = vsel %vm1201, %v1174, %v1176
        %v1219 = vsel %vm1201, %v1176, %v1178
        %v1220 = vsel %vm1201, %v1178, %v1180
        %v1221 = vsel %vm1201, %v1180, %v1182
        %v1222 = vsel %vm1201, %v1182, %v1184
        %v1223 = vsel %vm1201, %v1186, %v1188
        %v1224 = vsel %vm1201, %v1188, %v1190
        %v1225 = vsel %vm1201, %v1190, %v1192
        %v1226 = vsel %vm1201, %v1192, %v1194
        %v1227 = vsel %vm1201, %v1194, %v1196
        %v1228 = vsel %vm1201, %v1196, %v1198
        %v1229 = vsel %vm1201, %v1198, %v1200
        %v1251 = vld [vmem:[%s1] sm:$0x3f]
        %v1252 = vld [vmem:[%s2] sm:$0x3f]
        %1254 = vset.pattern.permute.xlu0 0
        %1255 = vperm.xlu0 %1254, %v1252
        %v1256 = vpop.permute.xlu0 %1255
        %vm1258 = vcmask 613376
        %v1260 = vsel %vm1258, %v1251, 0
        %v1262 = vsel %vm931, %v1223, 0
        %v1264 = vsel %vm931, %v1224, 0
        %v1266 = vsel %vm931, %v1225, 0
        %v1268 = vsel %vm931, %v1226, 0
        %v1270 = vsel %vm931, %v1227, 0
        %v1272 = vsel %vm931, %v1228, 0
        %v1274 = vsel %vm931, %v1229, 0
        %1276 = vmatprep.subr.mxu0 %v941
        %1277 = vmatpush1.msra.mxu0 %v940
        %1278 = vmatprep.subr.mxu0 %v965
        %1279 = vmatpush1.msra.mxu0 %v964
        %1280 = vmatprep.subr.mxu0 %v981
        %1281 = vmatpush1.msra.mxu0 %v980
        %1282 = vmatprep.subr.mxu0 %v995
        %1283 = vmatpush1.msra.mxu0 %v994
        %1284 = vmatprep.subr.mxu0 %v1016
        %1285 = vmatpush1.msra.mxu0 %v1015
        %1286 = vmatprep.subr.mxu0 %v1030
        %1287 = vmatpush1.msra.mxu0 %v1029
        %1288 = vmatprep.subr.mxu0 %v1203
        %1289 = vmatpush1.msra.mxu0 %v1202
        %1290 = vmatprep.subr.mxu0 %v1210
        %1291 = vmatpush1.msra.mxu0 %v1209
        %1292 = vmatprep.subr.mxu0 %v1217
        %1293 = vmatpush1.msra.mxu0 %v1216
        %1294 = vmatprep.subr.mxu0 %v1264
        %1295 = vmatpush1.msra.mxu0 %v1262
        %1296 = vmatprep.subr.mxu0 0.0
        %1297 = vmatpush1.msra.mxu0 0.0
        %1298 = vmatprep.subr.mxu0 0.0
        %1299 = vmatpush1.msra.mxu0 0.0
        %1300 = vmatprep.subr.mxu0 0.0
        %1301 = vmatpush1.msra.mxu0 0.0
        %1302 = vmatprep.subr.mxu0 0.0
        %1303 = vmatpush1.msra.mxu0 0.0
        %1304 = vmatprep.subr.mxu0 0.0
        %1305 = vmatpush1.msra.mxu0 0.0
        %1306 = vmatprep.subr.mxu0 0.0
        %1307 = vmatpush1.msra.mxu0 0.0
        %1308 = vmatprep.subr.mxu0 0.0
        %1309 = vmatpush1.msra.mxu0 0.0
        %1310 = vmatprep.subr.mxu0 0.0
        %1311 = vmatpush1.msra.mxu0 0.0
        %1312 = vmatprep.subr.mxu0 0.0
        %1313 = vmatpush1.msra.mxu0 0.0
        %1314 = vmatprep.subr.mxu0 0.0
        %1315 = vmatpush1.msra.mxu0 0.0
        %1316 = vmatprep.subr.mxu0 0.0
        %1317 = vmatpush1.msra.mxu0 0.0
        %1318 = vmatprep.subr.mxu0 0.0
        %1319 = vmatpush1.msra.mxu0 0.0
        %1320 = vmatprep.subr.mxu0 0.0
        %1321 = vmatpush1.msra.mxu0 0.0
        %1322 = vmatprep.subr.mxu0 0.0
        %1323 = vmatpush1.msra.mxu0 0.0
        %1324 = vmatprep.subr.mxu0 0.0
        %1325 = vmatpush1.msra.mxu0 0.0
        %1326 = vmatprep.subr.mxu0 0.0
        %1327 = vmatpush1.msra.mxu0 0.0
        %1328 = vmatprep.subr.mxu0 0.0
        %1329 = vmatpush1.msra.mxu0 0.0
        %1330 = vmatprep.subr.mxu0 0.0
        %1331 = vmatpush1.msra.mxu0 0.0
        %1332 = vmatprep.subr.mxu0 0.0
        %1333 = vmatpush1.msra.mxu0 0.0
        %1334 = vmatprep.subr.mxu0 0.0
        %1335 = vmatpush1.msra.mxu0 0.0
        %1336 = vmatprep.subr.mxu0 0.0
        %1337 = vmatpush1.msra.mxu0 0.0
        %1338 = vmatprep.subr.mxu0 0.0
        %1339 = vmatpush1.msra.mxu0 0.0
        %1340 = vmatprep.mubr.f32.mxu0 0.0
        %1341 = vmatmul.mubr.f32.gmra.mrb[0].mxu0 %v1260
        %v1342 = vpop.f32.mrb[0].mxu0
        %v1343 = vadd.f32 %v1256, %v1342
        %v1344 = vpop.f32.mrb[0].mxu0
        %v1345 = vadd.f32 %v1256, %v1344
        %1346 = vdwg.mxu0
        %1347 = vmatprep.subr.mxu0 %v943
        %1348 = vmatpush1.msra.mxu0 %v942
        %1349 = vmatprep.subr.mxu0 %v967
        %1350 = vmatpush1.msra.mxu0 %v966
        %1351 = vmatprep.subr.mxu0 %v983
        %1352 = vmatpush1.msra.mxu0 %v982
        %1353 = vmatprep.subr.mxu0 %v997
        %1354 = vmatpush1.msra.mxu0 %v996
        %1355 = vmatprep.subr.mxu0 %v1018
        %1356 = vmatpush1.msra.mxu0 %v1017
        %1357 = vmatprep.subr.mxu0 %v1032
        %1358 = vmatpush1.msra.mxu0 %v1031
        %1359 = vmatprep.subr.mxu0 %v1205
        %1360 = vmatpush1.msra.mxu0 %v1204
        %1361 = vmatprep.subr.mxu0 %v1212
        %1362 = vmatpush1.msra.mxu0 %v1211
        %1363 = vmatprep.subr.mxu0 %v1219
        %1364 = vmatpush1.msra.mxu0 %v1218
        %1365 = vmatprep.subr.mxu0 %v1268
        %1366 = vmatpush1.msra.mxu0 %v1266
        %1367 = vmatprep.subr.mxu0 0.0
        %1368 = vmatpush1.msra.mxu0 0.0
        %1369 = vmatprep.subr.mxu0 0.0
        %1370 = vmatpush1.msra.mxu0 0.0
        %1371 = vmatprep.subr.mxu0 0.0
        %1372 = vmatpush1.msra.mxu0 0.0
        %1373 = vmatprep.subr.mxu0 0.0
        %1374 = vmatpush1.msra.mxu0 0.0
        %1375 = vmatprep.subr.mxu0 0.0
        %1376 = vmatpush1.msra.mxu0 0.0
        %1377 = vmatprep.subr.mxu0 0.0
        %1378 = vmatpush1.msra.mxu0 0.0
        %1379 = vmatprep.subr.mxu0 0.0
        %1380 = vmatpush1.msra.mxu0 0.0
        %1381 = vmatprep.subr.mxu0 0.0
        %1382 = vmatpush1.msra.mxu0 0.0
        %1383 = vmatprep.subr.mxu0 0.0
        %1384 = vmatpush1.msra.mxu0 0.0
        %1385 = vmatprep.subr.mxu0 0.0
        %1386 = vmatpush1.msra.mxu0 0.0
        %1387 = vmatprep.subr.mxu0 0.0
        %1388 = vmatpush1.msra.mxu0 0.0
        %1389 = vmatprep.subr.mxu0 0.0
        %1390 = vmatpush1.msra.mxu0 0.0
        %1391 = vmatprep.subr.mxu0 0.0
        %1392 = vmatpush1.msra.mxu0 0.0
        %1393 = vmatprep.subr.mxu0 0.0
        %1394 = vmatpush1.msra.mxu0 0.0
        %1395 = vmatprep.subr.mxu0 0.0
        %1396 = vmatpush1.msra.mxu0 0.0
        %1397 = vmatprep.subr.mxu0 0.0
        %1398 = vmatpush1.msra.mxu0 0.0
        %1399 = vmatprep.subr.mxu0 0.0
        %1400 = vmatpush1.msra.mxu0 0.0
        %1401 = vmatprep.subr.mxu0 0.0
        %1402 = vmatpush1.msra.mxu0 0.0
        %1403 = vmatprep.subr.mxu0 0.0
        %1404 = vmatpush1.msra.mxu0 0.0
        %1405 = vmatprep.subr.mxu0 0.0
        %1406 = vmatpush1.msra.mxu0 0.0
        %1407 = vmatprep.subr.mxu0 0.0
        %1408 = vmatpush1.msra.mxu0 0.0
        %1409 = vmatprep.subr.mxu0 0.0
        %1410 = vmatpush1.msra.mxu0 0.0
        %1411 = vmatprep.mubr.f32.mxu0 0.0
        %1412 = vmatmul.mubr.f32.gmra.mrb[0].mxu0 %v1260
        %v1413 = vpop.f32.mrb[0].mxu0
        %v1414 = vadd.f32 %v1256, %v1413
        %v1415 = vpop.f32.mrb[0].mxu0
        %v1416 = vadd.f32 %v1256, %v1415
        %1417 = vdwg.mxu0
        %1418 = vmatprep.subr.mxu0 %v945
        %1419 = vmatpush1.msra.mxu0 %v944
        %1420 = vmatprep.subr.mxu0 %v969
        %1421 = vmatpush1.msra.mxu0 %v968
        %1422 = vmatprep.subr.mxu0 %v985
        %1423 = vmatpush1.msra.mxu0 %v984
        %1424 = vmatprep.subr.mxu0 %v999
        %1425 = vmatpush1.msra.mxu0 %v998
        %1426 = vmatprep.subr.mxu0 %v1020
        %1427 = vmatpush1.msra.mxu0 %v1019
        %1428 = vmatprep.subr.mxu0 %v1034
        %1429 = vmatpush1.msra.mxu0 %v1033
        %1430 = vmatprep.subr.mxu0 %v1207
        %1431 = vmatpush1.msra.mxu0 %v1206
        %1432 = vmatprep.subr.mxu0 %v1214
        %1433 = vmatpush1.msra.mxu0 %v1213
        %1434 = vmatprep.subr.mxu0 %v1221
        %1435 = vmatpush1.msra.mxu0 %v1220
        %1436 = vmatprep.subr.mxu0 %v1272
        %1437 = vmatpush1.msra.mxu0 %v1270
        %1438 = vmatprep.subr.mxu0 0.0
        %1439 = vmatpush1.msra.mxu0 0.0
        %1440 = vmatprep.subr.mxu0 0.0
        %1441 = vmatpush1.msra.mxu0 0.0
        %1442 = vmatprep.subr.mxu0 0.0
        %1443 = vmatpush1.msra.mxu0 0.0
        %1444 = vmatprep.subr.mxu0 0.0
        %1445 = vmatpush1.msra.mxu0 0.0
        %1446 = vmatprep.subr.mxu0 0.0
        %1447 = vmatpush1.msra.mxu0 0.0
        %1448 = vmatprep.subr.mxu0 0.0
        %1449 = vmatpush1.msra.mxu0 0.0
        %1450 = vmatprep.subr.mxu0 0.0
        %1451 = vmatpush1.msra.mxu0 0.0
        %1452 = vmatprep.subr.mxu0 0.0
        %1453 = vmatpush1.msra.mxu0 0.0
        %1454 = vmatprep.subr.mxu0 0.0
        %1455 = vmatpush1.msra.mxu0 0.0
        %1456 = vmatprep.subr.mxu0 0.0
        %1457 = vmatpush1.msra.mxu0 0.0
        %1458 = vmatprep.subr.mxu0 0.0
        %1459 = vmatpush1.msra.mxu0 0.0
        %1460 = vmatprep.subr.mxu0 0.0
        %1461 = vmatpush1.msra.mxu0 0.0
        %1462 = vmatprep.subr.mxu0 0.0
        %1463 = vmatpush1.msra.mxu0 0.0
        %1464 = vmatprep.subr.mxu0 0.0
        %1465 = vmatpush1.msra.mxu0 0.0
        %1466 = vmatprep.subr.mxu0 0.0
        %1467 = vmatpush1.msra.mxu0 0.0
        %1468 = vmatprep.subr.mxu0 0.0
        %1469 = vmatpush1.msra.mxu0 0.0
        %1470 = vmatprep.subr.mxu0 0.0
        %1471 = vmatpush1.msra.mxu0 0.0
        %1472 = vmatprep.subr.mxu0 0.0
        %1473 = vmatpush1.msra.mxu0 0.0
        %1474 = vmatprep.subr.mxu0 0.0
        %1475 = vmatpush1.msra.mxu0 0.0
        %1476 = vmatprep.subr.mxu0 0.0
        %1477 = vmatpush1.msra.mxu0 0.0
        %1478 = vmatprep.subr.mxu0 0.0
        %1479 = vmatpush1.msra.mxu0 0.0
        %1480 = vmatprep.subr.mxu0 0.0
        %1481 = vmatpush1.msra.mxu0 0.0
        %1482 = vmatprep.mubr.f32.mxu0 0.0
        %1483 = vmatmul.mubr.f32.gmra.mrb[0].mxu0 %v1260
        %v1484 = vpop.f32.mrb[0].mxu0
        %v1485 = vadd.f32 %v1256, %v1484
        %v1486 = vpop.f32.mrb[0].mxu0
        %v1487 = vadd.f32 %v1256, %v1486
        %1488 = vdwg.mxu0
        %1489 = vmatprep.subr.mxu0 0.0
        %1490 = vmatpush1.msra.mxu0 %v946
        %1491 = vmatprep.subr.mxu0 0.0
        %1492 = vmatpush1.msra.mxu0 %v970
        %1493 = vmatprep.subr.mxu0 0.0
        %1494 = vmatpush1.msra.mxu0 %v986
        %1495 = vmatprep.subr.mxu0 0.0
        %1496 = vmatpush1.msra.mxu0 %v1000
        %1497 = vmatprep.subr.mxu0 0.0
        %1498 = vmatpush1.msra.mxu0 %v1021
        %1499 = vmatprep.subr.mxu0 0.0
        %1500 = vmatpush1.msra.mxu0 %v1035
        %1501 = vmatprep.subr.mxu0 0.0
        %1502 = vmatpush1.msra.mxu0 %v1208
        %1503 = vmatprep.subr.mxu0 0.0
        %1504 = vmatpush1.msra.mxu0 %v1215
        %1505 = vmatprep.subr.mxu0 0.0
        %1506 = vmatpush1.msra.mxu0 %v1222
        %1507 = vmatprep.subr.mxu0 0.0
        %1508 = vmatpush1.msra.mxu0 %v1274
        %1509 = vmatprep.subr.mxu0 0.0
        %1510 = vmatpush1.msra.mxu0 0.0
        %1511 = vmatprep.subr.mxu0 0.0
        %1512 = vmatpush1.msra.mxu0 0.0
        %1513 = vmatprep.subr.mxu0 0.0
        %1514 = vmatpush1.msra.mxu0 0.0
        %1515 = vmatprep.subr.mxu0 0.0
        %1516 = vmatpush1.msra.mxu0 0.0
        %1517 = vmatprep.subr.mxu0 0.0
        %1518 = vmatpush1.msra.mxu0 0.0
        %1519 = vmatprep.subr.mxu0 0.0
        %1520 = vmatpush1.msra.mxu0 0.0
        %1521 = vmatprep.subr.mxu0 0.0
        %1522 = vmatpush1.msra.mxu0 0.0
        %1523 = vmatprep.subr.mxu0 0.0
        %1524 = vmatpush1.msra.mxu0 0.0
        %1525 = vmatprep.subr.mxu0 0.0
        %1526 = vmatpush1.msra.mxu0 0.0
        %1527 = vmatprep.subr.mxu0 0.0
        %1528 = vmatpush1.msra.mxu0 0.0
        %1529 = vmatprep.subr.mxu0 0.0
        %1530 = vmatpush1.msra.mxu0 0.0
        %1531 = vmatprep.subr.mxu0 0.0
        %1532 = vmatpush1.msra.mxu0 0.0
        %1533 = vmatprep.subr.mxu0 0.0
        %1534 = vmatpush1.msra.mxu0 0.0
        %1535 = vmatprep.subr.mxu0 0.0
        %1536 = vmatpush1.msra.mxu0 0.0
        %1537 = vmatprep.subr.mxu0 0.0
        %1538 = vmatpush1.msra.mxu0 0.0
        %1539 = vmatprep.subr.mxu0 0.0
        %1540 = vmatpush1.msra.mxu0 0.0
        %1541 = vmatprep.subr.mxu0 0.0
        %1542 = vmatpush1.msra.mxu0 0.0
        %1543 = vmatprep.subr.mxu0 0.0
        %1544 = vmatpush1.msra.mxu0 0.0
        %1545 = vmatprep.subr.mxu0 0.0
        %1546 = vmatpush1.msra.mxu0 0.0
        %1547 = vmatprep.subr.mxu0 0.0
        %1548 = vmatpush1.msra.mxu0 0.0
        %1549 = vmatprep.subr.mxu0 0.0
        %1550 = vmatpush1.msra.mxu0 0.0
        %1551 = vmatprep.subr.mxu0 0.0
        %1552 = vmatpush1.msra.mxu0 0.0
        %1553 = vmatprep.mubr.f32.mxu0 0.0
        %1554 = vmatmul.mubr.f32.gmra.mrb[0].mxu0 %v1260
        %v1555 = vpop.f32.mrb[0].mxu0
        %v1556 = vadd.f32 %v1256, %v1555
        %v1557 = vpop.f32.mrb[0].mxu0
        %1558 = vdwg.mxu0
        %v1559 = vmax.f32 %v1343, 0.0
        %v1560 = vmax.f32 %v1345, 0.0
        %v1561 = vmax.f32 %v1414, 0.0
        %v1562 = vmax.f32 %v1416, 0.0
        %v1563 = vmax.f32 %v1485, 0.0
        %v1564 = vmax.f32 %v1487, 0.0
        %v1565 = vmax.f32 %v1556, 0.0
        %1573 = vrot.lane.b32.xlu0 %v1559, 127
        %v1574 = vpop.permute.xlu0 %1573
        %1575 = vrot.lane.b32.xlu0 %v1560, 127
        %v1576 = vpop.permute.xlu0 %1575
        %1577 = vrot.lane.b32.xlu0 %v1561, 127
        %v1578 = vpop.permute.xlu0 %1577
        %1579 = vrot.lane.b32.xlu0 %v1562, 127
        %v1580 = vpop.permute.xlu0 %1579
        %1581 = vrot.lane.b32.xlu0 %v1563, 127
        %v1582 = vpop.permute.xlu0 %1581
        %1583 = vrot.lane.b32.xlu0 %v1564, 127
        %v1584 = vpop.permute.xlu0 %1583
        %1585 = vrot.lane.b32.xlu0 %v1565, 127
        %v1586 = vpop.permute.xlu0 %1585
        %v1587 = vsel %vm446, %v1574, %v1576
        %v1588 = vsel %vm446, %v1576, %v1578
        %v1589 = vsel %vm446, %v1578, %v1580
        %v1590 = vsel %vm446, %v1580, %v1582
        %v1591 = vsel %vm446, %v1582, %v1584
        %v1592 = vsel %vm446, %v1584, %v1586
        %v1600 = vmax.f32 %v1559, %v1587
        %v1601 = vmax.f32 %v1560, %v1588
        %v1602 = vmax.f32 %v1561, %v1589
        %v1603 = vmax.f32 %v1562, %v1590
        %v1604 = vmax.f32 %v1563, %v1591
        %v1605 = vmax.f32 %v1564, %v1592
        %v1606 = vmax.f32 %v1565, %v1586
        %1614 = vrot.lane.b32.xlu0 %v1600, 96
        %v1615 = vpop.permute.xlu0 %1614
        %1616 = vrot.lane.b32.xlu0 %v1601, 96
        %v1617 = vpop.permute.xlu0 %1616
        %1618 = vrot.lane.b32.xlu0 %v1602, 96
        %v1619 = vpop.permute.xlu0 %1618
        %1620 = vrot.lane.b32.xlu0 %v1603, 96
        %v1621 = vpop.permute.xlu0 %1620
        %1622 = vrot.lane.b32.xlu0 %v1604, 96
        %v1623 = vpop.permute.xlu0 %1622
        %1624 = vrot.lane.b32.xlu0 %v1605, 96
        %v1625 = vpop.permute.xlu0 %1624
        %1626 = vrot.lane.b32.xlu0 %v1606, 96
        %v1627 = vpop.permute.xlu0 %1626
        %v1628 = vsel %vm587, %v1615, %v1617
        %v1629 = vsel %vm587, %v1617, %v1619
        %v1630 = vsel %vm587, %v1619, %v1621
        %v1631 = vsel %vm587, %v1621, %v1623
        %v1632 = vsel %vm587, %v1623, %v1625
        %v1633 = vsel %vm587, %v1625, %v1627
        %v1641 = vmax.f32 %v1600, %v1628
        %v1642 = vmax.f32 %v1601, %v1629
        %v1643 = vmax.f32 %v1602, %v1630
        %v1644 = vmax.f32 %v1603, %v1631
        %v1645 = vmax.f32 %v1604, %v1632
        %v1646 = vmax.f32 %v1605, %v1633
        %v1647 = vmax.f32 %v1606, %v1627
        %v1653 = vrot.slane %v1641, 2
        %v1654 = vrot.slane %v1642, 2
        %v1655 = vrot.slane %v1643, 2
        %v1656 = vrot.slane %v1644, 2
        %v1657 = vrot.slane %v1645, 2
        %1658 = vrot.lane.b32.xlu0 %v1653, 126
        %v1659 = vpop.permute.xlu0 %1658
        %1660 = vrot.lane.b32.xlu0 %v1654, 126
        %v1661 = vpop.permute.xlu0 %1660
        %1662 = vrot.lane.b32.xlu0 %v1655, 126
        %v1663 = vpop.permute.xlu0 %1662
        %1664 = vrot.lane.b32.xlu0 %v1656, 126
        %v1665 = vpop.permute.xlu0 %1664
        %1666 = vrot.lane.b32.xlu0 %v1657, 126
        %v1667 = vpop.permute.xlu0 %1666
        %v1668 = vsel %vm481, %v1659, %v1661
        %v1669 = vsel %vm481, %v1661, %v1663
        %v1670 = vsel %vm481, %v1663, %v1665
        %v1671 = vsel %vm481, %v1665, %v1667
        %v1677 = vrot.slane %v1641, 4
        %v1678 = vrot.slane %v1642, 4
        %v1679 = vrot.slane %v1643, 4
        %v1680 = vrot.slane %v1644, 4
        %v1681 = vrot.slane %v1645, 4
        %1682 = vrot.lane.b32.xlu0 %v1677, 124
        %v1683 = vpop.permute.xlu0 %1682
        %1684 = vrot.lane.b32.xlu0 %v1678, 124
        %v1685 = vpop.permute.xlu0 %1684
        %1686 = vrot.lane.b32.xlu0 %v1679, 124
        %v1687 = vpop.permute.xlu0 %1686
        %1688 = vrot.lane.b32.xlu0 %v1680, 124
        %v1689 = vpop.permute.xlu0 %1688
        %1690 = vrot.lane.b32.xlu0 %v1681, 124
        %v1691 = vpop.permute.xlu0 %1690
        %v1692 = vsel %vm548, %v1683, %v1685
        %v1693 = vsel %vm548, %v1685, %v1687
        %v1694 = vsel %vm548, %v1687, %v1689
        %v1695 = vsel %vm548, %v1689, %v1691
        %v1701 = vrot.slane %v1641, 6
        %v1702 = vrot.slane %v1642, 6
        %v1703 = vrot.slane %v1643, 6
        %v1704 = vrot.slane %v1644, 6
        %v1705 = vrot.slane %v1645, 6
        %1706 = vrot.lane.b32.xlu0 %v1701, 122
        %v1707 = vpop.permute.xlu0 %1706
        %1708 = vrot.lane.b32.xlu0 %v1702, 122
        %v1709 = vpop.permute.xlu0 %1708
        %1710 = vrot.lane.b32.xlu0 %v1703, 122
        %v1711 = vpop.permute.xlu0 %1710
        %1712 = vrot.lane.b32.xlu0 %v1704, 122
        %v1713 = vpop.permute.xlu0 %1712
        %1714 = vrot.lane.b32.xlu0 %v1705, 122
        %v1715 = vpop.permute.xlu0 %1714
        %vm1716 = vcmask 998400
        %v1717 = vsel %vm1716, %v1707, %v1709
        %v1718 = vsel %vm1716, %v1709, %v1711
        %v1719 = vsel %vm1716, %v1711, %v1713
        %v1720 = vsel %vm1716, %v1713, %v1715
        %1726 = vrot.lane.b32.xlu0 %v1641, 120
        %v1727 = vpop.permute.xlu0 %1726
        %1728 = vrot.lane.b32.xlu0 %v1642, 120
        %v1729 = vpop.permute.xlu0 %1728
        %1730 = vrot.lane.b32.xlu0 %v1643, 120
        %v1731 = vpop.permute.xlu0 %1730
        %1732 = vrot.lane.b32.xlu0 %v1644, 120
        %v1733 = vpop.permute.xlu0 %1732
        %1734 = vrot.lane.b32.xlu0 %v1645, 120
        %v1735 = vpop.permute.xlu0 %1734
        %vm1736 = vcmask 982016
        %v1737 = vsel %vm1736, %v1727, %v1729
        %v1738 = vsel %vm1736, %v1729, %v1731
        %v1739 = vsel %vm1736, %v1731, %v1733
        %v1740 = vsel %vm1736, %v1733, %v1735
        %v1747 = vrot.slane %v1646, 2
        %1748 = vrot.lane.b32.xlu0 %v1653, 64
        %v1749 = vpop.permute.xlu0 %1748
        %1750 = vrot.lane.b32.xlu0 %v1654, 64
        %v1751 = vpop.permute.xlu0 %1750
        %1752 = vrot.lane.b32.xlu0 %v1655, 64
        %v1753 = vpop.permute.xlu0 %1752
        %1754 = vrot.lane.b32.xlu0 %v1656, 64
        %v1755 = vpop.permute.xlu0 %1754
        %1756 = vrot.lane.b32.xlu0 %v1657, 64
        %v1757 = vpop.permute.xlu0 %1756
        %1758 = vrot.lane.b32.xlu0 %v1747, 64
        %v1759 = vpop.permute.xlu0 %1758
        %v1760 = vsel %vm760, %v1749, %v1751
        %v1761 = vsel %vm760, %v1751, %v1753
        %v1762 = vsel %vm760, %v1753, %v1755
        %v1763 = vsel %vm760, %v1755, %v1757
        %v1764 = vsel %vm760, %v1757, %v1759
        %v1770 = vrot.slane %v1646, 4
        %1771 = vrot.lane.b32.xlu0 %v1677, 62
        %v1772 = vpop.permute.xlu0 %1771
        %1773 = vrot.lane.b32.xlu0 %v1678, 62
        %v1774 = vpop.permute.xlu0 %1773
        %1775 = vrot.lane.b32.xlu0 %v1679, 62
        %v1776 = vpop.permute.xlu0 %1775
        %1777 = vrot.lane.b32.xlu0 %v1680, 62
        %v1778 = vpop.permute.xlu0 %1777
        %1779 = vrot.lane.b32.xlu0 %v1681, 62
        %v1780 = vpop.permute.xlu0 %1779
        %1781 = vrot.lane.b32.xlu0 %v1770, 62
        %v1782 = vpop.permute.xlu0 %1781
        %v1783 = vsel %vm823, %v1772, %v1774
        %v1784 = vsel %vm823, %v1774, %v1776
        %v1785 = vsel %vm823, %v1776, %v1778
        %v1786 = vsel %vm823, %v1778, %v1780
        %v1787 = vsel %vm823, %v1780, %v1782
        %v1793 = vrot.slane %v1646, 6
        %1794 = vrot.lane.b32.xlu0 %v1701, 60
        %v1795 = vpop.permute.xlu0 %1794
        %1796 = vrot.lane.b32.xlu0 %v1702, 60
        %v1797 = vpop.permute.xlu0 %1796
        %1798 = vrot.lane.b32.xlu0 %v1703, 60
        %v1799 = vpop.permute.xlu0 %1798
        %1800 = vrot.lane.b32.xlu0 %v1704, 60
        %v1801 = vpop.permute.xlu0 %1800
        %1802 = vrot.lane.b32.xlu0 %v1705, 60
        %v1803 = vpop.permute.xlu0 %1802
        %1804 = vrot.lane.b32.xlu0 %v1793, 60
        %v1805 = vpop.permute.xlu0 %1804
        %v1806 = vsel %vm885, %v1795, %v1797
        %v1807 = vsel %vm885, %v1797, %v1799
        %v1808 = vsel %vm885, %v1799, %v1801
        %v1809 = vsel %vm885, %v1801, %v1803
        %v1810 = vsel %vm885, %v1803, %v1805
        %1816 = vrot.lane.b32.xlu0 %v1641, 58
        %v1817 = vpop.permute.xlu0 %1816
        %1818 = vrot.lane.b32.xlu0 %v1642, 58
        %v1819 = vpop.permute.xlu0 %1818
        %1820 = vrot.lane.b32.xlu0 %v1643, 58
        %v1821 = vpop.permute.xlu0 %1820
        %1822 = vrot.lane.b32.xlu0 %v1644, 58
        %v1823 = vpop.permute.xlu0 %1822
        %1824 = vrot.lane.b32.xlu0 %v1645, 58
        %v1825 = vpop.permute.xlu0 %1824
        %1826 = vrot.lane.b32.xlu0 %v1646, 58
        %v1827 = vpop.permute.xlu0 %1826
        %vm1828 = vcmask 474112
        %v1829 = vsel %vm1828, %v1817, %v1819
        %v1830 = vsel %vm1828, %v1819, %v1821
        %v1831 = vsel %vm1828, %v1821, %v1823
        %v1832 = vsel %vm1828, %v1823, %v1825
        %v1833 = vsel %vm1828, %v1825, %v1827
        %1839 = vrot.lane.b32.xlu0 %v1653, 56
        %v1840 = vpop.permute.xlu0 %1839
        %1841 = vrot.lane.b32.xlu0 %v1654, 56
        %v1842 = vpop.permute.xlu0 %1841
        %1843 = vrot.lane.b32.xlu0 %v1655, 56
        %v1844 = vpop.permute.xlu0 %1843
        %1845 = vrot.lane.b32.xlu0 %v1656, 56
        %v1846 = vpop.permute.xlu0 %1845
        %1847 = vrot.lane.b32.xlu0 %v1657, 56
        %v1848 = vpop.permute.xlu0 %1847
        %1849 = vrot.lane.b32.xlu0 %v1747, 56
        %v1850 = vpop.permute.xlu0 %1849
        %vm1851 = vcmask 457728
        %v1852 = vsel %vm1851, %v1840, %v1842
        %v1853 = vsel %vm1851, %v1842, %v1844
        %v1854 = vsel %vm1851, %v1844, %v1846
        %v1855 = vsel %vm1851, %v1846, %v1848
        %v1856 = vsel %vm1851, %v1848, %v1850
        %1867 = vrot.lane.b32.xlu0 %v1702, 126
        %v1868 = vpop.permute.xlu0 %1867
        %1869 = vrot.lane.b32.xlu0 %v1703, 126
        %v1870 = vpop.permute.xlu0 %1869
        %1871 = vrot.lane.b32.xlu0 %v1704, 126
        %v1872 = vpop.permute.xlu0 %1871
        %1873 = vrot.lane.b32.xlu0 %v1705, 126
        %v1874 = vpop.permute.xlu0 %1873
        %1875 = vrot.lane.b32.xlu0 %v1793, 126
        %v1876 = vpop.permute.xlu0 %1875
        %v1877 = vsel %vm481, %v1868, %v1870
        %v1878 = vsel %vm481, %v1870, %v1872
        %v1879 = vsel %vm481, %v1872, %v1874
        %v1880 = vsel %vm481, %v1874, %v1876
        %1886 = vrot.lane.b32.xlu0 %v1642, 124
        %v1887 = vpop.permute.xlu0 %1886
        %1888 = vrot.lane.b32.xlu0 %v1643, 124
        %v1889 = vpop.permute.xlu0 %1888
        %1890 = vrot.lane.b32.xlu0 %v1644, 124
        %v1891 = vpop.permute.xlu0 %1890
        %1892 = vrot.lane.b32.xlu0 %v1645, 124
        %v1893 = vpop.permute.xlu0 %1892
        %1894 = vrot.lane.b32.xlu0 %v1646, 124
        %v1895 = vpop.permute.xlu0 %1894
        %v1896 = vsel %vm548, %v1887, %v1889
        %v1897 = vsel %vm548, %v1889, %v1891
        %v1898 = vsel %vm548, %v1891, %v1893
        %v1899 = vsel %vm548, %v1893, %v1895
        %1905 = vrot.lane.b32.xlu0 %v1654, 122
        %v1906 = vpop.permute.xlu0 %1905
        %1907 = vrot.lane.b32.xlu0 %v1655, 122
        %v1908 = vpop.permute.xlu0 %1907
        %1909 = vrot.lane.b32.xlu0 %v1656, 122
        %v1910 = vpop.permute.xlu0 %1909
        %1911 = vrot.lane.b32.xlu0 %v1657, 122
        %v1912 = vpop.permute.xlu0 %1911
        %1913 = vrot.lane.b32.xlu0 %v1747, 122
        %v1914 = vpop.permute.xlu0 %1913
        %v1915 = vsel %vm1716, %v1906, %v1908
        %v1916 = vsel %vm1716, %v1908, %v1910
        %v1917 = vsel %vm1716, %v1910, %v1912
        %v1918 = vsel %vm1716, %v1912, %v1914
        %1924 = vrot.lane.b32.xlu0 %v1678, 120
        %v1925 = vpop.permute.xlu0 %1924
        %1926 = vrot.lane.b32.xlu0 %v1679, 120
        %v1927 = vpop.permute.xlu0 %1926
        %1928 = vrot.lane.b32.xlu0 %v1680, 120
        %v1929 = vpop.permute.xlu0 %1928
        %1930 = vrot.lane.b32.xlu0 %v1681, 120
        %v1931 = vpop.permute.xlu0 %1930
        %1932 = vrot.lane.b32.xlu0 %v1770, 120
        %v1933 = vpop.permute.xlu0 %1932
        %v1934 = vsel %vm1736, %v1925, %v1927
        %v1935 = vsel %vm1736, %v1927, %v1929
        %v1936 = vsel %vm1736, %v1929, %v1931
        %v1937 = vsel %vm1736, %v1931, %v1933
        %v1944 = vrot.slane %v1647, 6
        %1945 = vrot.lane.b32.xlu0 %v1702, 64
        %v1946 = vpop.permute.xlu0 %1945
        %1947 = vrot.lane.b32.xlu0 %v1703, 64
        %v1948 = vpop.permute.xlu0 %1947
        %1949 = vrot.lane.b32.xlu0 %v1704, 64
        %v1950 = vpop.permute.xlu0 %1949
        %1951 = vrot.lane.b32.xlu0 %v1705, 64
        %v1952 = vpop.permute.xlu0 %1951
        %1953 = vrot.lane.b32.xlu0 %v1793, 64
        %v1954 = vpop.permute.xlu0 %1953
        %1955 = vrot.lane.b32.xlu0 %v1944, 64
        %v1956 = vpop.permute.xlu0 %1955
        %v1957 = vsel %vm760, %v1946, %v1948
        %v1958 = vsel %vm760, %v1948, %v1950
        %v1959 = vsel %vm760, %v1950, %v1952
        %v1960 = vsel %vm760, %v1952, %v1954
        %v1961 = vsel %vm760, %v1954, %v1956
        %v1967 = vsel %vm939, %v1641, %v1668
        %v1968 = vsel %vm939, %v1642, %v1669
        %v1969 = vsel %vm939, %v1643, %v1670
        %v1970 = vsel %vm939, %v1644, %v1671
        %v1971 = vsel %vm939, %v1645, %v1667
        %v1972 = vsel %vm955, %v1668, %v1692
        %v1973 = vsel %vm955, %v1669, %v1693
        %v1974 = vsel %vm955, %v1670, %v1694
        %v1975 = vsel %vm955, %v1671, %v1695
        %v1976 = vsel %vm955, %v1667, %v1691
        %v1977 = vsel %vm971, %v1692, %v1717
        %v1978 = vsel %vm971, %v1693, %v1718
        %v1979 = vsel %vm971, %v1694, %v1719
        %v1980 = vsel %vm971, %v1695, %v1720
        %v1981 = vsel %vm971, %v1691, %v1715
        %v1982 = vsel %vm939, %v1737, %v1760
        %v1983 = vsel %vm939, %v1738, %v1761
        %v1984 = vsel %vm939, %v1739, %v1762
        %v1985 = vsel %vm939, %v1740, %v1763
        %v1986 = vsel %vm939, %v1735, %v1764
        %v1987 = vsel %vm955, %v1760, %v1783
        %v1988 = vsel %vm955, %v1761, %v1784
        %v1989 = vsel %vm955, %v1762, %v1785
        %v1990 = vsel %vm955, %v1763, %v1786
        %v1991 = vsel %vm955, %v1764, %v1787
        %v1992 = vsel %vm971, %v1783, %v1806
        %v1993 = vsel %vm971, %v1784, %v1807
        %v1994 = vsel %vm971, %v1785, %v1808
        %v1995 = vsel %vm971, %v1786, %v1809
        %v1996 = vsel %vm971, %v1787, %v1810
        %v1997 = vsel %vm939, %v1829, %v1852
        %v1998 = vsel %vm939, %v1830, %v1853
        %v1999 = vsel %vm939, %v1831, %v1854
        %v2000 = vsel %vm939, %v1832, %v1855
        %v2001 = vsel %vm939, %v1833, %v1856
        %v2002 = vsel %vm955, %v1852, %v1678
        %v2003 = vsel %vm955, %v1853, %v1679
        %v2004 = vsel %vm955, %v1854, %v1680
        %v2005 = vsel %vm955, %v1855, %v1681
        %v2006 = vsel %vm955, %v1856, %v1770
        %v2007 = vsel %vm971, %v1678, %v1877
        %v2008 = vsel %vm971, %v1679, %v1878
        %v2009 = vsel %vm971, %v1680, %v1879
        %v2010 = vsel %vm971, %v1681, %v1880
        %v2011 = vsel %vm971, %v1770, %v1876
        %v2012 = vsel %vm939, %v1896, %v1915
        %v2013 = vsel %vm939, %v1897, %v1916
        %v2014 = vsel %vm939, %v1898, %v1917
        %v2015 = vsel %vm939, %v1899, %v1918
        %v2016 = vsel %vm939, %v1895, %v1914
        %v2017 = vsel %vm955, %v1915, %v1934
        %v2018 = vsel %vm955, %v1916, %v1935
        %v2019 = vsel %vm955, %v1917, %v1936
        %v2020 = vsel %vm955, %v1918, %v1937
        %v2021 = vsel %vm955, %v1914, %v1933
        %v2022 = vsel %vm971, %v1934, %v1957
        %v2023 = vsel %vm971, %v1935, %v1958
        %v2024 = vsel %vm971, %v1936, %v1959
        %v2025 = vsel %vm971, %v1937, %v1960
        %v2026 = vsel %vm971, %v1933, %v1961
        %v2027 = vrot.slane %v1647, 2
        %2028 = vrot.lane.b32.xlu0 %v1747, 126
        %v2029 = vpop.permute.xlu0 %2028
        %2030 = vrot.lane.b32.xlu0 %v2027, 126
        %v2031 = vpop.permute.xlu0 %2030
        %v2032 = vsel %vm481, %v1667, %v2029
        %v2033 = vsel %vm481, %v2029, %v2031
        %v2037 = vrot.slane %v1647, 4
        %2038 = vrot.lane.b32.xlu0 %v1770, 124
        %v2039 = vpop.permute.xlu0 %2038
        %2040 = vrot.lane.b32.xlu0 %v2037, 124
        %v2041 = vpop.permute.xlu0 %2040
        %v2042 = vsel %vm548, %v1691, %v2039
        %v2043 = vsel %vm548, %v2039, %v2041
        %2047 = vrot.lane.b32.xlu0 %v1793, 122
        %v2048 = vpop.permute.xlu0 %2047
        %2049 = vrot.lane.b32.xlu0 %v1944, 122
        %v2050 = vpop.permute.xlu0 %2049
        %v2051 = vsel %vm1716, %v1715, %v2048
        %v2052 = vsel %vm1716, %v2048, %v2050
        %2056 = vrot.lane.b32.xlu0 %v1643, 66
        %v2057 = vpop.permute.xlu0 %2056
        %2058 = vrot.lane.b32.xlu0 %v1644, 66
        %v2059 = vpop.permute.xlu0 %2058
        %2060 = vrot.lane.b32.xlu0 %v1645, 66
        %v2061 = vpop.permute.xlu0 %2060
        %2062 = vrot.lane.b32.xlu0 %v1646, 66
        %v2063 = vpop.permute.xlu0 %2062
        %2064 = vrot.lane.b32.xlu0 %v1647, 66
        %v2065 = vpop.permute.xlu0 %2064
        %vm2066 = vcmask 539648
        %v2067 = vsel %vm2066, %v2057, %v2059
        %v2068 = vsel %vm2066, %v2059, %v2061
        %v2069 = vsel %vm2066, %v2061, %v2063
        %v2070 = vsel %vm2066, %v2063, %v2065
        %2077 = vrot.lane.b32.xlu0 %v2027, 64
        %v2078 = vpop.permute.xlu0 %2077
        %v2079 = vsel %vm760, %v1759, %v2078
        %2083 = vrot.lane.b32.xlu0 %v2037, 62
        %v2084 = vpop.permute.xlu0 %2083
        %v2085 = vsel %vm823, %v1782, %v2084
        %2089 = vrot.lane.b32.xlu0 %v1944, 60
        %v2090 = vpop.permute.xlu0 %2089
        %v2091 = vsel %vm885, %v1805, %v2090
        %2095 = vrot.lane.b32.xlu0 %v1647, 58
        %v2096 = vpop.permute.xlu0 %2095
        %v2097 = vsel %vm1828, %v1827, %v2096
        %v2098 = vsel %vm939, %v1645, %v2032
        %v2099 = vsel %vm939, %v1646, %v2033
        %v2100 = vsel %vm939, %v1647, %v2031
        %v2101 = vsel %vm955, %v2032, %v2042
        %v2102 = vsel %vm955, %v2033, %v2043
        %v2103 = vsel %vm955, %v2031, %v2041
        %v2104 = vsel %vm971, %v2042, %v2051
        %v2105 = vsel %vm971, %v2043, %v2052
        %v2106 = vsel %vm971, %v2041, %v2050
        %v2107 = vsel %vm939, %v2057, %v1753
        %v2108 = vsel %vm939, %v2067, %v1762
        %v2109 = vsel %vm939, %v2068, %v1763
        %v2110 = vsel %vm939, %v2069, %v1764
        %v2111 = vsel %vm939, %v2070, %v2079
        %v2112 = vsel %vm939, %v2065, %v2078
        %v2113 = vsel %vm955, %v1753, %v1776
        %v2114 = vsel %vm955, %v2079, %v2085
        %v2115 = vsel %vm955, %v2078, %v2084
        %v2116 = vsel %vm971, %v1776, %v1799
        %v2117 = vsel %vm971, %v2085, %v2091
        %v2118 = vsel %vm971, %v2084, %v2090
        %2155 = vrot.lane.b32.xlu0 %v1968, 62
        %v2156 = vpop.permute.xlu0 %2155
        %2157 = vrot.lane.b32.xlu0 %v1969, 62
        %v2158 = vpop.permute.xlu0 %2157
        %2159 = vrot.lane.b32.xlu0 %v1970, 62
        %v2160 = vpop.permute.xlu0 %2159
        %2161 = vrot.lane.b32.xlu0 %v2098, 62
        %v2162 = vpop.permute.xlu0 %2161
        %2163 = vrot.lane.b32.xlu0 %v2099, 62
        %v2164 = vpop.permute.xlu0 %2163
        %2165 = vrot.lane.b32.xlu0 %v2100, 62
        %v2166 = vpop.permute.xlu0 %2165
        %2167 = vrot.lane.b32.xlu0 %v1973, 62
        %v2168 = vpop.permute.xlu0 %2167
        %2169 = vrot.lane.b32.xlu0 %v1974, 62
        %v2170 = vpop.permute.xlu0 %2169
        %2171 = vrot.lane.b32.xlu0 %v1975, 62
        %v2172 = vpop.permute.xlu0 %2171
        %2173 = vrot.lane.b32.xlu0 %v2101, 62
        %v2174 = vpop.permute.xlu0 %2173
        %2175 = vrot.lane.b32.xlu0 %v2102, 62
        %v2176 = vpop.permute.xlu0 %2175
        %2177 = vrot.lane.b32.xlu0 %v2103, 62
        %v2178 = vpop.permute.xlu0 %2177
        %2179 = vrot.lane.b32.xlu0 %v1978, 62
        %v2180 = vpop.permute.xlu0 %2179
        %2181 = vrot.lane.b32.xlu0 %v1979, 62
        %v2182 = vpop.permute.xlu0 %2181
        %2183 = vrot.lane.b32.xlu0 %v1980, 62
        %v2184 = vpop.permute.xlu0 %2183
        %2185 = vrot.lane.b32.xlu0 %v2104, 62
        %v2186 = vpop.permute.xlu0 %2185
        %2187 = vrot.lane.b32.xlu0 %v2105, 62
        %v2188 = vpop.permute.xlu0 %2187
        %2189 = vrot.lane.b32.xlu0 %v2106, 62
        %v2190 = vpop.permute.xlu0 %2189
        %2191 = vrot.lane.b32.xlu0 %v2107, 62
        %v2192 = vpop.permute.xlu0 %2191
        %2193 = vrot.lane.b32.xlu0 %v2108, 62
        %v2194 = vpop.permute.xlu0 %2193
        %2195 = vrot.lane.b32.xlu0 %v2109, 62
        %v2196 = vpop.permute.xlu0 %2195
        %2197 = vrot.lane.b32.xlu0 %v2110, 62
        %v2198 = vpop.permute.xlu0 %2197
        %2199 = vrot.lane.b32.xlu0 %v2111, 62
        %v2200 = vpop.permute.xlu0 %2199
        %2201 = vrot.lane.b32.xlu0 %v2112, 62
        %v2202 = vpop.permute.xlu0 %2201
        %2203 = vrot.lane.b32.xlu0 %v2113, 62
        %v2204 = vpop.permute.xlu0 %2203
        %2205 = vrot.lane.b32.xlu0 %v1989, 62
        %v2206 = vpop.permute.xlu0 %2205
        %2207 = vrot.lane.b32.xlu0 %v1990, 62
        %v2208 = vpop.permute.xlu0 %2207
        %2209 = vrot.lane.b32.xlu0 %v1991, 62
        %v2210 = vpop.permute.xlu0 %2209
        %2211 = vrot.lane.b32.xlu0 %v2114, 62
        %v2212 = vpop.permute.xlu0 %2211
        %2213 = vrot.lane.b32.xlu0 %v2115, 62
        %v2214 = vpop.permute.xlu0 %2213
        %2215 = vrot.lane.b32.xlu0 %v2116, 62
        %v2216 = vpop.permute.xlu0 %2215
        %2217 = vrot.lane.b32.xlu0 %v1994, 62
        %v2218 = vpop.permute.xlu0 %2217
        %2219 = vrot.lane.b32.xlu0 %v1995, 62
        %v2220 = vpop.permute.xlu0 %2219
        %2221 = vrot.lane.b32.xlu0 %v1996, 62
        %v2222 = vpop.permute.xlu0 %2221
        %2223 = vrot.lane.b32.xlu0 %v2117, 62
        %v2224 = vpop.permute.xlu0 %2223
        %2225 = vrot.lane.b32.xlu0 %v2118, 62
        %v2226 = vpop.permute.xlu0 %2225
        %2227 = vrot.lane.b32.xlu0 %v1821, 62
        %v2228 = vpop.permute.xlu0 %2227
        %2229 = vrot.lane.b32.xlu0 %v1831, 62
        %v2230 = vpop.permute.xlu0 %2229
        %2231 = vrot.lane.b32.xlu0 %v1832, 62
        %v2232 = vpop.permute.xlu0 %2231
        %2233 = vrot.lane.b32.xlu0 %v1833, 62
        %v2234 = vpop.permute.xlu0 %2233
        %2235 = vrot.lane.b32.xlu0 %v2097, 62
        %v2236 = vpop.permute.xlu0 %2235
        %2237 = vrot.lane.b32.xlu0 %v2096, 62
        %v2238 = vpop.permute.xlu0 %2237
        %v2239 = vsel %vm823, %v2156, %v2158
        %v2240 = vsel %vm823, %v2158, %v2160
        %v2241 = vsel %vm823, %v2160, %v2162
        %v2242 = vsel %vm823, %v2162, %v2164
        %v2243 = vsel %vm823, %v2164, %v2166
        %v2244 = vsel %vm823, %v2168, %v2170
        %v2245 = vsel %vm823, %v2170, %v2172
        %v2246 = vsel %vm823, %v2172, %v2174
        %v2247 = vsel %vm823, %v2174, %v2176
        %v2248 = vsel %vm823, %v2176, %v2178
        %v2249 = vsel %vm823, %v2180, %v2182
        %v2250 = vsel %vm823, %v2182, %v2184
        %v2251 = vsel %vm823, %v2184, %v2186
        %v2252 = vsel %vm823, %v2186, %v2188
        %v2253 = vsel %vm823, %v2188, %v2190
        %v2254 = vsel %vm823, %v2192, %v2194
        %v2255 = vsel %vm823, %v2194, %v2196
        %v2256 = vsel %vm823, %v2196, %v2198
        %v2257 = vsel %vm823, %v2198, %v2200
        %v2258 = vsel %vm823, %v2200, %v2202
        %v2259 = vsel %vm823, %v2204, %v2206
        %v2260 = vsel %vm823, %v2206, %v2208
        %v2261 = vsel %vm823, %v2208, %v2210
        %v2262 = vsel %vm823, %v2210, %v2212
        %v2263 = vsel %vm823, %v2212, %v2214
        %v2264 = vsel %vm823, %v2216, %v2218
        %v2265 = vsel %vm823, %v2218, %v2220
        %v2266 = vsel %vm823, %v2220, %v2222
        %v2267 = vsel %vm823, %v2222, %v2224
        %v2268 = vsel %vm823, %v2224, %v2226
        %v2269 = vsel %vm823, %v2228, %v2230
        %v2270 = vsel %vm823, %v2230, %v2232
        %v2271 = vsel %vm823, %v2232, %v2234
        %v2272 = vsel %vm823, %v2234, %v2236
        %v2273 = vsel %vm823, %v2236, %v2238
        %v2304 = vld [vmem:[%s3] sm:$0xff]
        %v2305 = vld [vmem:[%s3 + $0x8] sm:$0xff]
        %v2306 = vld [vmem:[%s3 + $0x10] sm:$0xff]
        %v2307 = vld [vmem:[%s3 + $0x18] sm:$0xff]
        %v2308 = vld [vmem:[%s4] sm:$0xff]
        %v2309 = vld [vmem:[%s4 + $0x8] sm:$0xff]
        %2311 = vset.pattern.permute.xlu0 0
        %2312 = vperm.xlu0 %2311, %v2308
        %v2313 = vpop.permute.xlu0 %2312
        %2316 = vset.pattern.permute.xlu0 0
        %2317 = vperm.xlu0 %2316, %v2309
        %v2318 = vpop.permute.xlu0 %2317
        %vm2320 = vcmask 179200
        %v2322 = vsel %vm2320, %v2305, 0
        %v2325 = vsel %vm2320, %v2307, 0
        %v2327 = vsel %vm939, %v2269, 0
        %v2329 = vsel %vm939, %v2270, 0
        %v2331 = vsel %vm939, %v2271, 0
        %v2333 = vsel %vm939, %v2272, 0
        %v2335 = vsel %vm939, %v2273, 0
        %2337 = vmatprep.subr.mxu0 %v1968
        %2338 = vmatpush1.msra.mxu0 %v1967
        %2339 = vmatprep.subr.mxu0 %v1973
        %2340 = vmatpush1.msra.mxu0 %v1972
        %2341 = vmatprep.subr.mxu0 %v1978
        %2342 = vmatpush1.msra.mxu0 %v1977
        %2343 = vmatprep.subr.mxu0 %v1983
        %2344 = vmatpush1.msra.mxu0 %v1982
        %2345 = vmatprep.subr.mxu0 %v1988
        %2346 = vmatpush1.msra.mxu0 %v1987
        %2347 = vmatprep.subr.mxu0 %v1993
        %2348 = vmatpush1.msra.mxu0 %v1992
        %2349 = vmatprep.subr.mxu0 %v1998
        %2350 = vmatpush1.msra.mxu0 %v1997
        %2351 = vmatprep.subr.mxu0 %v2003
        %2352 = vmatpush1.msra.mxu0 %v2002
        %2353 = vmatprep.subr.mxu0 %v2008
        %2354 = vmatpush1.msra.mxu0 %v2007
        %2355 = vmatprep.subr.mxu0 %v2013
        %2356 = vmatpush1.msra.mxu0 %v2012
        %2357 = vmatprep.subr.mxu0 %v2018
        %2358 = vmatpush1.msra.mxu0 %v2017
        %2359 = vmatprep.subr.mxu0 %v2023
        %2360 = vmatpush1.msra.mxu0 %v2022
        %2361 = vmatprep.subr.mxu0 %v2240
        %2362 = vmatpush1.msra.mxu0 %v2239
        %2363 = vmatprep.subr.mxu0 %v2245
        %2364 = vmatpush1.msra.mxu0 %v2244
        %2365 = vmatprep.subr.mxu0 %v2250
        %2366 = vmatpush1.msra.mxu0 %v2249
        %2367 = vmatprep.subr.mxu0 %v2255
        %2368 = vmatpush1.msra.mxu0 %v2254
        %2369 = vmatprep.subr.mxu0 %v2260
        %2370 = vmatpush1.msra.mxu0 %v2259
        %2371 = vmatprep.subr.mxu0 %v2265
        %2372 = vmatpush1.msra.mxu0 %v2264
        %2373 = vmatprep.subr.mxu0 %v2329
        %2374 = vmatpush1.msra.mxu0 %v2327
        %2375 = vmatprep.subr.mxu0 0.0
        %2376 = vmatpush1.msra.mxu0 0.0
        %2377 = vmatprep.subr.mxu0 0.0
        %2378 = vmatpush1.msra.mxu0 0.0
        %2379 = vmatprep.subr.mxu0 0.0
        %2380 = vmatpush1.msra.mxu0 0.0
        %2381 = vmatprep.subr.mxu0 0.0
        %2382 = vmatpush1.msra.mxu0 0.0
        %2383 = vmatprep.subr.mxu0 0.0
        %2384 = vmatpush1.msra.mxu0 0.0
        %2385 = vmatprep.subr.mxu0 0.0
        %2386 = vmatpush1.msra.mxu0 0.0
        %2387 = vmatprep.subr.mxu0 0.0
        %2388 = vmatpush1.msra.mxu0 0.0
        %2389 = vmatprep.subr.mxu0 0.0
        %2390 = vmatpush1.msra.mxu0 0.0
        %2391 = vmatprep.subr.mxu0 0.0
        %2392 = vmatpush1.msra.mxu0 0.0
        %2393 = vmatprep.subr.mxu0 0.0
        %2394 = vmatpush1.msra.mxu0 0.0
        %2395 = vmatprep.subr.mxu0 0.0
        %2396 = vmatpush1.msra.mxu0 0.0
        %2397 = vmatprep.subr.mxu0 0.0
        %2398 = vmatpush1.msra.mxu0 0.0
        %2399 = vmatprep.subr.mxu0 0.0
        %2400 = vmatpush1.msra.mxu0 0.0
        %2401 = vmatprep.mubr.f32.mxu0 %v2322
        %2402 = vmatmul.mubr.f32.gmra.mrb[0].mxu0 %v2304
        %v2403 = vpop.f32.mrb[0].mxu0
        %v2404 = vadd.f32 %v2313, %v2403
        %v2405 = vpop.f32.mrb[0].mxu0
        %v2406 = vadd.f32 %v2313, %v2405
        %2407 = vmatprep.mubr.f32.mxu0 %v2325
        %2408 = vmatmul.mubr.f32.gmra.mrb[0].mxu0 %v2306
        %v2409 = vpop.f32.mrb[0].mxu0
        %v2410 = vadd.f32 %v2318, %v2409
        %v2411 = vpop.f32.mrb[0].mxu0
        %v2412 = vadd.f32 %v2318, %v2411
        %2413 = vdwg.mxu0
        %2414 = vmatprep.subr.mxu0 %v1970
        %2415 = vmatpush1.msra.mxu0 %v1969
        %2416 = vmatprep.subr.mxu0 %v1975
        %2417 = vmatpush1.msra.mxu0 %v1974
        %2418 = vmatprep.subr.mxu0 %v1980
        %2419 = vmatpush1.msra.mxu0 %v1979
        %2420 = vmatprep.subr.mxu0 %v1985
        %2421 = vmatpush1.msra.mxu0 %v1984
        %2422 = vmatprep.subr.mxu0 %v1990
        %2423 = vmatpush1.msra.mxu0 %v1989
        %2424 = vmatprep.subr.mxu0 %v1995
        %2425 = vmatpush1.msra.mxu0 %v1994
        %2426 = vmatprep.subr.mxu0 %v2000
        %2427 = vmatpush1.msra.mxu0 %v1999
        %2428 = vmatprep.subr.mxu0 %v2005
        %2429 = vmatpush1.msra.mxu0 %v2004
        %2430 = vmatprep.subr.mxu0 %v2010
        %2431 = vmatpush1.msra.mxu0 %v2009
        %2432 = vmatprep.subr.mxu0 %v2015
        %2433 = vmatpush1.msra.mxu0 %v2014
        %2434 = vmatprep.subr.mxu0 %v2020
        %2435 = vmatpush1.msra.mxu0 %v2019
        %2436 = vmatprep.subr.mxu0 %v2025
        %2437 = vmatpush1.msra.mxu0 %v2024
        %2438 = vmatprep.subr.mxu0 %v2242
        %2439 = vmatpush1.msra.mxu0 %v2241
        %2440 = vmatprep.subr.mxu0 %v2247
        %2441 = vmatpush1.msra.mxu0 %v2246
        %2442 = vmatprep.subr.mxu0 %v2252
        %2443 = vmatpush1.msra.mxu0 %v2251
        %2444 = vmatprep.subr.mxu0 %v2257
        %2445 = vmatpush1.msra.mxu0 %v2256
        %2446 = vmatprep.subr.mxu0 %v2262
        %2447 = vmatpush1.msra.mxu0 %v2261
        %2448 = vmatprep.subr.mxu0 %v2267
        %2449 = vmatpush1.msra.mxu0 %v2266
        %2450 = vmatprep.subr.mxu0 %v2333
        %2451 = vmatpush1.msra.mxu0 %v2331
        %2452 = vmatprep.subr.mxu0 0.0
        %2453 = vmatpush1.msra.mxu0 0.0
        %2454 = vmatprep.subr.mxu0 0.0
        %2455 = vmatpush1.msra.mxu0 0.0
        %2456 = vmatprep.subr.mxu0 0.0
        %2457 = vmatpush1.msra.mxu0 0.0
        %2458 = vmatprep.subr.mxu0 0.0
        %2459 = vmatpush1.msra.mxu0 0.0
        %2460 = vmatprep.subr.mxu0 0.0
        %2461 = vmatpush1.msra.mxu0 0.0
        %2462 = vmatprep.subr.mxu0 0.0
        %2463 = vmatpush1.msra.mxu0 0.0
        %2464 = vmatprep.subr.mxu0 0.0
        %2465 = vmatpush1.msra.mxu0 0.0
        %2466 = vmatprep.subr.mxu0 0.0
        %2467 = vmatpush1.msra.mxu0 0.0
        %2468 = vmatprep.subr.mxu0 0.0
        %2469 = vmatpush1.msra.mxu0 0.0
        %2470 = vmatprep.subr.mxu0 0.0
        %2471 = vmatpush1.msra.mxu0 0.0
        %2472 = vmatprep.subr.mxu0 0.0
        %2473 = vmatpush1.msra.mxu0 0.0
        %2474 = vmatprep.subr.mxu0 0.0
        %2475 = vmatpush1.msra.mxu0 0.0
        %2476 = vmatprep.subr.mxu0 0.0
        %2477 = vmatpush1.msra.mxu0 0.0
        %2478 = vmatprep.mubr.f32.mxu0 %v2322
        %2479 = vmatmul.mubr.f32.gmra.mrb[0].mxu0 %v2304
        %v2480 = vpop.f32.mrb[0].mxu0
        %v2481 = vadd.f32 %v2313, %v2480
        %v2482 = vpop.f32.mrb[0].mxu0
        %v2483 = vadd.f32 %v2313, %v2482
        %2484 = vmatprep.mubr.f32.mxu0 %v2325
        %2485 = vmatmul.mubr.f32.gmra.mrb[0].mxu0 %v2306
        %v2486 = vpop.f32.mrb[0].mxu0
        %v2487 = vadd.f32 %v2318, %v2486
        %v2488 = vpop.f32.mrb[0].mxu0
        %v2489 = vadd.f32 %v2318, %v2488
        %2490 = vdwg.mxu0
        %2491 = vmatprep.subr.mxu0 0.0
        %2492 = vmatpush1.msra.mxu0 %v1971
        %2493 = vmatprep.subr.mxu0 0.0
        %2494 = vmatpush1.msra.mxu0 %v1976
        %2495 = vmatprep.subr.mxu0 0.0
        %2496 = vmatpush1.msra.mxu0 %v1981
        %2497 = vmatprep.subr.mxu0 0.0
        %2498 = vmatpush1.msra.mxu0 %v1986
        %2499 = vmatprep.subr.mxu0 0.0
        %2500 = vmatpush1.msra.mxu0 %v1991
        %2501 = vmatprep.subr.mxu0 0.0
        %2502 = vmatpush1.msra.mxu0 %v1996
        %2503 = vmatprep.subr.mxu0 0.0
        %2504 = vmatpush1.msra.mxu0 %v2001
        %2505 = vmatprep.subr.mxu0 0.0
        %2506 = vmatpush1.msra.mxu0 %v2006
        %2507 = vmatprep.subr.mxu0 0.0
        %2508 = vmatpush1.msra.mxu0 %v2011
        %2509 = vmatprep.subr.mxu0 0.0
        %2510 = vmatpush1.msra.mxu0 %v2016
        %2511 = vmatprep.subr.mxu0 0.0
        %2512 = vmatpush1.msra.mxu0 %v2021
        %2513 = vmatprep.subr.mxu0 0.0
        %2514 = vmatpush1.msra.mxu0 %v2026
        %2515 = vmatprep.subr.mxu0 0.0
        %2516 = vmatpush1.msra.mxu0 %v2243
        %2517 = vmatprep.subr.mxu0 0.0
        %2518 = vmatpush1.msra.mxu0 %v2248
        %2519 = vmatprep.subr.mxu0 0.0
        %2520 = vmatpush1.msra.mxu0 %v2253
        %2521 = vmatprep.subr.mxu0 0.0
        %2522 = vmatpush1.msra.mxu0 %v2258
        %2523 = vmatprep.subr.mxu0 0.0
        %2524 = vmatpush1.msra.mxu0 %v2263
        %2525 = vmatprep.subr.mxu0 0.0
        %2526 = vmatpush1.msra.mxu0 %v2268
        %2527 = vmatprep.subr.mxu0 0.0
        %2528 = vmatpush1.msra.mxu0 %v2335
        %2529 = vmatprep.subr.mxu0 0.0
        %2530 = vmatpush1.msra.mxu0 0.0
        %2531 = vmatprep.subr.mxu0 0.0
        %2532 = vmatpush1.msra.mxu0 0.0
        %2533 = vmatprep.subr.mxu0 0.0
        %2534 = vmatpush1.msra.mxu0 0.0
        %2535 = vmatprep.subr.mxu0 0.0
        %2536 = vmatpush1.msra.mxu0 0.0
        %2537 = vmatprep.subr.mxu0 0.0
        %2538 = vmatpush1.msra.mxu0 0.0
        %2539 = vmatprep.subr.mxu0 0.0
        %2540 = vmatpush1.msra.mxu0 0.0
        %2541 = vmatprep.subr.mxu0 0.0
        %2542 = vmatpush1.msra.mxu0 0.0
        %2543 = vmatprep.subr.mxu0 0.0
        %2544 = vmatpush1.msra.mxu0 0.0
        %2545 = vmatprep.subr.mxu0 0.0
        %2546 = vmatpush1.msra.mxu0 0.0
        %2547 = vmatprep.subr.mxu0 0.0
        %2548 = vmatpush1.msra.mxu0 0.0
        %2549 = vmatprep.subr.mxu0 0.0
        %2550 = vmatpush1.msra.mxu0 0.0
        %2551 = vmatprep.subr.mxu0 0.0
        %2552 = vmatpush1.msra.mxu0 0.0
        %2553 = vmatprep.subr.mxu0 0.0
        %2554 = vmatpush1.msra.mxu0 0.0
        %2555 = vmatprep.mubr.f32.mxu0 %v2322
        %2556 = vmatmul.mubr.f32.gmra.mrb[0].mxu0 %v2304
        %v2557 = vpop.f32.mrb[0].mxu0
        %v2558 = vadd.f32 %v2313, %v2557
        %v2559 = vpop.f32.mrb[0].mxu0
        %2560 = vmatprep.mubr.f32.mxu0 %v2325
        %2561 = vmatmul.mubr.f32.gmra.mrb[0].mxu0 %v2306
        %v2562 = vpop.f32.mrb[0].mxu0
        %v2563 = vadd.f32 %v2318, %v2562
        %v2564 = vpop.f32.mrb[0].mxu0
        %2565 = vdwg.mxu0
        %v2566 = vmax.f32 %v2404, 0.0
        %v2567 = vmax.f32 %v2406, 0.0
        %v2568 = vmax.f32 %v2481, 0.0
        %v2569 = vmax.f32 %v2483, 0.0
        %v2570 = vmax.f32 %v2558, 0.0
        %v2571 = vmax.f32 %v2410, 0.0
        %v2572 = vmax.f32 %v2412, 0.0
        %v2573 = vmax.f32 %v2487, 0.0
        %v2574 = vmax.f32 %v2489, 0.0
        %v2575 = vmax.f32 %v2563, 0.0
        %2586 = vrot.lane.b32.xlu0 %v2566, 126
        %v2587 = vpop.permute.xlu0 %2586
        %2588 = vrot.lane.b32.xlu0 %v2567, 126
        %v2589 = vpop.permute.xlu0 %2588
        %2590 = vrot.lane.b32.xlu0 %v2568, 126
        %v2591 = vpop.permute.xlu0 %2590
        %2592 = vrot.lane.b32.xlu0 %v2569, 126
        %v2593 = vpop.permute.xlu0 %2592
        %2594 = vrot.lane.b32.xlu0 %v2570, 126
        %v2595 = vpop.permute.xlu0 %2594
        %2596 = vrot.lane.b32.xlu0 %v2571, 126
        %v2597 = vpop.permute.xlu0 %2596
        %2598 = vrot.lane.b32.xlu0 %v2572, 126
        %v2599 = vpop.permute.xlu0 %2598
        %2600 = vrot.lane.b32.xlu0 %v2573, 126
        %v2601 = vpop.permute.xlu0 %2600
        %2602 = vrot.lane.b32.xlu0 %v2574, 126
        %v2603 = vpop.permute.xlu0 %2602
        %2604 = vrot.lane.b32.xlu0 %v2575, 126
        %v2605 = vpop.permute.xlu0 %2604
        %v2606 = vsel %vm481, %v2587, %v2589
        %v2607 = vsel %vm481, %v2589, %v2591
        %v2608 = vsel %vm481, %v2591, %v2593
        %v2609 = vsel %vm481, %v2593, %v2595
        %v2610 = vsel %vm481, %v2597, %v2599
        %v2611 = vsel %vm481, %v2599, %v2601
        %v2612 = vsel %vm481, %v2601, %v2603
        %v2613 = vsel %vm481, %v2603, %v2605
        %v2624 = vmax.f32 %v2566, %v2606
        %v2625 = vmax.f32 %v2567, %v2607
        %v2626 = vmax.f32 %v2568, %v2608
        %v2627 = vmax.f32 %v2569, %v2609
        %v2628 = vmax.f32 %v2570, %v2595
        %v2629 = vmax.f32 %v2571, %v2610
        %v2630 = vmax.f32 %v2572, %v2611
        %v2631 = vmax.f32 %v2573, %v2612
        %v2632 = vmax.f32 %v2574, %v2613
        %v2633 = vmax.f32 %v2575, %v2605
        %2644 = vrot.lane.b32.xlu0 %v2624, 64
        %v2645 = vpop.permute.xlu0 %2644
        %2646 = vrot.lane.b32.xlu0 %v2625, 64
        %v2647 = vpop.permute.xlu0 %2646
        %2648 = vrot.lane.b32.xlu0 %v2626, 64
        %v2649 = vpop.permute.xlu0 %2648
        %2650 = vrot.lane.b32.xlu0 %v2627, 64
        %v2651 = vpop.permute.xlu0 %2650
        %2652 = vrot.lane.b32.xlu0 %v2628, 64
        %v2653 = vpop.permute.xlu0 %2652
        %2654 = vrot.lane.b32.xlu0 %v2629, 64
        %v2655 = vpop.permute.xlu0 %2654
        %2656 = vrot.lane.b32.xlu0 %v2630, 64
        %v2657 = vpop.permute.xlu0 %2656
        %2658 = vrot.lane.b32.xlu0 %v2631, 64
        %v2659 = vpop.permute.xlu0 %2658
        %2660 = vrot.lane.b32.xlu0 %v2632, 64
        %v2661 = vpop.permute.xlu0 %2660
        %2662 = vrot.lane.b32.xlu0 %v2633, 64
        %v2663 = vpop.permute.xlu0 %2662
        %v2664 = vsel %vm760, %v2645, %v2647
        %v2665 = vsel %vm760, %v2647, %v2649
        %v2666 = vsel %vm760, %v2649, %v2651
        %v2667 = vsel %vm760, %v2651, %v2653
        %v2668 = vsel %vm760, %v2655, %v2657
        %v2669 = vsel %vm760, %v2657, %v2659
        %v2670 = vsel %vm760, %v2659, %v2661
        %v2671 = vsel %vm760, %v2661, %v2663
        %v2682 = vmax.f32 %v2624, %v2664
        %v2683 = vmax.f32 %v2625, %v2665
        %v2684 = vmax.f32 %v2626, %v2666
        %v2685 = vmax.f32 %v2627, %v2667
        %v2686 = vmax.f32 %v2628, %v2653
        %v2687 = vmax.f32 %v2629, %v2668
        %v2688 = vmax.f32 %v2630, %v2669
        %v2689 = vmax.f32 %v2631, %v2670
        %v2690 = vmax.f32 %v2632, %v2671
        %v2691 = vmax.f32 %v2633, %v2663
        %v2692 = vld [vmem:[%s5] sm:$0xff]
        %v2693 = vld [vmem:[%s5 + $0x8] sm:$0xff]
        %v2694 = vld [vmem:[%s5 + $0x10] sm:$0xff]
        %v2695 = vld [vmem:[%s5 + $0x18] sm:$0xff]
        %v2696 = vld [vmem:[%s5 + $0x20] sm:$0xff]
        %v2697 = vld [vmem:[%s5 + $0x28] sm:$0xff]
        %v2698 = vld [vmem:[%s5 + $0x30] sm:$0xff]
        %v2699 = vld [vmem:[%s5 + $0x38] sm:$0xff]
        %v2700 = vld [vmem:[%s5 + $0x40] sm:$0xff]
        %v2701 = vld [vmem:[%s5 + $0x48] sm:$0xff]
        %v2702 = vld [vmem:[%s5 + $0x50] sm:$0xff]
        %v2703 = vld [vmem:[%s5 + $0x58] sm:$0xff]
        %v2704 = vld [vmem:[%s5 + $0x60] sm:$0xff]
        %v2705 = vld [vmem:[%s5 + $0x68] sm:$0xff]
        %v2706 = vld [vmem:[%s5 + $0x70] sm:$0xff]
        %v2707 = vld [vmem:[%s5 + $0x78] sm:$0xff]
        %v2708 = vld [vmem:[%s5 + $0x80] sm:$0xff]
        %v2709 = vld [vmem:[%s5 + $0x88] sm:$0xff]
        %v2710 = vld [vmem:[%s5 + $0x90] sm:$0xff]
        %v2711 = vld [vmem:[%s5 + $0x98] sm:$0xff]
        %v2712 = vld [vmem:[%s5 + $0xa0] sm:$0xff]
        %v2713 = vld [vmem:[%s5 + $0xa8] sm:$0xff]
        %v2714 = vld [vmem:[%s5 + $0xb0] sm:$0xff]
        %v2715 = vld [vmem:[%s5 + $0xb8] sm:$0xff]
        %v2716 = vld [vmem:[%s5 + $0xc0] sm:$0xff]
        %v2717 = vld [vmem:[%s5 + $0xc8] sm:$0xff]
        %v2718 = vld [vmem:[%s5 + $0xd0] sm:$0xff]
        %v2719 = vld [vmem:[%s5 + $0xd8] sm:$0xff]
        %v2720 = vld [vmem:[%s5 + $0xe0] sm:$0xff]
        %v2721 = vld [vmem:[%s5 + $0xe8] sm:$0xff]
        %v2722 = vld [vmem:[%s5 + $0xf0] sm:$0xff]
        %v2723 = vld [vmem:[%s5 + $0xf8] sm:$0xff]
        %v2724 = vld [vmem:[%s5 + $0x100] sm:$0xff]
        %v2725 = vld [vmem:[%s5 + $0x108] sm:$0xff]
        %v2726 = vld [vmem:[%s5 + $0x110] sm:$0xff]
        %v2727 = vld [vmem:[%s5 + $0x118] sm:$0xff]
        %v2728 = vld [vmem:[%s5 + $0x120] sm:$0xff]
        %v2729 = vld [vmem:[%s5 + $0x128] sm:$0xff]
        %v2730 = vld [vmem:[%s5 + $0x130] sm:$0xff]
        %v2731 = vld [vmem:[%s5 + $0x138] sm:$0xff]
        %v2732 = vld [vmem:[%s5 + $0x140] sm:$0xff]
        %v2733 = vld [vmem:[%s5 + $0x148] sm:$0xff]
        %v2734 = vld [vmem:[%s5 + $0x150] sm:$0xff]
        %v2735 = vld [vmem:[%s5 + $0x158] sm:$0xff]
        %v2736 = vld [vmem:[%s5 + $0x160] sm:$0xff]
        %v2737 = vld [vmem:[%s5 + $0x168] sm:$0xff]
        %v2738 = vld [vmem:[%s5 + $0x170] sm:$0xff]
        %v2739 = vld [vmem:[%s5 + $0x178] sm:$0xff]
        %v2740 = vld [vmem:[%s5 + $0x180] sm:$0xff]
        %v2741 = vld [vmem:[%s5 + $0x188] sm:$0xff]
        %v2742 = vld [vmem:[%s5 + $0x190] sm:$0xff]
        %v2743 = vld [vmem:[%s5 + $0x198] sm:$0xff]
        %v2744 = vld [vmem:[%s5 + $0x1a0] sm:$0xff]
        %v2745 = vld [vmem:[%s5 + $0x1a8] sm:$0xff]
        %v2746 = vld [vmem:[%s5 + $0x1b0] sm:$0xff]
        %v2747 = vld [vmem:[%s5 + $0x1b8] sm:$0xff]
        %v2748 = vld [vmem:[%s5 + $0x1c0] sm:$0xff]
        %v2749 = vld [vmem:[%s5 + $0x1c8] sm:$0xff]
        %v2750 = vld [vmem:[%s5 + $0x1d0] sm:$0xff]
        %v2751 = vld [vmem:[%s5 + $0x1d8] sm:$0xff]
        %v2752 = vld [vmem:[%s5 + $0x1e0] sm:$0xff]
        %v2753 = vld [vmem:[%s5 + $0x1e8] sm:$0xff]
        %v2754 = vld [vmem:[%s5 + $0x1f0] sm:$0xff]
        %v2755 = vld [vmem:[%s5 + $0x1f8] sm:$0xff]
        %v2756 = vld [vmem:[%s5 + $0x200] sm:$0xff]
        %v2757 = vld [vmem:[%s5 + $0x208] sm:$0xff]
        %v2758 = vld [vmem:[%s5 + $0x210] sm:$0x1]
        %vm2759 = vcmask 138240
        %v2761 = vsel %vm2759, %v2686, 0
        %v2764 = vsel %vm2759, %v2691, 0
        %v2767 = vsel %vm947, %v2758, 0
        %2769 = vmatprep.subr.mxu0 0.0
        %2770 = vmatpush1.msra.mxu0 %v2692
        %2771 = vmatprep.subr.mxu0 0.0
        %2772 = vmatpush1.msra.mxu0 %v2693
        %2773 = vmatprep.subr.mxu0 0.0
        %2774 = vmatpush1.msra.mxu0 %v2694
        %2775 = vmatprep.subr.mxu0 0.0
        %2776 = vmatpush1.msra.mxu0 %v2695
        %2777 = vmatprep.subr.mxu0 0.0
        %2778 = vmatpush1.msra.mxu0 %v2696
        %2779 = vmatprep.subr.mxu0 0.0
        %2780 = vmatpush1.msra.mxu0 %v2697
        %2781 = vmatprep.subr.mxu0 0.0
        %2782 = vmatpush1.msra.mxu0 %v2698
        %2783 = vmatprep.subr.mxu0 0.0
        %2784 = vmatpush1.msra.mxu0 %v2699
        %2785 = vmatprep.subr.mxu0 0.0
        %2786 = vmatpush1.msra.mxu0 %v2700
        %2787 = vmatprep.subr.mxu0 0.0
        %2788 = vmatpush1.msra.mxu0 %v2701
        %2789 = vmatprep.subr.mxu0 0.0
        %2790 = vmatpush1.msra.mxu0 %v2702
        %2791 = vmatprep.subr.mxu0 0.0
        %2792 = vmatpush1.msra.mxu0 %v2703
        %2793 = vmatprep.subr.mxu0 0.0
        %2794 = vmatpush1.msra.mxu0 %v2704
        %2795 = vmatprep.subr.mxu0 0.0
        %2796 = vmatpush1.msra.mxu0 %v2705
        %2797 = vmatprep.subr.mxu0 0.0
        %2798 = vmatpush1.msra.mxu0 %v2706
        %2799 = vmatprep.subr.mxu0 0.0
        %2800 = vmatpush1.msra.mxu0 %v2707
        %2801 = vmatprep.subr.mxu0 0.0
        %2802 = vmatpush1.msra.mxu0 %v2708
        %2803 = vmatprep.subr.mxu0 0.0
        %2804 = vmatpush1.msra.mxu0 %v2709
        %2805 = vmatprep.subr.mxu0 0.0
        %2806 = vmatpush1.msra.mxu0 %v2710
        %2807 = vmatprep.subr.mxu0 0.0
        %2808 = vmatpush1.msra.mxu0 %v2711
        %2809 = vmatprep.subr.mxu0 0.0
        %2810 = vmatpush1.msra.mxu0 %v2712
        %2811 = vmatprep.subr.mxu0 0.0
        %2812 = vmatpush1.msra.mxu0 %v2713
        %2813 = vmatprep.subr.mxu0 0.0
        %2814 = vmatpush1.msra.mxu0 %v2714
        %2815 = vmatprep.subr.mxu0 0.0
        %2816 = vmatpush1.msra.mxu0 %v2715
        %2817 = vmatprep.subr.mxu0 0.0
        %2818 = vmatpush1.msra.mxu0 %v2716
        %2819 = vmatprep.subr.mxu0 0.0
        %2820 = vmatpush1.msra.mxu0 %v2717
        %2821 = vmatprep.subr.mxu0 0.0
        %2822 = vmatpush1.msra.mxu0 %v2718
        %2823 = vmatprep.subr.mxu0 0.0
        %2824 = vmatpush1.msra.mxu0 %v2719
        %2825 = vmatprep.subr.mxu0 0.0
        %2826 = vmatpush1.msra.mxu0 %v2720
        %2827 = vmatprep.subr.mxu0 0.0
        %2828 = vmatpush1.msra.mxu0 %v2721
        %2829 = vmatprep.subr.mxu0 0.0
        %2830 = vmatpush1.msra.mxu0 %v2722
        %2831 = vmatprep.subr.mxu0 0.0
        %2832 = vmatpush1.msra.mxu0 %v2723
        %2833 = vmatprep.mubr.f32.mxu0 %v2683
        %2834 = vmatmul.mubr.f32.gmra.mrb[0].mxu0 %v2682
        %v2835 = vpop.f32.mrb[0].mxu0
        %v2836 = vadd.f32 0.0, %v2835
        %v2837 = vpop.f32.mrb[0].mxu0
        %2838 = vmatprep.mubr.f32.mxu0 %v2688
        %2839 = vmatmul.mubr.f32.gmra.mrb[0].mxu0 %v2687
        %v2840 = vpop.f32.mrb[0].mxu0
        %v2841 = vadd.f32 0.0, %v2840
        %v2842 = vpop.f32.mrb[0].mxu0
        %2843 = vdwg.mxu0
        %2844 = vmatprep.subr.mxu0 0.0
        %2845 = vmatpush1.msra.mxu0 %v2724
        %2846 = vmatprep.subr.mxu0 0.0
        %2847 = vmatpush1.msra.mxu0 %v2725
        %2848 = vmatprep.subr.mxu0 0.0
        %2849 = vmatpush1.msra.mxu0 %v2726
        %2850 = vmatprep.subr.mxu0 0.0
        %2851 = vmatpush1.msra.mxu0 %v2727
        %2852 = vmatprep.subr.mxu0 0.0
        %2853 = vmatpush1.msra.mxu0 %v2728
        %2854 = vmatprep.subr.mxu0 0.0
        %2855 = vmatpush1.msra.mxu0 %v2729
        %2856 = vmatprep.subr.mxu0 0.0
        %2857 = vmatpush1.msra.mxu0 %v2730
        %2858 = vmatprep.subr.mxu0 0.0
        %2859 = vmatpush1.msra.mxu0 %v2731
        %2860 = vmatprep.subr.mxu0 0.0
        %2861 = vmatpush1.msra.mxu0 %v2732
        %2862 = vmatprep.subr.mxu0 0.0
        %2863 = vmatpush1.msra.mxu0 %v2733
        %2864 = vmatprep.subr.mxu0 0.0
        %2865 = vmatpush1.msra.mxu0 %v2734
        %2866 = vmatprep.subr.mxu0 0.0
        %2867 = vmatpush1.msra.mxu0 %v2735
        %2868 = vmatprep.subr.mxu0 0.0
        %2869 = vmatpush1.msra.mxu0 %v2736
        %2870 = vmatprep.subr.mxu0 0.0
        %2871 = vmatpush1.msra.mxu0 %v2737
        %2872 = vmatprep.subr.mxu0 0.0
        %2873 = vmatpush1.msra.mxu0 %v2738
        %2874 = vmatprep.subr.mxu0 0.0
        %2875 = vmatpush1.msra.mxu0 %v2739
        %2876 = vmatprep.subr.mxu0 0.0
        %2877 = vmatpush1.msra.mxu0 %v2740
        %2878 = vmatprep.subr.mxu0 0.0
        %2879 = vmatpush1.msra.mxu0 %v2741
        %2880 = vmatprep.subr.mxu0 0.0
        %2881 = vmatpush1.msra.mxu0 %v2742
        %2882 = vmatprep.subr.mxu0 0.0
        %2883 = vmatpush1.msra.mxu0 %v2743
        %2884 = vmatprep.subr.mxu0 0.0
        %2885 = vmatpush1.msra.mxu0 %v2744
        %2886 = vmatprep.subr.mxu0 0.0
        %2887 = vmatpush1.msra.mxu0 %v2745
        %2888 = vmatprep.subr.mxu0 0.0
        %2889 = vmatpush1.msra.mxu0 %v2746
        %2890 = vmatprep.subr.mxu0 0.0
        %2891 = vmatpush1.msra.mxu0 %v2747
        %2892 = vmatprep.subr.mxu0 0.0
        %2893 = vmatpush1.msra.mxu0 %v2748
        %2894 = vmatprep.subr.mxu0 0.0
        %2895 = vmatpush1.msra.mxu0 %v2749
        %2896 = vmatprep.subr.mxu0 0.0
        %2897 = vmatpush1.msra.mxu0 %v2750
        %2898 = vmatprep.subr.mxu0 0.0
        %2899 = vmatpush1.msra.mxu0 %v2751
        %2900 = vmatprep.subr.mxu0 0.0
        %2901 = vmatpush1.msra.mxu0 %v2752
        %2902 = vmatprep.subr.mxu0 0.0
        %2903 = vmatpush1.msra.mxu0 %v2753
        %2904 = vmatprep.subr.mxu0 0.0
        %2905 = vmatpush1.msra.mxu0 %v2754
        %2906 = vmatprep.subr.mxu0 0.0
        %2907 = vmatpush1.msra.mxu0 %v2755
        %2908 = vmatprep.mubr.f32.mxu0 %v2685
        %2909 = vmatmul.mubr.f32.gmra.mrb[0].mxu0 %v2684
        %v2910 = vpop.f32.mrb[0].mxu0
        %v2911 = vadd.f32 %v2836, %v2910
        %v2912 = vpop.f32.mrb[0].mxu0
        %2913 = vmatprep.mubr.f32.mxu0 %v2690
        %2914 = vmatmul.mubr.f32.gmra.mrb[0].mxu0 %v2689
        %v2915 = vpop.f32.mrb[0].mxu0
        %v2916 = vadd.f32 %v2841, %v2915
        %v2917 = vpop.f32.mrb[0].mxu0
        %2918 = vdwg.mxu0
        %2919 = vmatprep.subr.mxu0 0.0
        %2920 = vmatpush1.msra.mxu0 %v2756
        %2921 = vmatprep.subr.mxu0 0.0
        %2922 = vmatpush1.msra.mxu0 %v2757
        %2923 = vmatprep.subr.mxu0 0.0
        %2924 = vmatpush1.msra.mxu0 %v2767
        %2925 = vmatprep.subr.mxu0 0.0
        %2926 = vmatpush1.msra.mxu0 0.0
        %2927 = vmatprep.subr.mxu0 0.0
        %2928 = vmatpush1.msra.mxu0 0.0
        %2929 = vmatprep.subr.mxu0 0.0
        %2930 = vmatpush1.msra.mxu0 0.0
        %2931 = vmatprep.subr.mxu0 0.0
        %2932 = vmatpush1.msra.mxu0 0.0
        %2933 = vmatprep.subr.mxu0 0.0
        %2934 = vmatpush1.msra.mxu0 0.0
        %2935 = vmatprep.subr.mxu0 0.0
        %2936 = vmatpush1.msra.mxu0 0.0
        %2937 = vmatprep.subr.mxu0 0.0
        %2938 = vmatpush1.msra.mxu0 0.0
        %2939 = vmatprep.subr.mxu0 0.0
        %2940 = vmatpush1.msra.mxu0 0.0
        %2941 = vmatprep.subr.mxu0 0.0
        %2942 = vmatpush1.msra.mxu0 0.0
        %2943 = vmatprep.subr.mxu0 0.0
        %2944 = vmatpush1.msra.mxu0 0.0
        %2945 = vmatprep.subr.mxu0 0.0
        %2946 = vmatpush1.msra.mxu0 0.0
        %2947 = vmatprep.subr.mxu0 0.0
        %2948 = vmatpush1.msra.mxu0 0.0
        %2949 = vmatprep.subr.mxu0 0.0
        %2950 = vmatpush1.msra.mxu0 0.0
        %2951 = vmatprep.subr.mxu0 0.0
        %2952 = vmatpush1.msra.mxu0 0.0
        %2953 = vmatprep.subr.mxu0 0.0
        %2954 = vmatpush1.msra.mxu0 0.0
        %2955 = vmatprep.subr.mxu0 0.0
        %2956 = vmatpush1.msra.mxu0 0.0
        %2957 = vmatprep.subr.mxu0 0.0
        %2958 = vmatpush1.msra.mxu0 0.0
        %2959 = vmatprep.subr.mxu0 0.0
        %2960 = vmatpush1.msra.mxu0 0.0
        %2961 = vmatprep.subr.mxu0 0.0
        %2962 = vmatpush1.msra.mxu0 0.0
        %2963 = vmatprep.subr.mxu0 0.0
        %2964 = vmatpush1.msra.mxu0 0.0
        %2965 = vmatprep.subr.mxu0 0.0
        %2966 = vmatpush1.msra.mxu0 0.0
        %2967 = vmatprep.subr.mxu0 0.0
        %2968 = vmatpush1.msra.mxu0 0.0
        %2969 = vmatprep.subr.mxu0 0.0
        %2970 = vmatpush1.msra.mxu0 0.0
        %2971 = vmatprep.subr.mxu0 0.0
        %2972 = vmatpush1.msra.mxu0 0.0
        %2973 = vmatprep.subr.mxu0 0.0
        %2974 = vmatpush1.msra.mxu0 0.0
        %2975 = vmatprep.subr.mxu0 0.0
        %2976 = vmatpush1.msra.mxu0 0.0
        %2977 = vmatprep.subr.mxu0 0.0
        %2978 = vmatpush1.msra.mxu0 0.0
        %2979 = vmatprep.subr.mxu0 0.0
        %2980 = vmatpush1.msra.mxu0 0.0
        %2981 = vmatprep.subr.mxu0 0.0
        %2982 = vmatpush1.msra.mxu0 0.0
        %2983 = vmatprep.mubr.f32.mxu0 0.0
        %2984 = vmatmul.mubr.f32.gmra.mrb[0].mxu0 %v2761
        %v2985 = vpop.f32.mrb[0].mxu0
        %v2986 = vadd.f32 %v2911, %v2985
        %v2987 = vpop.f32.mrb[0].mxu0
        %2988 = vmatprep.mubr.f32.mxu0 0.0
        %2989 = vmatmul.mubr.f32.gmra.mrb[0].mxu0 %v2764
        %v2990 = vpop.f32.mrb[0].mxu0
        %v2991 = vadd.f32 %v2916, %v2990
        %v2992 = vpop.f32.mrb[0].mxu0
        %2993 = vdwg.mxu0
        %v2994 = vld [vmem:[%s6] sm:$0xff]
        %v2995 = vld [vmem:[%s6 + $0x8] sm:$0xff]
        %v2996 = vld [vmem:[%s6 + $0x10] sm:$0xff]
        %v2997 = vld [vmem:[%s6 + $0x18] sm:$0x1]
        %s2998 = scalar_lea.vmem %s6, 32
        %v2999 = vld [vmem:[%s2998] sm:$0xff]
        %v3000 = vld [vmem:[%s2998 + $0x8] sm:$0xff]
        %v3001 = vld [vmem:[%s2998 + $0x10] sm:$0xff]
        %v3002 = vld [vmem:[%s2998 + $0x18] sm:$0x1]
        %v3004 = vrot.slane %v2986, 1
        %vm3005 = vcmask 203776
        %v3006 = vsel %vm3005, %v3004, 0
        %v3009 = vsel %vm947, %v3002, 0
        %3011 = vmatprep.subr.mxu0 0.0
        %3012 = vmatpush1.msra.mxu0 %v2999
        %3013 = vmatprep.subr.mxu0 0.0
        %3014 = vmatpush1.msra.mxu0 %v3000
        %3015 = vmatprep.subr.mxu0 0.0
        %3016 = vmatpush1.msra.mxu0 %v3001
        %3017 = vmatprep.subr.mxu0 0.0
        %3018 = vmatpush1.msra.mxu0 %v3009
        %3019 = vmatprep.subr.mxu0 0.0
        %3020 = vmatpush1.msra.mxu0 0.0
        %3021 = vmatprep.subr.mxu0 0.0
        %3022 = vmatpush1.msra.mxu0 0.0
        %3023 = vmatprep.subr.mxu0 0.0
        %3024 = vmatpush1.msra.mxu0 0.0
        %3025 = vmatprep.subr.mxu0 0.0
        %3026 = vmatpush1.msra.mxu0 0.0
        %3027 = vmatprep.subr.mxu0 0.0
        %3028 = vmatpush1.msra.mxu0 0.0
        %3029 = vmatprep.subr.mxu0 0.0
        %3030 = vmatpush1.msra.mxu0 0.0
        %3031 = vmatprep.subr.mxu0 0.0
        %3032 = vmatpush1.msra.mxu0 0.0
        %3033 = vmatprep.subr.mxu0 0.0
        %3034 = vmatpush1.msra.mxu0 0.0
        %3035 = vmatprep.subr.mxu0 0.0
        %3036 = vmatpush1.msra.mxu0 0.0
        %3037 = vmatprep.subr.mxu0 0.0
        %3038 = vmatpush1.msra.mxu0 0.0
        %3039 = vmatprep.subr.mxu0 0.0
        %3040 = vmatpush1.msra.mxu0 0.0
        %3041 = vmatprep.subr.mxu0 0.0
        %3042 = vmatpush1.msra.mxu0 0.0
        %3043 = vmatprep.subr.mxu0 0.0
        %3044 = vmatpush1.msra.mxu0 0.0
        %3045 = vmatprep.subr.mxu0 0.0
        %3046 = vmatpush1.msra.mxu0 0.0
        %3047 = vmatprep.subr.mxu0 0.0
        %3048 = vmatpush1.msra.mxu0 0.0
        %3049 = vmatprep.subr.mxu0 0.0
        %3050 = vmatpush1.msra.mxu0 0.0
        %3051 = vmatprep.subr.mxu0 0.0
        %3052 = vmatpush1.msra.mxu0 0.0
        %3053 = vmatprep.subr.mxu0 0.0
        %3054 = vmatpush1.msra.mxu0 0.0
        %3055 = vmatprep.subr.mxu0 0.0
        %3056 = vmatpush1.msra.mxu0 0.0
        %3057 = vmatprep.subr.mxu0 0.0
        %3058 = vmatpush1.msra.mxu0 0.0
        %3059 = vmatprep.subr.mxu0 0.0
        %3060 = vmatpush1.msra.mxu0 0.0
        %3061 = vmatprep.subr.mxu0 0.0
        %3062 = vmatpush1.msra.mxu0 0.0
        %3063 = vmatprep.subr.mxu0 0.0
        %3064 = vmatpush1.msra.mxu0 0.0
        %3065 = vmatprep.subr.mxu0 0.0
        %3066 = vmatpush1.msra.mxu0 0.0
        %3067 = vmatprep.subr.mxu0 0.0
        %3068 = vmatpush1.msra.mxu0 0.0
        %3069 = vmatprep.subr.mxu0 0.0
        %3070 = vmatpush1.msra.mxu0 0.0
        %3071 = vmatprep.subr.mxu0 0.0
        %3072 = vmatpush1.msra.mxu0 0.0
        %3073 = vmatprep.subr.mxu0 0.0
        %3074 = vmatpush1.msra.mxu0 0.0
        %3075 = vmatprep.mubr.f32.mxu0 0.0
        %3076 = vmatmul.mubr.f32.gmra.mrb[0].mxu0 %v3006
        %v3077 = vpop.f32.mrb[0].mxu0
        %v3078 = vadd.f32 0.0, %v3077
        %v3079 = vpop.f32.mrb[0].mxu0
        %3080 = vdwg.mxu0
        %s3081 = scalar_lea.vmem %s6, 64
        %v3082 = vld [vmem:[%s3081] sm:$0xff]
        %v3083 = vld [vmem:[%s3081 + $0x8] sm:$0xff]
        %v3084 = vld [vmem:[%s3081 + $0x10] sm:$0xff]
        %v3085 = vld [vmem:[%s3081 + $0x18] sm:$0x1]
        %s3086 = scalar_lea.vmem %s6, 96
        %v3087 = vld [vmem:[%s3086] sm:$0xff]
        %v3088 = vld [vmem:[%s3086 + $0x8] sm:$0xff]
        %v3089 = vld [vmem:[%s3086 + $0x10] sm:$0xff]
        %v3090 = vld [vmem:[%s3086 + $0x18] sm:$0x1]
        %v3091 = vrot.slane %v2986, 3
        %v3092 = vsel %vm3005, %v3091, 0
        %v3095 = vsel %vm947, %v3090, 0
        %3097 = vmatprep.subr.mxu0 0.0
        %3098 = vmatpush1.msra.mxu0 %v3087
        %3099 = vmatprep.subr.mxu0 0.0
        %3100 = vmatpush1.msra.mxu0 %v3088
        %3101 = vmatprep.subr.mxu0 0.0
        %3102 = vmatpush1.msra.mxu0 %v3089
        %3103 = vmatprep.subr.mxu0 0.0
        %3104 = vmatpush1.msra.mxu0 %v3095
        %3105 = vmatprep.subr.mxu0 0.0
        %3106 = vmatpush1.msra.mxu0 0.0
        %3107 = vmatprep.subr.mxu0 0.0
        %3108 = vmatpush1.msra.mxu0 0.0
        %3109 = vmatprep.subr.mxu0 0.0
        %3110 = vmatpush1.msra.mxu0 0.0
        %3111 = vmatprep.subr.mxu0 0.0
        %3112 = vmatpush1.msra.mxu0 0.0
        %3113 = vmatprep.subr.mxu0 0.0
        %3114 = vmatpush1.msra.mxu0 0.0
        %3115 = vmatprep.subr.mxu0 0.0
        %3116 = vmatpush1.msra.mxu0 0.0
        %3117 = vmatprep.subr.mxu0 0.0
        %3118 = vmatpush1.msra.mxu0 0.0
        %3119 = vmatprep.subr.mxu0 0.0
        %3120 = vmatpush1.msra.mxu0 0.0
        %3121 = vmatprep.subr.mxu0 0.0
        %3122 = vmatpush1.msra.mxu0 0.0
        %3123 = vmatprep.subr.mxu0 0.0
        %3124 = vmatpush1.msra.mxu0 0.0
        %3125 = vmatprep.subr.mxu0 0.0
        %3126 = vmatpush1.msra.mxu0 0.0
        %3127 = vmatprep.subr.mxu0 0.0
        %3128 = vmatpush1.msra.mxu0 0.0
        %3129 = vmatprep.subr.mxu0 0.0
        %3130 = vmatpush1.msra.mxu0 0.0
        %3131 = vmatprep.subr.mxu0 0.0
        %3132 = vmatpush1.msra.mxu0 0.0
        %3133 = vmatprep.subr.mxu0 0.0
        %3134 = vmatpush1.msra.mxu0 0.0
        %3135 = vmatprep.subr.mxu0 0.0
        %3136 = vmatpush1.msra.mxu0 0.0
        %3137 = vmatprep.subr.mxu0 0.0
        %3138 = vmatpush1.msra.mxu0 0.0
        %3139 = vmatprep.subr.mxu0 0.0
        %3140 = vmatpush1.msra.mxu0 0.0
        %3141 = vmatprep.subr.mxu0 0.0
        %3142 = vmatpush1.msra.mxu0 0.0
        %3143 = vmatprep.subr.mxu0 0.0
        %3144 = vmatpush1.msra.mxu0 0.0
        %3145 = vmatprep.subr.mxu0 0.0
        %3146 = vmatpush1.msra.mxu0 0.0
        %3147 = vmatprep.subr.mxu0 0.0
        %3148 = vmatpush1.msra.mxu0 0.0
        %3149 = vmatprep.subr.mxu0 0.0
        %3150 = vmatpush1.msra.mxu0 0.0
        %3151 = vmatprep.subr.mxu0 0.0
        %3152 = vmatpush1.msra.mxu0 0.0
        %3153 = vmatprep.subr.mxu0 0.0
        %3154 = vmatpush1.msra.mxu0 0.0
        %3155 = vmatprep.subr.mxu0 0.0
        %3156 = vmatpush1.msra.mxu0 0.0
        %3157 = vmatprep.subr.mxu0 0.0
        %3158 = vmatpush1.msra.mxu0 0.0
        %3159 = vmatprep.subr.mxu0 0.0
        %3160 = vmatpush1.msra.mxu0 0.0
        %3161 = vmatprep.mubr.f32.mxu0 0.0
        %3162 = vmatmul.mubr.f32.gmra.mrb[0].mxu0 %v3092
        %v3163 = vpop.f32.mrb[0].mxu0
        %v3164 = vadd.f32 0.0, %v3163
        %v3165 = vpop.f32.mrb[0].mxu0
        %3166 = vdwg.mxu0
        %s3167 = scalar_lea.vmem %s6, 128
        %v3168 = vld [vmem:[%s3167] sm:$0xff]
        %v3169 = vld [vmem:[%s3167 + $0x8] sm:$0xff]
        %v3170 = vld [vmem:[%s3167 + $0x10] sm:$0xff]
        %v3171 = vld [vmem:[%s3167 + $0x18] sm:$0x1]
        %s3172 = scalar_lea.vmem %s6, 160
        %v3173 = vld [vmem:[%s3172] sm:$0xff]
        %v3174 = vld [vmem:[%s3172 + $0x8] sm:$0xff]
        %v3175 = vld [vmem:[%s3172 + $0x10] sm:$0xff]
        %v3176 = vld [vmem:[%s3172 + $0x18] sm:$0x1]
        %v3177 = vrot.slane %v2986, 5
        %v3178 = vsel %vm3005, %v3177, 0
        %v3181 = vsel %vm947, %v3176, 0
        %3183 = vmatprep.subr.mxu0 0.0
        %3184 = vmatpush1.msra.mxu0 %v3173
        %3185 = vmatprep.subr.mxu0 0.0
        %3186 = vmatpush1.msra.mxu0 %v3174
        %3187 = vmatprep.subr.mxu0 0.0
        %3188 = vmatpush1.msra.mxu0 %v3175
        %3189 = vmatprep.subr.mxu0 0.0
        %3190 = vmatpush1.msra.mxu0 %v3181
        %3191 = vmatprep.subr.mxu0 0.0
        %3192 = vmatpush1.msra.mxu0 0.0
        %3193 = vmatprep.subr.mxu0 0.0
        %3194 = vmatpush1.msra.mxu0 0.0
        %3195 = vmatprep.subr.mxu0 0.0
        %3196 = vmatpush1.msra.mxu0 0.0
        %3197 = vmatprep.subr.mxu0 0.0
        %3198 = vmatpush1.msra.mxu0 0.0
        %3199 = vmatprep.subr.mxu0 0.0
        %3200 = vmatpush1.msra.mxu0 0.0
        %3201 = vmatprep.subr.mxu0 0.0
        %3202 = vmatpush1.msra.mxu0 0.0
        %3203 = vmatprep.subr.mxu0 0.0
        %3204 = vmatpush1.msra.mxu0 0.0
        %3205 = vmatprep.subr.mxu0 0.0
        %3206 = vmatpush1.msra.mxu0 0.0
        %3207 = vmatprep.subr.mxu0 0.0
        %3208 = vmatpush1.msra.mxu0 0.0
        %3209 = vmatprep.subr.mxu0 0.0
        %3210 = vmatpush1.msra.mxu0 0.0
        %3211 = vmatprep.subr.mxu0 0.0
        %3212 = vmatpush1.msra.mxu0 0.0
        %3213 = vmatprep.subr.mxu0 0.0
        %3214 = vmatpush1.msra.mxu0 0.0
        %3215 = vmatprep.subr.mxu0 0.0
        %3216 = vmatpush1.msra.mxu0 0.0
        %3217 = vmatprep.subr.mxu0 0.0
        %3218 = vmatpush1.msra.mxu0 0.0
        %3219 = vmatprep.subr.mxu0 0.0
        %3220 = vmatpush1.msra.mxu0 0.0
        %3221 = vmatprep.subr.mxu0 0.0
        %3222 = vmatpush1.msra.mxu0 0.0
        %3223 = vmatprep.subr.mxu0 0.0
        %3224 = vmatpush1.msra.mxu0 0.0
        %3225 = vmatprep.subr.mxu0 0.0
        %3226 = vmatpush1.msra.mxu0 0.0
        %3227 = vmatprep.subr.mxu0 0.0
        %3228 = vmatpush1.msra.mxu0 0.0
        %3229 = vmatprep.subr.mxu0 0.0
        %3230 = vmatpush1.msra.mxu0 0.0
        %3231 = vmatprep.subr.mxu0 0.0
        %3232 = vmatpush1.msra.mxu0 0.0
        %3233 = vmatprep.subr.mxu0 0.0
        %3234 = vmatpush1.msra.mxu0 0.0
        %3235 = vmatprep.subr.mxu0 0.0
        %3236 = vmatpush1.msra.mxu0 0.0
        %3237 = vmatprep.subr.mxu0 0.0
        %3238 = vmatpush1.msra.mxu0 0.0
        %3239 = vmatprep.subr.mxu0 0.0
        %3240 = vmatpush1.msra.mxu0 0.0
        %3241 = vmatprep.subr.mxu0 0.0
        %3242 = vmatpush1.msra.mxu0 0.0
        %3243 = vmatprep.subr.mxu0 0.0
        %3244 = vmatpush1.msra.mxu0 0.0
        %3245 = vmatprep.subr.mxu0 0.0
        %3246 = vmatpush1.msra.mxu0 0.0
        %3247 = vmatprep.mubr.f32.mxu0 0.0
        %3248 = vmatmul.mubr.f32.gmra.mrb[0].mxu0 %v3178
        %v3249 = vpop.f32.mrb[0].mxu0
        %v3250 = vadd.f32 0.0, %v3249
        %v3251 = vpop.f32.mrb[0].mxu0
        %3252 = vdwg.mxu0
        %s3253 = scalar_lea.vmem %s6, 192
        %v3254 = vld [vmem:[%s3253] sm:$0xff]
        %v3255 = vld [vmem:[%s3253 + $0x8] sm:$0xff]
        %v3256 = vld [vmem:[%s3253 + $0x10] sm:$0xff]
        %v3257 = vld [vmem:[%s3253 + $0x18] sm:$0x1]
        %s3258 = scalar_lea.vmem %s6, 224
        %v3259 = vld [vmem:[%s3258] sm:$0xff]
        %v3260 = vld [vmem:[%s3258 + $0x8] sm:$0xff]
        %v3261 = vld [vmem:[%s3258 + $0x10] sm:$0xff]
        %v3262 = vld [vmem:[%s3258 + $0x18] sm:$0x1]
        %v3263 = vrot.slane %v2986, 7
        %v3264 = vsel %vm3005, %v3263, 0
        %v3267 = vsel %vm947, %v3262, 0
        %3269 = vmatprep.subr.mxu0 0.0
        %3270 = vmatpush1.msra.mxu0 %v3259
        %3271 = vmatprep.subr.mxu0 0.0
        %3272 = vmatpush1.msra.mxu0 %v3260
        %3273 = vmatprep.subr.mxu0 0.0
        %3274 = vmatpush1.msra.mxu0 %v3261
        %3275 = vmatprep.subr.mxu0 0.0
        %3276 = vmatpush1.msra.mxu0 %v3267
        %3277 = vmatprep.subr.mxu0 0.0
        %3278 = vmatpush1.msra.mxu0 0.0
        %3279 = vmatprep.subr.mxu0 0.0
        %3280 = vmatpush1.msra.mxu0 0.0
        %3281 = vmatprep.subr.mxu0 0.0
        %3282 = vmatpush1.msra.mxu0 0.0
        %3283 = vmatprep.subr.mxu0 0.0
        %3284 = vmatpush1.msra.mxu0 0.0
        %3285 = vmatprep.subr.mxu0 0.0
        %3286 = vmatpush1.msra.mxu0 0.0
        %3287 = vmatprep.subr.mxu0 0.0
        %3288 = vmatpush1.msra.mxu0 0.0
        %3289 = vmatprep.subr.mxu0 0.0
        %3290 = vmatpush1.msra.mxu0 0.0
        %3291 = vmatprep.subr.mxu0 0.0
        %3292 = vmatpush1.msra.mxu0 0.0
        %3293 = vmatprep.subr.mxu0 0.0
        %3294 = vmatpush1.msra.mxu0 0.0
        %3295 = vmatprep.subr.mxu0 0.0
        %3296 = vmatpush1.msra.mxu0 0.0
        %3297 = vmatprep.subr.mxu0 0.0
        %3298 = vmatpush1.msra.mxu0 0.0
        %3299 = vmatprep.subr.mxu0 0.0
        %3300 = vmatpush1.msra.mxu0 0.0
        %3301 = vmatprep.subr.mxu0 0.0
        %3302 = vmatpush1.msra.mxu0 0.0
        %3303 = vmatprep.subr.mxu0 0.0
        %3304 = vmatpush1.msra.mxu0 0.0
        %3305 = vmatprep.subr.mxu0 0.0
        %3306 = vmatpush1.msra.mxu0 0.0
        %3307 = vmatprep.subr.mxu0 0.0
        %3308 = vmatpush1.msra.mxu0 0.0
        %3309 = vmatprep.subr.mxu0 0.0
        %3310 = vmatpush1.msra.mxu0 0.0
        %3311 = vmatprep.subr.mxu0 0.0
        %3312 = vmatpush1.msra.mxu0 0.0
        %3313 = vmatprep.subr.mxu0 0.0
        %3314 = vmatpush1.msra.mxu0 0.0
        %3315 = vmatprep.subr.mxu0 0.0
        %3316 = vmatpush1.msra.mxu0 0.0
        %3317 = vmatprep.subr.mxu0 0.0
        %3318 = vmatpush1.msra.mxu0 0.0
        %3319 = vmatprep.subr.mxu0 0.0
        %3320 = vmatpush1.msra.mxu0 0.0
        %3321 = vmatprep.subr.mxu0 0.0
        %3322 = vmatpush1.msra.mxu0 0.0
        %3323 = vmatprep.subr.mxu0 0.0
        %3324 = vmatpush1.msra.mxu0 0.0
        %3325 = vmatprep.subr.mxu0 0.0
        %3326 = vmatpush1.msra.mxu0 0.0
        %3327 = vmatprep.subr.mxu0 0.0
        %3328 = vmatpush1.msra.mxu0 0.0
        %3329 = vmatprep.subr.mxu0 0.0
        %3330 = vmatpush1.msra.mxu0 0.0
        %3331 = vmatprep.subr.mxu0 0.0
        %3332 = vmatpush1.msra.mxu0 0.0
        %3333 = vmatprep.mubr.f32.mxu0 0.0
        %3334 = vmatmul.mubr.f32.gmra.mrb[0].mxu0 %v3264
        %v3335 = vpop.f32.mrb[0].mxu0
        %v3336 = vadd.f32 0.0, %v3335
        %v3337 = vpop.f32.mrb[0].mxu0
        %3338 = vdwg.mxu0
        %s3339 = scalar_lea.vmem %s6, 256
        %v3340 = vld [vmem:[%s3339] sm:$0xff]
        %v3341 = vld [vmem:[%s3339 + $0x8] sm:$0xff]
        %v3342 = vld [vmem:[%s3339 + $0x10] sm:$0xff]
        %v3343 = vld [vmem:[%s3339 + $0x18] sm:$0x1]
        %s3344 = scalar_lea.vmem %s6, 288
        %v3345 = vld [vmem:[%s3344] sm:$0xff]
        %v3346 = vld [vmem:[%s3344 + $0x8] sm:$0xff]
        %v3347 = vld [vmem:[%s3344 + $0x10] sm:$0xff]
        %v3348 = vld [vmem:[%s3344 + $0x18] sm:$0x1]
        %v3350 = vrot.slane %v2991, 1
        %v3351 = vsel %vm3005, %v3350, 0
        %v3354 = vsel %vm947, %v3348, 0
        %3356 = vmatprep.subr.mxu0 0.0
        %3357 = vmatpush1.msra.mxu0 %v3345
        %3358 = vmatprep.subr.mxu0 0.0
        %3359 = vmatpush1.msra.mxu0 %v3346
        %3360 = vmatprep.subr.mxu0 0.0
        %3361 = vmatpush1.msra.mxu0 %v3347
        %3362 = vmatprep.subr.mxu0 0.0
        %3363 = vmatpush1.msra.mxu0 %v3354
        %3364 = vmatprep.subr.mxu0 0.0
        %3365 = vmatpush1.msra.mxu0 0.0
        %3366 = vmatprep.subr.mxu0 0.0
        %3367 = vmatpush1.msra.mxu0 0.0
        %3368 = vmatprep.subr.mxu0 0.0
        %3369 = vmatpush1.msra.mxu0 0.0
        %3370 = vmatprep.subr.mxu0 0.0
        %3371 = vmatpush1.msra.mxu0 0.0
        %3372 = vmatprep.subr.mxu0 0.0
        %3373 = vmatpush1.msra.mxu0 0.0
        %3374 = vmatprep.subr.mxu0 0.0
        %3375 = vmatpush1.msra.mxu0 0.0
        %3376 = vmatprep.subr.mxu0 0.0
        %3377 = vmatpush1.msra.mxu0 0.0
        %3378 = vmatprep.subr.mxu0 0.0
        %3379 = vmatpush1.msra.mxu0 0.0
        %3380 = vmatprep.subr.mxu0 0.0
        %3381 = vmatpush1.msra.mxu0 0.0
        %3382 = vmatprep.subr.mxu0 0.0
        %3383 = vmatpush1.msra.mxu0 0.0
        %3384 = vmatprep.subr.mxu0 0.0
        %3385 = vmatpush1.msra.mxu0 0.0
        %3386 = vmatprep.subr.mxu0 0.0
        %3387 = vmatpush1.msra.mxu0 0.0
        %3388 = vmatprep.subr.mxu0 0.0
        %3389 = vmatpush1.msra.mxu0 0.0
        %3390 = vmatprep.subr.mxu0 0.0
        %3391 = vmatpush1.msra.mxu0 0.0
        %3392 = vmatprep.subr.mxu0 0.0
        %3393 = vmatpush1.msra.mxu0 0.0
        %3394 = vmatprep.subr.mxu0 0.0
        %3395 = vmatpush1.msra.mxu0 0.0
        %3396 = vmatprep.subr.mxu0 0.0
        %3397 = vmatpush1.msra.mxu0 0.0
        %3398 = vmatprep.subr.mxu0 0.0
        %3399 = vmatpush1.msra.mxu0 0.0
        %3400 = vmatprep.subr.mxu0 0.0
        %3401 = vmatpush1.msra.mxu0 0.0
        %3402 = vmatprep.subr.mxu0 0.0
        %3403 = vmatpush1.msra.mxu0 0.0
        %3404 = vmatprep.subr.mxu0 0.0
        %3405 = vmatpush1.msra.mxu0 0.0
        %3406 = vmatprep.subr.mxu0 0.0
        %3407 = vmatpush1.msra.mxu0 0.0
        %3408 = vmatprep.subr.mxu0 0.0
        %3409 = vmatpush1.msra.mxu0 0.0
        %3410 = vmatprep.subr.mxu0 0.0
        %3411 = vmatpush1.msra.mxu0 0.0
        %3412 = vmatprep.subr.mxu0 0.0
        %3413 = vmatpush1.msra.mxu0 0.0
        %3414 = vmatprep.subr.mxu0 0.0
        %3415 = vmatpush1.msra.mxu0 0.0
        %3416 = vmatprep.subr.mxu0 0.0
        %3417 = vmatpush1.msra.mxu0 0.0
        %3418 = vmatprep.subr.mxu0 0.0
        %3419 = vmatpush1.msra.mxu0 0.0
        %3420 = vmatprep.mubr.f32.mxu0 0.0
        %3421 = vmatmul.mubr.f32.gmra.mrb[0].mxu0 %v3351
        %v3422 = vpop.f32.mrb[0].mxu0
        %v3423 = vadd.f32 0.0, %v3422
        %v3424 = vpop.f32.mrb[0].mxu0
        %3425 = vdwg.mxu0
        %s3426 = scalar_lea.vmem %s6, 320
        %v3427 = vld [vmem:[%s3426] sm:$0xff]
        %v3428 = vld [vmem:[%s3426 + $0x8] sm:$0xff]
        %v3429 = vld [vmem:[%s3426 + $0x10] sm:$0xff]
        %v3430 = vld [vmem:[%s3426 + $0x18] sm:$0x1]
        %s3431 = scalar_lea.vmem %s6, 352
        %v3432 = vld [vmem:[%s3431] sm:$0xff]
        %v3433 = vld [vmem:[%s3431 + $0x8] sm:$0xff]
        %v3434 = vld [vmem:[%s3431 + $0x10] sm:$0xff]
        %v3435 = vld [vmem:[%s3431 + $0x18] sm:$0x1]
        %v3436 = vrot.slane %v2991, 3
        %v3437 = vsel %vm3005, %v3436, 0
        %v3440 = vsel %vm947, %v3435, 0
        %3442 = vmatprep.subr.mxu0 0.0
        %3443 = vmatpush1.msra.mxu0 %v3432
        %3444 = vmatprep.subr.mxu0 0.0
        %3445 = vmatpush1.msra.mxu0 %v3433
        %3446 = vmatprep.subr.mxu0 0.0
        %3447 = vmatpush1.msra.mxu0 %v3434
        %3448 = vmatprep.subr.mxu0 0.0
        %3449 = vmatpush1.msra.mxu0 %v3440
        %3450 = vmatprep.subr.mxu0 0.0
        %3451 = vmatpush1.msra.mxu0 0.0
        %3452 = vmatprep.subr.mxu0 0.0
        %3453 = vmatpush1.msra.mxu0 0.0
        %3454 = vmatprep.subr.mxu0 0.0
        %3455 = vmatpush1.msra.mxu0 0.0
        %3456 = vmatprep.subr.mxu0 0.0
        %3457 = vmatpush1.msra.mxu0 0.0
        %3458 = vmatprep.subr.mxu0 0.0
        %3459 = vmatpush1.msra.mxu0 0.0
        %3460 = vmatprep.subr.mxu0 0.0
        %3461 = vmatpush1.msra.mxu0 0.0
        %3462 = vmatprep.subr.mxu0 0.0
        %3463 = vmatpush1.msra.mxu0 0.0
        %3464 = vmatprep.subr.mxu0 0.0
        %3465 = vmatpush1.msra.mxu0 0.0
        %3466 = vmatprep.subr.mxu0 0.0
        %3467 = vmatpush1.msra.mxu0 0.0
        %3468 = vmatprep.subr.mxu0 0.0
        %3469 = vmatpush1.msra.mxu0 0.0
        %3470 = vmatprep.subr.mxu0 0.0
        %3471 = vmatpush1.msra.mxu0 0.0
        %3472 = vmatprep.subr.mxu0 0.0
        %3473 = vmatpush1.msra.mxu0 0.0
        %3474 = vmatprep.subr.mxu0 0.0
        %3475 = vmatpush1.msra.mxu0 0.0
        %3476 = vmatprep.subr.mxu0 0.0
        %3477 = vmatpush1.msra.mxu0 0.0
        %3478 = vmatprep.subr.mxu0 0.0
        %3479 = vmatpush1.msra.mxu0 0.0
        %3480 = vmatprep.subr.mxu0 0.0
        %3481 = vmatpush1.msra.mxu0 0.0
        %3482 = vmatprep.subr.mxu0 0.0
        %3483 = vmatpush1.msra.mxu0 0.0
        %3484 = vmatprep.subr.mxu0 0.0
        %3485 = vmatpush1.msra.mxu0 0.0
        %3486 = vmatprep.subr.mxu0 0.0
        %3487 = vmatpush1.msra.mxu0 0.0
        %3488 = vmatprep.subr.mxu0 0.0
        %3489 = vmatpush1.msra.mxu0 0.0
        %3490 = vmatprep.subr.mxu0 0.0
        %3491 = vmatpush1.msra.mxu0 0.0
        %3492 = vmatprep.subr.mxu0 0.0
        %3493 = vmatpush1.msra.mxu0 0.0
        %3494 = vmatprep.subr.mxu0 0.0
        %3495 = vmatpush1.msra.mxu0 0.0
        %3496 = vmatprep.subr.mxu0 0.0
        %3497 = vmatpush1.msra.mxu0 0.0
        %3498 = vmatprep.subr.mxu0 0.0
        %3499 = vmatpush1.msra.mxu0 0.0
        %3500 = vmatprep.subr.mxu0 0.0
        %3501 = vmatpush1.msra.mxu0 0.0
        %3502 = vmatprep.subr.mxu0 0.0
        %3503 = vmatpush1.msra.mxu0 0.0
        %3504 = vmatprep.subr.mxu0 0.0
        %3505 = vmatpush1.msra.mxu0 0.0
        %3506 = vmatprep.mubr.f32.mxu0 0.0
        %3507 = vmatmul.mubr.f32.gmra.mrb[0].mxu0 %v3437
        %v3508 = vpop.f32.mrb[0].mxu0
        %v3509 = vadd.f32 0.0, %v3508
        %v3510 = vpop.f32.mrb[0].mxu0
        %3511 = vdwg.mxu0
        %s3512 = scalar_lea.vmem %s6, 384
        %v3513 = vld [vmem:[%s3512] sm:$0xff]
        %v3514 = vld [vmem:[%s3512 + $0x8] sm:$0xff]
        %v3515 = vld [vmem:[%s3512 + $0x10] sm:$0xff]
        %v3516 = vld [vmem:[%s3512 + $0x18] sm:$0x1]
        %s3517 = scalar_lea.vmem %s6, 416
        %v3518 = vld [vmem:[%s3517] sm:$0xff]
        %v3519 = vld [vmem:[%s3517 + $0x8] sm:$0xff]
        %v3520 = vld [vmem:[%s3517 + $0x10] sm:$0xff]
        %v3521 = vld [vmem:[%s3517 + $0x18] sm:$0x1]
        %v3522 = vrot.slane %v2991, 5
        %v3523 = vsel %vm3005, %v3522, 0
        %v3526 = vsel %vm947, %v3521, 0
        %3528 = vmatprep.subr.mxu0 0.0
        %3529 = vmatpush1.msra.mxu0 %v3518
        %3530 = vmatprep.subr.mxu0 0.0
        %3531 = vmatpush1.msra.mxu0 %v3519
        %3532 = vmatprep.subr.mxu0 0.0
        %3533 = vmatpush1.msra.mxu0 %v3520
        %3534 = vmatprep.subr.mxu0 0.0
        %3535 = vmatpush1.msra.mxu0 %v3526
        %3536 = vmatprep.subr.mxu0 0.0
        %3537 = vmatpush1.msra.mxu0 0.0
        %3538 = vmatprep.subr.mxu0 0.0
        %3539 = vmatpush1.msra.mxu0 0.0
        %3540 = vmatprep.subr.mxu0 0.0
        %3541 = vmatpush1.msra.mxu0 0.0
        %3542 = vmatprep.subr.mxu0 0.0
        %3543 = vmatpush1.msra.mxu0 0.0
        %3544 = vmatprep.subr.mxu0 0.0
        %3545 = vmatpush1.msra.mxu0 0.0
        %3546 = vmatprep.subr.mxu0 0.0
        %3547 = vmatpush1.msra.mxu0 0.0
        %3548 = vmatprep.subr.mxu0 0.0
        %3549 = vmatpush1.msra.mxu0 0.0
        %3550 = vmatprep.subr.mxu0 0.0
        %3551 = vmatpush1.msra.mxu0 0.0
        %3552 = vmatprep.subr.mxu0 0.0
        %3553 = vmatpush1.msra.mxu0 0.0
        %3554 = vmatprep.subr.mxu0 0.0
        %3555 = vmatpush1.msra.mxu0 0.0
        %3556 = vmatprep.subr.mxu0 0.0
        %3557 = vmatpush1.msra.mxu0 0.0
        %3558 = vmatprep.subr.mxu0 0.0
        %3559 = vmatpush1.msra.mxu0 0.0
        %3560 = vmatprep.subr.mxu0 0.0
        %3561 = vmatpush1.msra.mxu0 0.0
        %3562 = vmatprep.subr.mxu0 0.0
        %3563 = vmatpush1.msra.mxu0 0.0
        %3564 = vmatprep.subr.mxu0 0.0
        %3565 = vmatpush1.msra.mxu0 0.0
        %3566 = vmatprep.subr.mxu0 0.0
        %3567 = vmatpush1.msra.mxu0 0.0
        %3568 = vmatprep.subr.mxu0 0.0
        %3569 = vmatpush1.msra.mxu0 0.0
        %3570 = vmatprep.subr.mxu0 0.0
        %3571 = vmatpush1.msra.mxu0 0.0
        %3572 = vmatprep.subr.mxu0 0.0
        %3573 = vmatpush1.msra.mxu0 0.0
        %3574 = vmatprep.subr.mxu0 0.0
        %3575 = vmatpush1.msra.mxu0 0.0
        %3576 = vmatprep.subr.mxu0 0.0
        %3577 = vmatpush1.msra.mxu0 0.0
        %3578 = vmatprep.subr.mxu0 0.0
        %3579 = vmatpush1.msra.mxu0 0.0
        %3580 = vmatprep.subr.mxu0 0.0
        %3581 = vmatpush1.msra.mxu0 0.0
        %3582 = vmatprep.subr.mxu0 0.0
        %3583 = vmatpush1.msra.mxu0 0.0
        %3584 = vmatprep.subr.mxu0 0.0
        %3585 = vmatpush1.msra.mxu0 0.0
        %3586 = vmatprep.subr.mxu0 0.0
        %3587 = vmatpush1.msra.mxu0 0.0
        %3588 = vmatprep.subr.mxu0 0.0
        %3589 = vmatpush1.msra.mxu0 0.0
        %3590 = vmatprep.subr.mxu0 0.0
        %3591 = vmatpush1.msra.mxu0 0.0
        %3592 = vmatprep.mubr.f32.mxu0 0.0
        %3593 = vmatmul.mubr.f32.gmra.mrb[0].mxu0 %v3523
        %v3594 = vpop.f32.mrb[0].mxu0
        %v3595 = vadd.f32 0.0, %v3594
        %v3596 = vpop.f32.mrb[0].mxu0
        %3597 = vdwg.mxu0
        %s3598 = scalar_lea.vmem %s6, 448
        %v3599 = vld [vmem:[%s3598] sm:$0xff]
        %v3600 = vld [vmem:[%s3598 + $0x8] sm:$0xff]
        %v3601 = vld [vmem:[%s3598 + $0x10] sm:$0xff]
        %v3602 = vld [vmem:[%s3598 + $0x18] sm:$0x1]
        %s3603 = scalar_lea.vmem %s6, 480
        %v3604 = vld [vmem:[%s3603] sm:$0xff]
        %v3605 = vld [vmem:[%s3603 + $0x8] sm:$0xff]
        %v3606 = vld [vmem:[%s3603 + $0x10] sm:$0xff]
        %v3607 = vld [vmem:[%s3603 + $0x18] sm:$0x1]
        %v3608 = vrot.slane %v2991, 7
        %v3609 = vsel %vm3005, %v3608, 0
        %v3612 = vsel %vm947, %v3607, 0
        %3614 = vmatprep.subr.mxu0 0.0
        %3615 = vmatpush1.msra.mxu0 %v3604
        %3616 = vmatprep.subr.mxu0 0.0
        %3617 = vmatpush1.msra.mxu0 %v3605
        %3618 = vmatprep.subr.mxu0 0.0
        %3619 = vmatpush1.msra.mxu0 %v3606
        %3620 = vmatprep.subr.mxu0 0.0
        %3621 = vmatpush1.msra.mxu0 %v3612
        %3622 = vmatprep.subr.mxu0 0.0
        %3623 = vmatpush1.msra.mxu0 0.0
        %3624 = vmatprep.subr.mxu0 0.0
        %3625 = vmatpush1.msra.mxu0 0.0
        %3626 = vmatprep.subr.mxu0 0.0
        %3627 = vmatpush1.msra.mxu0 0.0
        %3628 = vmatprep.subr.mxu0 0.0
        %3629 = vmatpush1.msra.mxu0 0.0
        %3630 = vmatprep.subr.mxu0 0.0
        %3631 = vmatpush1.msra.mxu0 0.0
        %3632 = vmatprep.subr.mxu0 0.0
        %3633 = vmatpush1.msra.mxu0 0.0
        %3634 = vmatprep.subr.mxu0 0.0
        %3635 = vmatpush1.msra.mxu0 0.0
        %3636 = vmatprep.subr.mxu0 0.0
        %3637 = vmatpush1.msra.mxu0 0.0
        %3638 = vmatprep.subr.mxu0 0.0
        %3639 = vmatpush1.msra.mxu0 0.0
        %3640 = vmatprep.subr.mxu0 0.0
        %3641 = vmatpush1.msra.mxu0 0.0
        %3642 = vmatprep.subr.mxu0 0.0
        %3643 = vmatpush1.msra.mxu0 0.0
        %3644 = vmatprep.subr.mxu0 0.0
        %3645 = vmatpush1.msra.mxu0 0.0
        %3646 = vmatprep.subr.mxu0 0.0
        %3647 = vmatpush1.msra.mxu0 0.0
        %3648 = vmatprep.subr.mxu0 0.0
        %3649 = vmatpush1.msra.mxu0 0.0
        %3650 = vmatprep.subr.mxu0 0.0
        %3651 = vmatpush1.msra.mxu0 0.0
        %3652 = vmatprep.subr.mxu0 0.0
        %3653 = vmatpush1.msra.mxu0 0.0
        %3654 = vmatprep.subr.mxu0 0.0
        %3655 = vmatpush1.msra.mxu0 0.0
        %3656 = vmatprep.subr.mxu0 0.0
        %3657 = vmatpush1.msra.mxu0 0.0
        %3658 = vmatprep.subr.mxu0 0.0
        %3659 = vmatpush1.msra.mxu0 0.0
        %3660 = vmatprep.subr.mxu0 0.0
        %3661 = vmatpush1.msra.mxu0 0.0
        %3662 = vmatprep.subr.mxu0 0.0
        %3663 = vmatpush1.msra.mxu0 0.0
        %3664 = vmatprep.subr.mxu0 0.0
        %3665 = vmatpush1.msra.mxu0 0.0
        %3666 = vmatprep.subr.mxu0 0.0
        %3667 = vmatpush1.msra.mxu0 0.0
        %3668 = vmatprep.subr.mxu0 0.0
        %3669 = vmatpush1.msra.mxu0 0.0
        %3670 = vmatprep.subr.mxu0 0.0
        %3671 = vmatpush1.msra.mxu0 0.0
        %3672 = vmatprep.subr.mxu0 0.0
        %3673 = vmatpush1.msra.mxu0 0.0
        %3674 = vmatprep.subr.mxu0 0.0
        %3675 = vmatpush1.msra.mxu0 0.0
        %3676 = vmatprep.subr.mxu0 0.0
        %3677 = vmatpush1.msra.mxu0 0.0
        %3678 = vmatprep.mubr.f32.mxu0 0.0
        %3679 = vmatmul.mubr.f32.gmra.mrb[0].mxu0 %v3609
        %v3680 = vpop.f32.mrb[0].mxu0
        %v3681 = vadd.f32 0.0, %v3680
        %v3682 = vpop.f32.mrb[0].mxu0
        %3683 = vdwg.mxu0
        %v3684 = vsel %vm3005, %v2986, 0
        %v3687 = vsel %vm947, %v2997, 0
        %3689 = vmatprep.subr.mxu0 0.0
        %3690 = vmatpush1.msra.mxu0 %v2994
        %3691 = vmatprep.subr.mxu0 0.0
        %3692 = vmatpush1.msra.mxu0 %v2995
        %3693 = vmatprep.subr.mxu0 0.0
        %3694 = vmatpush1.msra.mxu0 %v2996
        %3695 = vmatprep.subr.mxu0 0.0
        %3696 = vmatpush1.msra.mxu0 %v3687
        %3697 = vmatprep.subr.mxu0 0.0
        %3698 = vmatpush1.msra.mxu0 0.0
        %3699 = vmatprep.subr.mxu0 0.0
        %3700 = vmatpush1.msra.mxu0 0.0
        %3701 = vmatprep.subr.mxu0 0.0
        %3702 = vmatpush1.msra.mxu0 0.0
        %3703 = vmatprep.subr.mxu0 0.0
        %3704 = vmatpush1.msra.mxu0 0.0
        %3705 = vmatprep.subr.mxu0 0.0
        %3706 = vmatpush1.msra.mxu0 0.0
        %3707 = vmatprep.subr.mxu0 0.0
        %3708 = vmatpush1.msra.mxu0 0.0
        %3709 = vmatprep.subr.mxu0 0.0
        %3710 = vmatpush1.msra.mxu0 0.0
        %3711 = vmatprep.subr.mxu0 0.0
        %3712 = vmatpush1.msra.mxu0 0.0
        %3713 = vmatprep.subr.mxu0 0.0
        %3714 = vmatpush1.msra.mxu0 0.0
        %3715 = vmatprep.subr.mxu0 0.0
        %3716 = vmatpush1.msra.mxu0 0.0
        %3717 = vmatprep.subr.mxu0 0.0
        %3718 = vmatpush1.msra.mxu0 0.0
        %3719 = vmatprep.subr.mxu0 0.0
        %3720 = vmatpush1.msra.mxu0 0.0
        %3721 = vmatprep.subr.mxu0 0.0
        %3722 = vmatpush1.msra.mxu0 0.0
        %3723 = vmatprep.subr.mxu0 0.0
        %3724 = vmatpush1.msra.mxu0 0.0
        %3725 = vmatprep.subr.mxu0 0.0
        %3726 = vmatpush1.msra.mxu0 0.0
        %3727 = vmatprep.subr.mxu0 0.0
        %3728 = vmatpush1.msra.mxu0 0.0
        %3729 = vmatprep.subr.mxu0 0.0
        %3730 = vmatpush1.msra.mxu0 0.0
        %3731 = vmatprep.subr.mxu0 0.0
        %3732 = vmatpush1.msra.mxu0 0.0
        %3733 = vmatprep.subr.mxu0 0.0
        %3734 = vmatpush1.msra.mxu0 0.0
        %3735 = vmatprep.subr.mxu0 0.0
        %3736 = vmatpush1.msra.mxu0 0.0
        %3737 = vmatprep.subr.mxu0 0.0
        %3738 = vmatpush1.msra.mxu0 0.0
        %3739 = vmatprep.subr.mxu0 0.0
        %3740 = vmatpush1.msra.mxu0 0.0
        %3741 = vmatprep.subr.mxu0 0.0
        %3742 = vmatpush1.msra.mxu0 0.0
        %3743 = vmatprep.subr.mxu0 0.0
        %3744 = vmatpush1.msra.mxu0 0.0
        %3745 = vmatprep.subr.mxu0 0.0
        %3746 = vmatpush1.msra.mxu0 0.0
        %3747 = vmatprep.subr.mxu0 0.0
        %3748 = vmatpush1.msra.mxu0 0.0
        %3749 = vmatprep.subr.mxu0 0.0
        %3750 = vmatpush1.msra.mxu0 0.0
        %3751 = vmatprep.subr.mxu0 0.0
        %3752 = vmatpush1.msra.mxu0 0.0
        %3753 = vmatprep.mubr.f32.mxu0 0.0
        %3754 = vmatmul.mubr.f32.gmra.mrb[0].mxu0 %v3684
        %v3755 = vpop.f32.mrb[0].mxu0
        %v3756 = vadd.f32 %v3078, %v3755
        %v3757 = vpop.f32.mrb[0].mxu0
        %3758 = vdwg.mxu0
        %v3759 = vrot.slane %v2986, 2
        %v3760 = vsel %vm3005, %v3759, 0
        %v3763 = vsel %vm947, %v3085, 0
        %3765 = vmatprep.subr.mxu0 0.0
        %3766 = vmatpush1.msra.mxu0 %v3082
        %3767 = vmatprep.subr.mxu0 0.0
        %3768 = vmatpush1.msra.mxu0 %v3083
        %3769 = vmatprep.subr.mxu0 0.0
        %3770 = vmatpush1.msra.mxu0 %v3084
        %3771 = vmatprep.subr.mxu0 0.0
        %3772 = vmatpush1.msra.mxu0 %v3763
        %3773 = vmatprep.subr.mxu0 0.0
        %3774 = vmatpush1.msra.mxu0 0.0
        %3775 = vmatprep.subr.mxu0 0.0
        %3776 = vmatpush1.msra.mxu0 0.0
        %3777 = vmatprep.subr.mxu0 0.0
        %3778 = vmatpush1.msra.mxu0 0.0
        %3779 = vmatprep.subr.mxu0 0.0
        %3780 = vmatpush1.msra.mxu0 0.0
        %3781 = vmatprep.subr.mxu0 0.0
        %3782 = vmatpush1.msra.mxu0 0.0
        %3783 = vmatprep.subr.mxu0 0.0
        %3784 = vmatpush1.msra.mxu0 0.0
        %3785 = vmatprep.subr.mxu0 0.0
        %3786 = vmatpush1.msra.mxu0 0.0
        %3787 = vmatprep.subr.mxu0 0.0
        %3788 = vmatpush1.msra.mxu0 0.0
        %3789 = vmatprep.subr.mxu0 0.0
        %3790 = vmatpush1.msra.mxu0 0.0
        %3791 = vmatprep.subr.mxu0 0.0
        %3792 = vmatpush1.msra.mxu0 0.0
        %3793 = vmatprep.subr.mxu0 0.0
        %3794 = vmatpush1.msra.mxu0 0.0
        %3795 = vmatprep.subr.mxu0 0.0
        %3796 = vmatpush1.msra.mxu0 0.0
        %3797 = vmatprep.subr.mxu0 0.0
        %3798 = vmatpush1.msra.mxu0 0.0
        %3799 = vmatprep.subr.mxu0 0.0
        %3800 = vmatpush1.msra.mxu0 0.0
        %3801 = vmatprep.subr.mxu0 0.0
        %3802 = vmatpush1.msra.mxu0 0.0
        %3803 = vmatprep.subr.mxu0 0.0
        %3804 = vmatpush1.msra.mxu0 0.0
        %3805 = vmatprep.subr.mxu0 0.0
        %3806 = vmatpush1.msra.mxu0 0.0
        %3807 = vmatprep.subr.mxu0 0.0
        %3808 = vmatpush1.msra.mxu0 0.0
        %3809 = vmatprep.subr.mxu0 0.0
        %3810 = vmatpush1.msra.mxu0 0.0
        %3811 = vmatprep.subr.mxu0 0.0
        %3812 = vmatpush1.msra.mxu0 0.0
        %3813 = vmatprep.subr.mxu0 0.0
        %3814 = vmatpush1.msra.mxu0 0.0
        %3815 = vmatprep.subr.mxu0 0.0
        %3816 = vmatpush1.msra.mxu0 0.0
        %3817 = vmatprep.subr.mxu0 0.0
        %3818 = vmatpush1.msra.mxu0 0.0
        %3819 = vmatprep.subr.mxu0 0.0
        %3820 = vmatpush1.msra.mxu0 0.0
        %3821 = vmatprep.subr.mxu0 0.0
        %3822 = vmatpush1.msra.mxu0 0.0
        %3823 = vmatprep.subr.mxu0 0.0
        %3824 = vmatpush1.msra.mxu0 0.0
        %3825 = vmatprep.subr.mxu0 0.0
        %3826 = vmatpush1.msra.mxu0 0.0
        %3827 = vmatprep.subr.mxu0 0.0
        %3828 = vmatpush1.msra.mxu0 0.0
        %3829 = vmatprep.mubr.f32.mxu0 0.0
        %3830 = vmatmul.mubr.f32.gmra.mrb[0].mxu0 %v3760
        %v3831 = vpop.f32.mrb[0].mxu0
        %v3832 = vadd.f32 %v3164, %v3831
        %v3833 = vpop.f32.mrb[0].mxu0
        %3834 = vdwg.mxu0
        %v3835 = vrot.slane %v2986, 4
        %v3836 = vsel %vm3005, %v3835, 0
        %v3839 = vsel %vm947, %v3171, 0
        %3841 = vmatprep.subr.mxu0 0.0
        %3842 = vmatpush1.msra.mxu0 %v3168
        %3843 = vmatprep.subr.mxu0 0.0
        %3844 = vmatpush1.msra.mxu0 %v3169
        %3845 = vmatprep.subr.mxu0 0.0
        %3846 = vmatpush1.msra.mxu0 %v3170
        %3847 = vmatprep.subr.mxu0 0.0
        %3848 = vmatpush1.msra.mxu0 %v3839
        %3849 = vmatprep.subr.mxu0 0.0
        %3850 = vmatpush1.msra.mxu0 0.0
        %3851 = vmatprep.subr.mxu0 0.0
        %3852 = vmatpush1.msra.mxu0 0.0
        %3853 = vmatprep.subr.mxu0 0.0
        %3854 = vmatpush1.msra.mxu0 0.0
        %3855 = vmatprep.subr.mxu0 0.0
        %3856 = vmatpush1.msra.mxu0 0.0
        %3857 = vmatprep.subr.mxu0 0.0
        %3858 = vmatpush1.msra.mxu0 0.0
        %3859 = vmatprep.subr.mxu0 0.0
        %3860 = vmatpush1.msra.mxu0 0.0
        %3861 = vmatprep.subr.mxu0 0.0
        %3862 = vmatpush1.msra.mxu0 0.0
        %3863 = vmatprep.subr.mxu0 0.0
        %3864 = vmatpush1.msra.mxu0 0.0
        %3865 = vmatprep.subr.mxu0 0.0
        %3866 = vmatpush1.msra.mxu0 0.0
        %3867 = vmatprep.subr.mxu0 0.0
        %3868 = vmatpush1.msra.mxu0 0.0
        %3869 = vmatprep.subr.mxu0 0.0
        %3870 = vmatpush1.msra.mxu0 0.0
        %3871 = vmatprep.subr.mxu0 0.0
        %3872 = vmatpush1.msra.mxu0 0.0
        %3873 = vmatprep.subr.mxu0 0.0
        %3874 = vmatpush1.msra.mxu0 0.0
        %3875 = vmatprep.subr.mxu0 0.0
        %3876 = vmatpush1.msra.mxu0 0.0
        %3877 = vmatprep.subr.mxu0 0.0
        %3878 = vmatpush1.msra.mxu0 0.0
        %3879 = vmatprep.subr.mxu0 0.0
        %3880 = vmatpush1.msra.mxu0 0.0
        %3881 = vmatprep.subr.mxu0 0.0
        %3882 = vmatpush1.msra.mxu0 0.0
        %3883 = vmatprep.subr.mxu0 0.0
        %3884 = vmatpush1.msra.mxu0 0.0
        %3885 = vmatprep.subr.mxu0 0.0
        %3886 = vmatpush1.msra.mxu0 0.0
        %3887 = vmatprep.subr.mxu0 0.0
        %3888 = vmatpush1.msra.mxu0 0.0
        %3889 = vmatprep.subr.mxu0 0.0
        %3890 = vmatpush1.msra.mxu0 0.0
        %3891 = vmatprep.subr.mxu0 0.0
        %3892 = vmatpush1.msra.mxu0 0.0
        %3893 = vmatprep.subr.mxu0 0.0
        %3894 = vmatpush1.msra.mxu0 0.0
        %3895 = vmatprep.subr.mxu0 0.0
        %3896 = vmatpush1.msra.mxu0 0.0
        %3897 = vmatprep.subr.mxu0 0.0
        %3898 = vmatpush1.msra.mxu0 0.0
        %3899 = vmatprep.subr.mxu0 0.0
        %3900 = vmatpush1.msra.mxu0 0.0
        %3901 = vmatprep.subr.mxu0 0.0
        %3902 = vmatpush1.msra.mxu0 0.0
        %3903 = vmatprep.subr.mxu0 0.0
        %3904 = vmatpush1.msra.mxu0 0.0
        %3905 = vmatprep.mubr.f32.mxu0 0.0
        %3906 = vmatmul.mubr.f32.gmra.mrb[0].mxu0 %v3836
        %v3907 = vpop.f32.mrb[0].mxu0
        %v3908 = vadd.f32 %v3250, %v3907
        %v3909 = vpop.f32.mrb[0].mxu0
        %3910 = vdwg.mxu0
        %v3911 = vrot.slane %v2986, 6
        %v3912 = vsel %vm3005, %v3911, 0
        %v3915 = vsel %vm947, %v3257, 0
        %3917 = vmatprep.subr.mxu0 0.0
        %3918 = vmatpush1.msra.mxu0 %v3254
        %3919 = vmatprep.subr.mxu0 0.0
        %3920 = vmatpush1.msra.mxu0 %v3255
        %3921 = vmatprep.subr.mxu0 0.0
        %3922 = vmatpush1.msra.mxu0 %v3256
        %3923 = vmatprep.subr.mxu0 0.0
        %3924 = vmatpush1.msra.mxu0 %v3915
        %3925 = vmatprep.subr.mxu0 0.0
        %3926 = vmatpush1.msra.mxu0 0.0
        %3927 = vmatprep.subr.mxu0 0.0
        %3928 = vmatpush1.msra.mxu0 0.0
        %3929 = vmatprep.subr.mxu0 0.0
        %3930 = vmatpush1.msra.mxu0 0.0
        %3931 = vmatprep.subr.mxu0 0.0
        %3932 = vmatpush1.msra.mxu0 0.0
        %3933 = vmatprep.subr.mxu0 0.0
        %3934 = vmatpush1.msra.mxu0 0.0
        %3935 = vmatprep.subr.mxu0 0.0
        %3936 = vmatpush1.msra.mxu0 0.0
        %3937 = vmatprep.subr.mxu0 0.0
        %3938 = vmatpush1.msra.mxu0 0.0
        %3939 = vmatprep.subr.mxu0 0.0
        %3940 = vmatpush1.msra.mxu0 0.0
        %3941 = vmatprep.subr.mxu0 0.0
        %3942 = vmatpush1.msra.mxu0 0.0
        %3943 = vmatprep.subr.mxu0 0.0
        %3944 = vmatpush1.msra.mxu0 0.0
        %3945 = vmatprep.subr.mxu0 0.0
        %3946 = vmatpush1.msra.mxu0 0.0
        %3947 = vmatprep.subr.mxu0 0.0
        %3948 = vmatpush1.msra.mxu0 0.0
        %3949 = vmatprep.subr.mxu0 0.0
        %3950 = vmatpush1.msra.mxu0 0.0
        %3951 = vmatprep.subr.mxu0 0.0
        %3952 = vmatpush1.msra.mxu0 0.0
        %3953 = vmatprep.subr.mxu0 0.0
        %3954 = vmatpush1.msra.mxu0 0.0
        %3955 = vmatprep.subr.mxu0 0.0
        %3956 = vmatpush1.msra.mxu0 0.0
        %3957 = vmatprep.subr.mxu0 0.0
        %3958 = vmatpush1.msra.mxu0 0.0
        %3959 = vmatprep.subr.mxu0 0.0
        %3960 = vmatpush1.msra.mxu0 0.0
        %3961 = vmatprep.subr.mxu0 0.0
        %3962 = vmatpush1.msra.mxu0 0.0
        %3963 = vmatprep.subr.mxu0 0.0
        %3964 = vmatpush1.msra.mxu0 0.0
        %3965 = vmatprep.subr.mxu0 0.0
        %3966 = vmatpush1.msra.mxu0 0.0
        %3967 = vmatprep.subr.mxu0 0.0
        %3968 = vmatpush1.msra.mxu0 0.0
        %3969 = vmatprep.subr.mxu0 0.0
        %3970 = vmatpush1.msra.mxu0 0.0
        %3971 = vmatprep.subr.mxu0 0.0
        %3972 = vmatpush1.msra.mxu0 0.0
        %3973 = vmatprep.subr.mxu0 0.0
        %3974 = vmatpush1.msra.mxu0 0.0
        %3975 = vmatprep.subr.mxu0 0.0
        %3976 = vmatpush1.msra.mxu0 0.0
        %3977 = vmatprep.subr.mxu0 0.0
        %3978 = vmatpush1.msra.mxu0 0.0
        %3979 = vmatprep.subr.mxu0 0.0
        %3980 = vmatpush1.msra.mxu0 0.0
        %3981 = vmatprep.mubr.f32.mxu0 0.0
        %3982 = vmatmul.mubr.f32.gmra.mrb[0].mxu0 %v3912
        %v3983 = vpop.f32.mrb[0].mxu0
        %v3984 = vadd.f32 %v3336, %v3983
        %v3985 = vpop.f32.mrb[0].mxu0
        %3986 = vdwg.mxu0
        %v3987 = vsel %vm3005, %v2991, 0
        %v3990 = vsel %vm947, %v3343, 0
        %3992 = vmatprep.subr.mxu0 0.0
        %3993 = vmatpush1.msra.mxu0 %v3340
        %3994 = vmatprep.subr.mxu0 0.0
        %3995 = vmatpush1.msra.mxu0 %v3341
        %3996 = vmatprep.subr.mxu0 0.0
        %3997 = vmatpush1.msra.mxu0 %v3342
        %3998 = vmatprep.subr.mxu0 0.0
        %3999 = vmatpush1.msra.mxu0 %v3990
        %4000 = vmatprep.subr.mxu0 0.0
        %4001 = vmatpush1.msra.mxu0 0.0
        %4002 = vmatprep.subr.mxu0 0.0
        %4003 = vmatpush1.msra.mxu0 0.0
        %4004 = vmatprep.subr.mxu0 0.0
        %4005 = vmatpush1.msra.mxu0 0.0
        %4006 = vmatprep.subr.mxu0 0.0
        %4007 = vmatpush1.msra.mxu0 0.0
        %4008 = vmatprep.subr.mxu0 0.0
        %4009 = vmatpush1.msra.mxu0 0.0
        %4010 = vmatprep.subr.mxu0 0.0
        %4011 = vmatpush1.msra.mxu0 0.0
        %4012 = vmatprep.subr.mxu0 0.0
        %4013 = vmatpush1.msra.mxu0 0.0
        %4014 = vmatprep.subr.mxu0 0.0
        %4015 = vmatpush1.msra.mxu0 0.0
        %4016 = vmatprep.subr.mxu0 0.0
        %4017 = vmatpush1.msra.mxu0 0.0
        %4018 = vmatprep.subr.mxu0 0.0
        %4019 = vmatpush1.msra.mxu0 0.0
        %4020 = vmatprep.subr.mxu0 0.0
        %4021 = vmatpush1.msra.mxu0 0.0
        %4022 = vmatprep.subr.mxu0 0.0
        %4023 = vmatpush1.msra.mxu0 0.0
        %4024 = vmatprep.subr.mxu0 0.0
        %4025 = vmatpush1.msra.mxu0 0.0
        %4026 = vmatprep.subr.mxu0 0.0
        %4027 = vmatpush1.msra.mxu0 0.0
        %4028 = vmatprep.subr.mxu0 0.0
        %4029 = vmatpush1.msra.mxu0 0.0
        %4030 = vmatprep.subr.mxu0 0.0
        %4031 = vmatpush1.msra.mxu0 0.0
        %4032 = vmatprep.subr.mxu0 0.0
        %4033 = vmatpush1.msra.mxu0 0.0
        %4034 = vmatprep.subr.mxu0 0.0
        %4035 = vmatpush1.msra.mxu0 0.0
        %4036 = vmatprep.subr.mxu0 0.0
        %4037 = vmatpush1.msra.mxu0 0.0
        %4038 = vmatprep.subr.mxu0 0.0
        %4039 = vmatpush1.msra.mxu0 0.0
        %4040 = vmatprep.subr.mxu0 0.0
        %4041 = vmatpush1.msra.mxu0 0.0
        %4042 = vmatprep.subr.mxu0 0.0
        %4043 = vmatpush1.msra.mxu0 0.0
        %4044 = vmatprep.subr.mxu0 0.0
        %4045 = vmatpush1.msra.mxu0 0.0
        %4046 = vmatprep.subr.mxu0 0.0
        %4047 = vmatpush1.msra.mxu0 0.0
        %4048 = vmatprep.subr.mxu0 0.0
        %4049 = vmatpush1.msra.mxu0 0.0
        %4050 = vmatprep.subr.mxu0 0.0
        %4051 = vmatpush1.msra.mxu0 0.0
        %4052 = vmatprep.subr.mxu0 0.0
        %4053 = vmatpush1.msra.mxu0 0.0
        %4054 = vmatprep.subr.mxu0 0.0
        %4055 = vmatpush1.msra.mxu0 0.0
        %4056 = vmatprep.mubr.f32.mxu0 0.0
        %4057 = vmatmul.mubr.f32.gmra.mrb[0].mxu0 %v3987
        %v4058 = vpop.f32.mrb[0].mxu0
        %v4059 = vadd.f32 %v3423, %v4058
        %v4060 = vpop.f32.mrb[0].mxu0
        %4061 = vdwg.mxu0
        %v4062 = vrot.slane %v2991, 2
        %v4063 = vsel %vm3005, %v4062, 0
        %v4066 = vsel %vm947, %v3430, 0
        %4068 = vmatprep.subr.mxu0 0.0
        %4069 = vmatpush1.msra.mxu0 %v3427
        %4070 = vmatprep.subr.mxu0 0.0
        %4071 = vmatpush1.msra.mxu0 %v3428
        %4072 = vmatprep.subr.mxu0 0.0
        %4073 = vmatpush1.msra.mxu0 %v3429
        %4074 = vmatprep.subr.mxu0 0.0
        %4075 = vmatpush1.msra.mxu0 %v4066
        %4076 = vmatprep.subr.mxu0 0.0
        %4077 = vmatpush1.msra.mxu0 0.0
        %4078 = vmatprep.subr.mxu0 0.0
        %4079 = vmatpush1.msra.mxu0 0.0
        %4080 = vmatprep.subr.mxu0 0.0
        %4081 = vmatpush1.msra.mxu0 0.0
        %4082 = vmatprep.subr.mxu0 0.0
        %4083 = vmatpush1.msra.mxu0 0.0
        %4084 = vmatprep.subr.mxu0 0.0
        %4085 = vmatpush1.msra.mxu0 0.0
        %4086 = vmatprep.subr.mxu0 0.0
        %4087 = vmatpush1.msra.mxu0 0.0
        %4088 = vmatprep.subr.mxu0 0.0
        %4089 = vmatpush1.msra.mxu0 0.0
        %4090 = vmatprep.subr.mxu0 0.0
        %4091 = vmatpush1.msra.mxu0 0.0
        %4092 = vmatprep.subr.mxu0 0.0
        %4093 = vmatpush1.msra.mxu0 0.0
        %4094 = vmatprep.subr.mxu0 0.0
        %4095 = vmatpush1.msra.mxu0 0.0
        %4096 = vmatprep.subr.mxu0 0.0
        %4097 = vmatpush1.msra.mxu0 0.0
        %4098 = vmatprep.subr.mxu0 0.0
        %4099 = vmatpush1.msra.mxu0 0.0
        %4100 = vmatprep.subr.mxu0 0.0
        %4101 = vmatpush1.msra.mxu0 0.0
        %4102 = vmatprep.subr.mxu0 0.0
        %4103 = vmatpush1.msra.mxu0 0.0
        %4104 = vmatprep.subr.mxu0 0.0
        %4105 = vmatpush1.msra.mxu0 0.0
        %4106 = vmatprep.subr.mxu0 0.0
        %4107 = vmatpush1.msra.mxu0 0.0
        %4108 = vmatprep.subr.mxu0 0.0
        %4109 = vmatpush1.msra.mxu0 0.0
        %4110 = vmatprep.subr.mxu0 0.0
        %4111 = vmatpush1.msra.mxu0 0.0
        %4112 = vmatprep.subr.mxu0 0.0
        %4113 = vmatpush1.msra.mxu0 0.0
        %4114 = vmatprep.subr.mxu0 0.0
        %4115 = vmatpush1.msra.mxu0 0.0
        %4116 = vmatprep.subr.mxu0 0.0
        %4117 = vmatpush1.msra.mxu0 0.0
        %4118 = vmatprep.subr.mxu0 0.0
        %4119 = vmatpush1.msra.mxu0 0.0
        %4120 = vmatprep.subr.mxu0 0.0
        %4121 = vmatpush1.msra.mxu0 0.0
        %4122 = vmatprep.subr.mxu0 0.0
        %4123 = vmatpush1.msra.mxu0 0.0
        %4124 = vmatprep.subr.mxu0 0.0
        %4125 = vmatpush1.msra.mxu0 0.0
        %4126 = vmatprep.subr.mxu0 0.0
        %4127 = vmatpush1.msra.mxu0 0.0
        %4128 = vmatprep.subr.mxu0 0.0
        %4129 = vmatpush1.msra.mxu0 0.0
        %4130 = vmatprep.subr.mxu0 0.0
        %4131 = vmatpush1.msra.mxu0 0.0
        %4132 = vmatprep.mubr.f32.mxu0 0.0
        %4133 = vmatmul.mubr.f32.gmra.mrb[0].mxu0 %v4063
        %v4134 = vpop.f32.mrb[0].mxu0
        %v4135 = vadd.f32 %v3509, %v4134
        %v4136 = vpop.f32.mrb[0].mxu0
        %4137 = vdwg.mxu0
        %v4138 = vrot.slane %v2991, 4
        %v4139 = vsel %vm3005, %v4138, 0
        %v4142 = vsel %vm947, %v3516, 0
        %4144 = vmatprep.subr.mxu0 0.0
        %4145 = vmatpush1.msra.mxu0 %v3513
        %4146 = vmatprep.subr.mxu0 0.0
        %4147 = vmatpush1.msra.mxu0 %v3514
        %4148 = vmatprep.subr.mxu0 0.0
        %4149 = vmatpush1.msra.mxu0 %v3515
        %4150 = vmatprep.subr.mxu0 0.0
        %4151 = vmatpush1.msra.mxu0 %v4142
        %4152 = vmatprep.subr.mxu0 0.0
        %4153 = vmatpush1.msra.mxu0 0.0
        %4154 = vmatprep.subr.mxu0 0.0
        %4155 = vmatpush1.msra.mxu0 0.0
        %4156 = vmatprep.subr.mxu0 0.0
        %4157 = vmatpush1.msra.mxu0 0.0
        %4158 = vmatprep.subr.mxu0 0.0
        %4159 = vmatpush1.msra.mxu0 0.0
        %4160 = vmatprep.subr.mxu0 0.0
        %4161 = vmatpush1.msra.mxu0 0.0
        %4162 = vmatprep.subr.mxu0 0.0
        %4163 = vmatpush1.msra.mxu0 0.0
        %4164 = vmatprep.subr.mxu0 0.0
        %4165 = vmatpush1.msra.mxu0 0.0
        %4166 = vmatprep.subr.mxu0 0.0
        %4167 = vmatpush1.msra.mxu0 0.0
        %4168 = vmatprep.subr.mxu0 0.0
        %4169 = vmatpush1.msra.mxu0 0.0
        %4170 = vmatprep.subr.mxu0 0.0
        %4171 = vmatpush1.msra.mxu0 0.0
        %4172 = vmatprep.subr.mxu0 0.0
        %4173 = vmatpush1.msra.mxu0 0.0
        %4174 = vmatprep.subr.mxu0 0.0
        %4175 = vmatpush1.msra.mxu0 0.0
        %4176 = vmatprep.subr.mxu0 0.0
        %4177 = vmatpush1.msra.mxu0 0.0
        %4178 = vmatprep.subr.mxu0 0.0
        %4179 = vmatpush1.msra.mxu0 0.0
        %4180 = vmatprep.subr.mxu0 0.0
        %4181 = vmatpush1.msra.mxu0 0.0
        %4182 = vmatprep.subr.mxu0 0.0
        %4183 = vmatpush1.msra.mxu0 0.0
        %4184 = vmatprep.subr.mxu0 0.0
        %4185 = vmatpush1.msra.mxu0 0.0
        %4186 = vmatprep.subr.mxu0 0.0
        %4187 = vmatpush1.msra.mxu0 0.0
        %4188 = vmatprep.subr.mxu0 0.0
        %4189 = vmatpush1.msra.mxu0 0.0
        %4190 = vmatprep.subr.mxu0 0.0
        %4191 = vmatpush1.msra.mxu0 0.0
        %4192 = vmatprep.subr.mxu0 0.0
        %4193 = vmatpush1.msra.mxu0 0.0
        %4194 = vmatprep.subr.mxu0 0.0
        %4195 = vmatpush1.msra.mxu0 0.0
        %4196 = vmatprep.subr.mxu0 0.0
        %4197 = vmatpush1.msra.mxu0 0.0
        %4198 = vmatprep.subr.mxu0 0.0
        %4199 = vmatpush1.msra.mxu0 0.0
        %4200 = vmatprep.subr.mxu0 0.0
        %4201 = vmatpush1.msra.mxu0 0.0
        %4202 = vmatprep.subr.mxu0 0.0
        %4203 = vmatpush1.msra.mxu0 0.0
        %4204 = vmatprep.subr.mxu0 0.0
        %4205 = vmatpush1.msra.mxu0 0.0
        %4206 = vmatprep.subr.mxu0 0.0
        %4207 = vmatpush1.msra.mxu0 0.0
        %4208 = vmatprep.mubr.f32.mxu0 0.0
        %4209 = vmatmul.mubr.f32.gmra.mrb[0].mxu0 %v4139
        %v4210 = vpop.f32.mrb[0].mxu0
        %v4211 = vadd.f32 %v3595, %v4210
        %v4212 = vpop.f32.mrb[0].mxu0
        %4213 = vdwg.mxu0
        %v4214 = vrot.slane %v2991, 6
        %v4215 = vsel %vm3005, %v4214, 0
        %v4218 = vsel %vm947, %v3602, 0
        %4220 = vmatprep.subr.mxu0 0.0
        %4221 = vmatpush1.msra.mxu0 %v3599
        %4222 = vmatprep.subr.mxu0 0.0
        %4223 = vmatpush1.msra.mxu0 %v3600
        %4224 = vmatprep.subr.mxu0 0.0
        %4225 = vmatpush1.msra.mxu0 %v3601
        %4226 = vmatprep.subr.mxu0 0.0
        %4227 = vmatpush1.msra.mxu0 %v4218
        %4228 = vmatprep.subr.mxu0 0.0
        %4229 = vmatpush1.msra.mxu0 0.0
        %4230 = vmatprep.subr.mxu0 0.0
        %4231 = vmatpush1.msra.mxu0 0.0
        %4232 = vmatprep.subr.mxu0 0.0
        %4233 = vmatpush1.msra.mxu0 0.0
        %4234 = vmatprep.subr.mxu0 0.0
        %4235 = vmatpush1.msra.mxu0 0.0
        %4236 = vmatprep.subr.mxu0 0.0
        %4237 = vmatpush1.msra.mxu0 0.0
        %4238 = vmatprep.subr.mxu0 0.0
        %4239 = vmatpush1.msra.mxu0 0.0
        %4240 = vmatprep.subr.mxu0 0.0
        %4241 = vmatpush1.msra.mxu0 0.0
        %4242 = vmatprep.subr.mxu0 0.0
        %4243 = vmatpush1.msra.mxu0 0.0
        %4244 = vmatprep.subr.mxu0 0.0
        %4245 = vmatpush1.msra.mxu0 0.0
        %4246 = vmatprep.subr.mxu0 0.0
        %4247 = vmatpush1.msra.mxu0 0.0
        %4248 = vmatprep.subr.mxu0 0.0
        %4249 = vmatpush1.msra.mxu0 0.0
        %4250 = vmatprep.subr.mxu0 0.0
        %4251 = vmatpush1.msra.mxu0 0.0
        %4252 = vmatprep.subr.mxu0 0.0
        %4253 = vmatpush1.msra.mxu0 0.0
        %4254 = vmatprep.subr.mxu0 0.0
        %4255 = vmatpush1.msra.mxu0 0.0
        %4256 = vmatprep.subr.mxu0 0.0
        %4257 = vmatpush1.msra.mxu0 0.0
        %4258 = vmatprep.subr.mxu0 0.0
        %4259 = vmatpush1.msra.mxu0 0.0
        %4260 = vmatprep.subr.mxu0 0.0
        %4261 = vmatpush1.msra.mxu0 0.0
        %4262 = vmatprep.subr.mxu0 0.0
        %4263 = vmatpush1.msra.mxu0 0.0
        %4264 = vmatprep.subr.mxu0 0.0
        %4265 = vmatpush1.msra.mxu0 0.0
        %4266 = vmatprep.subr.mxu0 0.0
        %4267 = vmatpush1.msra.mxu0 0.0
        %4268 = vmatprep.subr.mxu0 0.0
        %4269 = vmatpush1.msra.mxu0 0.0
        %4270 = vmatprep.subr.mxu0 0.0
        %4271 = vmatpush1.msra.mxu0 0.0
        %4272 = vmatprep.subr.mxu0 0.0
        %4273 = vmatpush1.msra.mxu0 0.0
        %4274 = vmatprep.subr.mxu0 0.0
        %4275 = vmatpush1.msra.mxu0 0.0
        %4276 = vmatprep.subr.mxu0 0.0
        %4277 = vmatpush1.msra.mxu0 0.0
        %4278 = vmatprep.subr.mxu0 0.0
        %4279 = vmatpush1.msra.mxu0 0.0
        %4280 = vmatprep.subr.mxu0 0.0
        %4281 = vmatpush1.msra.mxu0 0.0
        %4282 = vmatprep.subr.mxu0 0.0
        %4283 = vmatpush1.msra.mxu0 0.0
        %4284 = vmatprep.mubr.f32.mxu0 0.0
        %4285 = vmatmul.mubr.f32.gmra.mrb[0].mxu0 %v4215
        %v4286 = vpop.f32.mrb[0].mxu0
        %v4287 = vadd.f32 %v3681, %v4286
        %v4288 = vpop.f32.mrb[0].mxu0
        %4289 = vdwg.mxu0
        %v4290 = vadd.f32 %v3756, %v3832
        %v4291 = vadd.f32 %v3908, %v3984
        %v4292 = vadd.f32 %v4059, %v4135
        %v4293 = vadd.f32 %v4211, %v4287
        %v4294 = vadd.f32 %v4290, %v4291
        %v4295 = vadd.f32 %v4292, %v4293
        %v4296 = vadd.f32 %v4294, %v4295
        %v4297 = vld [vmem:[%s7] sm:$0x1]
        %v4298 = vadd.f32 %v4296, %v4297
        %v4299 = vmax.f32 %v4298, 0.0
        %v4300 = vld [vmem:[%s8] sm:$0xff]
        %v4301 = vld [vmem:[%s8 + $0x8] sm:$0xff]
        %v4302 = vld [vmem:[%s8 + $0x10] sm:$0xff]
        %v4303 = vld [vmem:[%s8 + $0x18] sm:$0xff]
        %v4304 = vld [vmem:[%s8 + $0x20] sm:$0xff]
        %v4305 = vld [vmem:[%s8 + $0x28] sm:$0xff]
        %v4306 = vld [vmem:[%s8 + $0x30] sm:$0xff]
        %v4307 = vld [vmem:[%s8 + $0x38] sm:$0xff]
        %v4308 = vld [vmem:[%s8 + $0x40] sm:$0xff]
        %v4309 = vld [vmem:[%s8 + $0x48] sm:$0xff]
        %v4310 = vld [vmem:[%s8 + $0x50] sm:$0xff]
        %v4311 = vld [vmem:[%s8 + $0x58] sm:$0xff]
        %v4312 = vld [vmem:[%s8 + $0x60] sm:$0xff]
        %v4313 = vld [vmem:[%s8 + $0x68] sm:$0xff]
        %v4314 = vld [vmem:[%s8 + $0x70] sm:$0xff]
        %v4315 = vld [vmem:[%s9] sm:$0x1]
        %v4317 = vsel %vm1736, %v4299, 0
        %4319 = vmatprep.subr.mxu0 0.0
        %4320 = vmatpush1.msra.mxu0 %v4300
        %4321 = vmatprep.subr.mxu0 0.0
        %4322 = vmatpush1.msra.mxu0 %v4301
        %4323 = vmatprep.subr.mxu0 0.0
        %4324 = vmatpush1.msra.mxu0 %v4302
        %4325 = vmatprep.subr.mxu0 0.0
        %4326 = vmatpush1.msra.mxu0 %v4303
        %4327 = vmatprep.subr.mxu0 0.0
        %4328 = vmatpush1.msra.mxu0 %v4304
        %4329 = vmatprep.subr.mxu0 0.0
        %4330 = vmatpush1.msra.mxu0 %v4305
        %4331 = vmatprep.subr.mxu0 0.0
        %4332 = vmatpush1.msra.mxu0 %v4306
        %4333 = vmatprep.subr.mxu0 0.0
        %4334 = vmatpush1.msra.mxu0 %v4307
        %4335 = vmatprep.subr.mxu0 0.0
        %4336 = vmatpush1.msra.mxu0 %v4308
        %4337 = vmatprep.subr.mxu0 0.0
        %4338 = vmatpush1.msra.mxu0 %v4309
        %4339 = vmatprep.subr.mxu0 0.0
        %4340 = vmatpush1.msra.mxu0 %v4310
        %4341 = vmatprep.subr.mxu0 0.0
        %4342 = vmatpush1.msra.mxu0 %v4311
        %4343 = vmatprep.subr.mxu0 0.0
        %4344 = vmatpush1.msra.mxu0 %v4312
        %4345 = vmatprep.subr.mxu0 0.0
        %4346 = vmatpush1.msra.mxu0 %v4313
        %4347 = vmatprep.subr.mxu0 0.0
        %4348 = vmatpush1.msra.mxu0 %v4314
        %4349 = vmatprep.subr.mxu0 0.0
        %4350 = vmatpush1.msra.mxu0 0.0
        %4351 = vmatprep.subr.mxu0 0.0
        %4352 = vmatpush1.msra.mxu0 0.0
        %4353 = vmatprep.subr.mxu0 0.0
        %4354 = vmatpush1.msra.mxu0 0.0
        %4355 = vmatprep.subr.mxu0 0.0
        %4356 = vmatpush1.msra.mxu0 0.0
        %4357 = vmatprep.subr.mxu0 0.0
        %4358 = vmatpush1.msra.mxu0 0.0
        %4359 = vmatprep.subr.mxu0 0.0
        %4360 = vmatpush1.msra.mxu0 0.0
        %4361 = vmatprep.subr.mxu0 0.0
        %4362 = vmatpush1.msra.mxu0 0.0
        %4363 = vmatprep.subr.mxu0 0.0
        %4364 = vmatpush1.msra.mxu0 0.0
        %4365 = vmatprep.subr.mxu0 0.0
        %4366 = vmatpush1.msra.mxu0 0.0
        %4367 = vmatprep.subr.mxu0 0.0
        %4368 = vmatpush1.msra.mxu0 0.0
        %4369 = vmatprep.subr.mxu0 0.0
        %4370 = vmatpush1.msra.mxu0 0.0
        %4371 = vmatprep.subr.mxu0 0.0
        %4372 = vmatpush1.msra.mxu0 0.0
        %4373 = vmatprep.subr.mxu0 0.0
        %4374 = vmatpush1.msra.mxu0 0.0
        %4375 = vmatprep.subr.mxu0 0.0
        %4376 = vmatpush1.msra.mxu0 0.0
        %4377 = vmatprep.subr.mxu0 0.0
        %4378 = vmatpush1.msra.mxu0 0.0
        %4379 = vmatprep.subr.mxu0 0.0
        %4380 = vmatpush1.msra.mxu0 0.0
        %4381 = vmatprep.subr.mxu0 0.0
        %4382 = vmatpush1.msra.mxu0 0.0
        %4383 = vmatprep.mubr.f32.mxu0 0.0
        %4384 = vmatmul.mubr.f32.gmra.mrb[0].mxu0 %v4317
        %v4385 = vpop.f32.mrb[0].mxu0
        %v4386 = vadd.f32 %v4315, %v4385
        %v4387 = vpop.f32.mrb[0].mxu0
        %4388 = vdwg.mxu0
        %v4389 = vmax.f32 %v4386, 0.0
        %v4390 = vld [vmem:[%s10] sm:$0xff]
        %v4391 = vld [vmem:[%s10 + $0x8] sm:$0xff]
        %v4392 = vld [vmem:[%s10 + $0x10] sm:$0xff]
        %v4393 = vld [vmem:[%s10 + $0x18] sm:$0xff]
        %v4394 = vld [vmem:[%s10 + $0x20] sm:$0xff]
        %v4395 = vld [vmem:[%s10 + $0x28] sm:$0xff]
        %v4396 = vld [vmem:[%s10 + $0x30] sm:$0xff]
        %v4397 = vld [vmem:[%s10 + $0x38] sm:$0xff]
        %v4398 = vld [vmem:[%s10 + $0x40] sm:$0xff]
        %v4399 = vld [vmem:[%s10 + $0x48] sm:$0xff]
        %v4400 = vld [vmem:[%s10 + $0x50] sm:$0xf]
        %v4401 = vld [vmem:[%s11] sm:$0x1]
        %vm4402 = vcmask 687104
        %v4404 = vsel %vm4402, %v4389, 0
        %v4407 = vsel %vm955, %v4400, 0
        %4409 = vmatprep.subr.mxu0 0.0
        %4410 = vmatpush1.msra.mxu0 %v4390
        %4411 = vmatprep.subr.mxu0 0.0
        %4412 = vmatpush1.msra.mxu0 %v4391
        %4413 = vmatprep.subr.mxu0 0.0
        %4414 = vmatpush1.msra.mxu0 %v4392
        %4415 = vmatprep.subr.mxu0 0.0
        %4416 = vmatpush1.msra.mxu0 %v4393
        %4417 = vmatprep.subr.mxu0 0.0
        %4418 = vmatpush1.msra.mxu0 %v4394
        %4419 = vmatprep.subr.mxu0 0.0
        %4420 = vmatpush1.msra.mxu0 %v4395
        %4421 = vmatprep.subr.mxu0 0.0
        %4422 = vmatpush1.msra.mxu0 %v4396
        %4423 = vmatprep.subr.mxu0 0.0
        %4424 = vmatpush1.msra.mxu0 %v4397
        %4425 = vmatprep.subr.mxu0 0.0
        %4426 = vmatpush1.msra.mxu0 %v4398
        %4427 = vmatprep.subr.mxu0 0.0
        %4428 = vmatpush1.msra.mxu0 %v4399
        %4429 = vmatprep.subr.mxu0 0.0
        %4430 = vmatpush1.msra.mxu0 %v4407
        %4431 = vmatprep.subr.mxu0 0.0
        %4432 = vmatpush1.msra.mxu0 0.0
        %4433 = vmatprep.subr.mxu0 0.0
        %4434 = vmatpush1.msra.mxu0 0.0
        %4435 = vmatprep.subr.mxu0 0.0
        %4436 = vmatpush1.msra.mxu0 0.0
        %4437 = vmatprep.subr.mxu0 0.0
        %4438 = vmatpush1.msra.mxu0 0.0
        %4439 = vmatprep.subr.mxu0 0.0
        %4440 = vmatpush1.msra.mxu0 0.0
        %4441 = vmatprep.subr.mxu0 0.0
        %4442 = vmatpush1.msra.mxu0 0.0
        %4443 = vmatprep.subr.mxu0 0.0
        %4444 = vmatpush1.msra.mxu0 0.0
        %4445 = vmatprep.subr.mxu0 0.0
        %4446 = vmatpush1.msra.mxu0 0.0
        %4447 = vmatprep.subr.mxu0 0.0
        %4448 = vmatpush1.msra.mxu0 0.0
        %4449 = vmatprep.subr.mxu0 0.0
        %4450 = vmatpush1.msra.mxu0 0.0
        %4451 = vmatprep.subr.mxu0 0.0
        %4452 = vmatpush1.msra.mxu0 0.0
        %4453 = vmatprep.subr.mxu0 0.0
        %4454 = vmatpush1.msra.mxu0 0.0
        %4455 = vmatprep.subr.mxu0 0.0
        %4456 = vmatpush1.msra.mxu0 0.0
        %4457 = vmatprep.subr.mxu0 0.0
        %4458 = vmatpush1.msra.mxu0 0.0
        %4459 = vmatprep.subr.mxu0 0.0
        %4460 = vmatpush1.msra.mxu0 0.0
        %4461 = vmatprep.subr.mxu0 0.0
        %4462 = vmatpush1.msra.mxu0 0.0
        %4463 = vmatprep.subr.mxu0 0.0
        %4464 = vmatpush1.msra.mxu0 0.0
        %4465 = vmatprep.subr.mxu0 0.0
        %4466 = vmatpush1.msra.mxu0 0.0
        %4467 = vmatprep.subr.mxu0 0.0
        %4468 = vmatpush1.msra.mxu0 0.0
        %4469 = vmatprep.subr.mxu0 0.0
        %4470 = vmatpush1.msra.mxu0 0.0
        %4471 = vmatprep.subr.mxu0 0.0
        %4472 = vmatpush1.msra.mxu0 0.0
        %4473 = vmatprep.mubr.f32.mxu0 0.0
        %4474 = vmatmul.mubr.f32.gmra.mrb[0].mxu0 %v4404
        %v4475 = vpop.f32.mrb[0].mxu0
        %v4476 = vadd.f32 %v4401, %v4475
        %v4477 = vpop.f32.mrb[0].mxu0
        %4478 = vdwg.mxu0
        %vm4479 = vcmask 73728
        %4480 = vst.msk [vmem:[%s405] sm:$0x1] %vm4479, %v4476
        %s4481 = sand.u32 %s291, 1
        %s4482 = scalar_lea.sflag [#allocation3], %s4481
        %s4483 = sand.u32 %s291, 1
        %s4484 = scalar_lea.vmem [#allocation2], %s4483
        // Predicated region
        $region69: #{lenet_forward.1} parent=67 // pred_check
          %p4485 = pneg %p301
        $region70: #{lenet_forward.1} parent=67 // pred_check_branch
          %4487 = sbr.rel (%p4485) target = $region72
        $region71: #{lenet_forward.1} parent=67 // pred_region
          %s4489 = ssub.s32 16, 16
          %4490 = vsyncadd %s4482, %s4489
          %s4491 = smul.addr %s26, 16
          %s4492 = scalar_lea.hbm %s12, %s4491
          %s4494 = sshll.u32 %s4484, 4
          %s4495 = int_to_ptr.vmem [resolvable:$true] %s4494
          %4497 = dma.vmem_to_hbm [thread:$0]  %s4495, 16, %s4492, %s4482
        $region72: #{lenet_forward.1} parent=67 // pred_fallthru
          _
      $region68: #{lenet_forward.1} parent=5 // pred_fallthru
        _
      %p4498 = scmp.le.s32.totalorder 2, %s21
      // Predicated region
      $region73: #{lenet_forward.1} parent=5 // pred_check
        %p4499 = pneg %p4498
      $region74: #{lenet_forward.1} parent=5 // pred_check_branch
        %4501 = sbr.rel (%p4499) target = $region76
      $region75: #{lenet_forward.1} parent=5 // pred_region
        %s4502 = ssub.s32 %s21, 2
        // Predicated region
        $region77: #{lenet_forward.1} parent=75 // pred_check
          %p4503 = pneg %p307
        $region78: #{lenet_forward.1} parent=75 // pred_check_branch
          %4505 = sbr.rel (%p4503) target = $region80
        $region79: #{lenet_forward.1} parent=75 // pred_region
          %s4506 = sand.u32 %s292, 1
          %s4507 = scalar_lea.sflag [#allocation3], %s4506
          %s4508 = sand.u32 %s292, 1
          %s4509 = scalar_lea.vmem [#allocation2], %s4508
          %4510 = dma.done %s4507, 16
        $region80: #{lenet_forward.1} parent=75 // pred_fallthru
          _
      $region76: #{lenet_forward.1} parent=5 // pred_fallthru
        _
    $region6: #{lenet_forward.1} parent=1 // loop_footer
      %s25 = sadd.s32 1, %s21
    $region7: #{lenet_forward.1} parent=1 // loop_footer_branch
      %20 = sbr.rel target = $region3
    $region8: #{lenet_forward.1} parent=1 // loop_exit
      _
    %4511 = vsyncpa [#allocation3], 1
    %s4512 = scalar_lea.sflag [#allocation3], 1
    %4513 = vsyncpa %s4512, 1

</llo_original>
